<compile_context>
chip_gen: v7x
topology: tpu7x:2x2x1
jax: 0.10.0
libtpu: 0.0.40
codegen_flags: <defaults>
</compile_context>

<pallas_src>
import functools
import math

import jax
import jax.numpy as jnp
from jax import lax
from jax.experimental import pallas as pl
from jax.experimental.pallas import tpu as pltpu


# ----------------------------------------------------------------------------
# Common helpers
# ----------------------------------------------------------------------------

@functools.lru_cache(maxsize=None)
def _vmem_limit_bytes():
    """Per-generation VMEM budget: ~3/4 of physical, capped at 96 MiB.

    v5e/v6e (128 MiB physical) -> 96 MiB; v7x (64 MiB) -> 48 MiB.
    Falls back to 48 MiB if the hardware query is unavailable."""
    try:
        cap = int(pltpu.get_tpu_info().vmem_capacity_bytes)
    except Exception:
        cap = 64 * 1024 * 1024
    return max(min(cap * 3 // 4, 96 * 1024 * 1024), 32 * 1024 * 1024)


def _compiler_params(semantics):
    return pltpu.CompilerParams(dimension_semantics=semantics,
                                vmem_limit_bytes=_vmem_limit_bytes())


def _pick_tile(dim, preferred, align):
    """Largest tile <= preferred that divides `dim` and is `align`-aligned.

    Falls back to the full dimension (always a legal Pallas block size)."""
    if dim <= preferred:
        return dim
    t = (preferred // align) * align
    while t >= align:
        if dim % t == 0:
            return t
        t -= align
    return dim


# ----------------------------------------------------------------------------
# Kernel 1: tiled linear  y = x @ w + b   with optional fusions:
#   * x_add    : positional embedding added to the input tile (free VPU add)
#   * relu     : fused activation in the finalize epilogue
#   * residual + LayerNorm : fused in the finalize epilogue (requires tn == N_out)
# ----------------------------------------------------------------------------

def _linear_kernel(*refs, activation, has_add, fuse_ln, eps):
    it = iter(refs)
    x_ref = next(it)
    a_ref = next(it) if has_add else None
    w_ref = next(it)
    b_ref = next(it)
    if fuse_ln:
        r_ref = next(it)
        g_ref = next(it)
        bt_ref = next(it)
    o_ref = next(it)
    acc_ref = next(it)

    k = pl.program_id(2)

    @pl.when(k == 0)
    def _():
        acc_ref[...] = jnp.zeros_like(acc_ref)

    x = x_ref[...]
    if has_add:
        x = x + a_ref[...]                       # fused positional add (VPU)

    # bf16 MXU operands, f32 accumulation; weights already (K, N_out) so no
    # in-kernel transpose/relayout of the RHS tile.
    acc_ref[...] += lax.dot_general(
        x.astype(jnp.bfloat16), w_ref[...].astype(jnp.bfloat16),
        dimension_numbers=(((1,), (0,)), ((), ())),
        preferred_element_type=jnp.float32)

    @pl.when(k == pl.num_programs(2) - 1)
    def _():
        out = acc_ref[...] + b_ref[...].astype(jnp.float32)
        if activation == "relu":
            out = jnp.maximum(out, 0.0)
        if fuse_ln:
            out = out + r_ref[...].astype(jnp.float32)
            mean = jnp.mean(out, axis=-1, keepdims=True)
            xc = out - mean
            var = jnp.mean(xc * xc, axis=-1, keepdims=True)
            out = (xc * lax.rsqrt(var + eps) * g_ref[...].astype(jnp.float32)
                   + bt_ref[...].astype(jnp.float32))
        o_ref[...] = out.astype(o_ref.dtype)


def pallas_linear(x, w, b, *, x_add=None, activation=None,
                  residual=None, ln_gamma=None, ln_beta=None, ln_eps=1e-5,
                  tm=512, tn=1024, tk=1024):
    """x: (M, K), w: (K, N_out) (pre-transposed), b: (N_out,) -> (M, N_out)."""
    M, K = x.shape
    K2, N_out = w.shape
    assert K == K2
    has_add = x_add is not None
    fuse_ln = ln_gamma is not None
    if fuse_ln:
        assert residual is not None and ln_beta is not None
        tn = N_out                  # LayerNorm needs the full output row/block

    tm = _pick_tile(M, tm, 8)        # sublane dim of x / out
    tn = _pick_tile(N_out, tn, 128)  # lane dim of w / out / bias
    tk = _pick_tile(K, tk, 128)      # lane dim of x, sublane dim of w

    x_spec = pl.BlockSpec((tm, tk), lambda i, j, k: (i, k))
    vec_spec = pl.BlockSpec((1, tn), lambda i, j, k: (0, j))
    out_spec = pl.BlockSpec((tm, tn), lambda i, j, k: (i, j))

    in_specs = [x_spec]
    args = [x]
    if has_add:
        in_specs.append(x_spec)
        args.append(x_add)
    in_specs.append(pl.BlockSpec((tk, tn), lambda i, j, k: (k, j)))
    args.append(w)
    in_specs.append(vec_spec)
    args.append(b.reshape(1, N_out))
    if fuse_ln:
        in_specs.append(out_spec)
        args.append(residual)
        in_specs.append(vec_spec)
        args.append(ln_gamma.reshape(1, N_out))
        in_specs.append(vec_spec)
        args.append(ln_beta.reshape(1, N_out))

    kernel = functools.partial(_linear_kernel, activation=activation,
                               has_add=has_add, fuse_ln=fuse_ln, eps=ln_eps)
    return pl.pallas_call(
        kernel,
        out_shape=jax.ShapeDtypeStruct((M, N_out), x.dtype),
        grid=(M // tm, N_out // tn, K // tk),
        in_specs=in_specs,
        out_specs=out_spec,
        scratch_shapes=[pltpu.VMEM((tm, tn), jnp.float32)],
        compiler_params=_compiler_params(("parallel", "parallel", "arbitrary")),
    )(*args)


# ----------------------------------------------------------------------------
# Kernel 2: multi-head attention core
#   - flash-style online softmax over an S-tiled reduction axis
#   - all heads of one (batch, L-tile) processed per grid step
#   - heads merged in-kernel -> lane-dense (N, L, E) output
# ----------------------------------------------------------------------------

def _mha_kernel(*refs, scale, num_heads, masked):
    it = iter(refs)
    q_ref = next(it)
    k_ref = next(it)
    v_ref = next(it)
    mask_ref = next(it) if masked else None
    o_ref = next(it)
    m_scr = next(it)
    l_scr = next(it)
    acc_scr = next(it)

    si = pl.program_id(2)

    @pl.when(si == 0)
    def _():
        m_scr[...] = jnp.full_like(m_scr, -jnp.inf)
        l_scr[...] = jnp.zeros_like(l_scr)
        acc_scr[...] = jnp.zeros_like(acc_scr)

    q = (q_ref[0].astype(jnp.float32) * scale).astype(jnp.bfloat16)   # (H, Lt, Dh)
    k = k_ref[0].astype(jnp.bfloat16)                                 # (H, St, Dh)
    v = v_ref[0].astype(jnp.bfloat16)                                 # (H, St, Dh)

    # scores (H, Lt, St): bf16 MXU operands, f32 accumulation.
    s = lax.dot_general(q, k, (((2,), (2,)), ((0,), (0,))),
                        preferred_element_type=jnp.float32)

    # Online (running) softmax statistics in f32.
    m_prev = m_scr[...]                                               # (H, Lt, 1)
    m_new = jnp.maximum(m_prev, jnp.max(s, axis=-1, keepdims=True))
    alpha = jnp.exp(m_prev - m_new)
    e = jnp.exp(s - m_new)                                            # (H, Lt, St)
    l_scr[...] = alpha * l_scr[...] + jnp.sum(e, axis=-1, keepdims=True)

    p = e
    if masked:
        # TODO(synk): cam_mask applied multiplicatively to the post-softmax
        # probabilities (broadcast over heads); exact MA semantics unknown.
        p = e * mask_ref[0].astype(jnp.float32)[None, :, :]

    acc_scr[...] = alpha * acc_scr[...] + lax.dot_general(
        p.astype(jnp.bfloat16), v, (((2,), (1,)), ((0,), (0,))),
        preferred_element_type=jnp.float32)
    m_scr[...] = m_new

    @pl.when(si == pl.num_programs(2) - 1)
    def _():
        ctx = acc_scr[...] * pl.reciprocal(l_scr[...], approx=True)   # (H, Lt, Dh)
        if num_heads == 1:
            merged = ctx[0]
        else:
            # In-kernel head merge -> lane-dense (Lt, E) vregs and dense stores.
            merged = jnp.concatenate([ctx[h] for h in range(num_heads)], axis=-1)
        o_ref[0] = merged.astype(o_ref.dtype)


def pallas_mha(q, k, v, cam_mask=None, *, l_tile=128, s_tile=256):
    """q: (N, H, L, Dh), k/v: (N, H, S, Dh), cam_mask: (N, L, S) or None.

    Returns ctx merged over heads: (N, L, H*Dh)  (lane-dense output)."""
    N, H, L, Dh = q.shape
    S = k.shape[2]
    E = H * Dh
    masked = cam_mask is not None
    scale = 1.0 / math.sqrt(Dh)

    lt = _pick_tile(L, l_tile, 8)
    st = _pick_tile(S, s_tile, 128)
    # TODO(synk): if S is not a multiple of 128 the S axis falls back to a
    # single block; pad memory/cam_mask to a multiple of 128 for long S.

    kernel = functools.partial(_mha_kernel, scale=scale, num_heads=H,
                               masked=masked)
    in_specs = [
        pl.BlockSpec((1, H, lt, Dh), lambda n, li, si: (n, 0, li, 0)),
        pl.BlockSpec((1, H, st, Dh), lambda n, li, si: (n, 0, si, 0)),
        pl.BlockSpec((1, H, st, Dh), lambda n, li, si: (n, 0, si, 0)),
    ]
    args = [q, k, v]
    if masked:
        in_specs.append(pl.BlockSpec((1, lt, st), lambda n, li, si: (n, li, si)))
        args.append(cam_mask)

    return pl.pallas_call(
        kernel,
        out_shape=jax.ShapeDtypeStruct((N, L, E), q.dtype),
        grid=(N, L // lt, S // st),
        in_specs=in_specs,
        out_specs=pl.BlockSpec((1, lt, E), lambda n, li, si: (n, li, 0)),
        scratch_shapes=[pltpu.VMEM((H, lt, 1), jnp.float32),    # running max
                        pltpu.VMEM((H, lt, 1), jnp.float32),    # running sum
                        pltpu.VMEM((H, lt, Dh), jnp.float32)],  # running ctx
        compiler_params=_compiler_params(("parallel", "parallel", "arbitrary")),
    )(*args)


# ----------------------------------------------------------------------------
# Kernel 3: standalone LayerNorm (only used for the optional final decoder norm)
# ----------------------------------------------------------------------------

def _ln_kernel(x_ref, g_ref, b_ref, o_ref, *, eps):
    x = x_ref[...].astype(jnp.float32)
    mean = jnp.mean(x, axis=-1, keepdims=True)
    xc = x - mean
    var = jnp.mean(xc * xc, axis=-1, keepdims=True)
    y = (xc * lax.rsqrt(var + eps) * g_ref[...].astype(jnp.float32)
         + b_ref[...].astype(jnp.float32))
    o_ref[...] = y.astype(o_ref.dtype)


def pallas_layernorm(x, gamma, beta, eps=1e-5, tm=1024):
    M, E = x.shape
    tm = _pick_tile(M, tm, 8)
    row_spec = pl.BlockSpec((tm, E), lambda i: (i, 0))
    vec_spec = pl.BlockSpec((1, E), lambda i: (0, 0))
    return pl.pallas_call(
        functools.partial(_ln_kernel, eps=eps),
        out_shape=jax.ShapeDtypeStruct((M, E), x.dtype),
        grid=(M // tm,),
        in_specs=[row_spec, vec_spec, vec_spec],
        out_specs=row_spec,
        compiler_params=_compiler_params(("parallel",)),
    )(x, gamma.reshape(1, E), beta.reshape(1, E))


# ----------------------------------------------------------------------------
# Parameter initialization (weights stored pre-transposed as (in, out))
# ----------------------------------------------------------------------------

def _xavier_uniform(key, fan_in, fan_out, dtype=jnp.float32):
    bound = math.sqrt(6.0 / (fan_in + fan_out))
    return jax.random.uniform(key, (fan_in, fan_out), dtype, -bound, bound)


def init_decoder_layer_params(key, embed_dim, ffn_dim, dtype=jnp.float32):
    E, F = embed_dim, ffn_dim
    ks = jax.random.split(key, 9)
    zeros = lambda n: jnp.zeros((n,), dtype)
    ones = lambda n: jnp.ones((n,), dtype)
    return dict(
        # self-attention: Q/K share their input -> fused (E, 2E) projection
        sa_w_qk=_xavier_uniform(ks[0], E, 2 * E, dtype), sa_b_qk=zeros(2 * E),
        sa_w_v=_xavier_uniform(ks[1], E, E, dtype), sa_b_v=zeros(E),
        sa_w_o=_xavier_uniform(ks[2], E, E, dtype), sa_b_o=zeros(E),
        # cam-masked cross-attention
        ca_w_q=_xavier_uniform(ks[3], E, E, dtype), ca_b_q=zeros(E),
        ca_w_k=_xavier_uniform(ks[4], E, E, dtype), ca_b_k=zeros(E),
        ca_w_v=_xavier_uniform(ks[5], E, E, dtype), ca_b_v=zeros(E),
        ca_w_o=_xavier_uniform(ks[6], E, E, dtype), ca_b_o=zeros(E),
        # FFN
        ffn_w1=_xavier_uniform(ks[7], E, F, dtype), ffn_b1=zeros(F),
        ffn_w2=_xavier_uniform(ks[8], F, E, dtype), ffn_b2=zeros(E),
        # LayerNorms
        ln1_g=ones(E), ln1_b=zeros(E),
        ln2_g=ones(E), ln2_b=zeros(E),
        ln3_g=ones(E), ln3_b=zeros(E),
    )


def init_transformer_decoder_params(key, num_layers, embed_dim, ffn_dim,
                                    with_norm=True, dtype=jnp.float32):
    keys = jax.random.split(key, num_layers)
    return {
        "layers": [init_decoder_layer_params(k, embed_dim, ffn_dim, dtype)
                   for k in keys],
        "norm_g": jnp.ones((embed_dim,), dtype) if with_norm else None,
        "norm_b": jnp.zeros((embed_dim,), dtype) if with_norm else None,
    }


# ----------------------------------------------------------------------------
# Decoder layer / decoder stack forward (thin JAX glue around the kernels)
# ----------------------------------------------------------------------------

def decoder_layer_forward(p, x, mem, cam_mask, pos, query_pos, *,
                          num_heads, batch, tgt_len, mem_len):
    """One DETR-style post-norm decoder layer.

    x: (N*L, E), mem: (N*S, E), pos/query_pos: flattened or None."""
    N, L, S = batch, tgt_len, mem_len
    E = x.shape[-1]
    H = num_heads
    Dh = E // H
    assert Dh * H == E

    def split_heads(t_flat, T):      # (N*T, E) -> (N, H, T, Dh)
        return jnp.transpose(t_flat.reshape(N, T, H, Dh), (0, 2, 1, 3))

    # ---------------- self-attention (q = k = x + query_pos, v = x) ----------
    qk = pallas_linear(x, p["sa_w_qk"], p["sa_b_qk"], x_add=query_pos)   # (N*L,2E)
    v = pallas_linear(x, p["sa_w_v"], p["sa_b_v"])                        # (N*L, E)
    sa = pallas_mha(split_heads(qk[:, :E], L),
                    split_heads(qk[:, E:], L),
                    split_heads(v, L))                                    # (N, L, E)
    # output projection + residual + LayerNorm fused in one kernel
    x = pallas_linear(sa.reshape(N * L, E), p["sa_w_o"], p["sa_b_o"],
                      residual=x, ln_gamma=p["ln1_g"], ln_beta=p["ln1_b"])

    # ---------------- cam-masked cross-attention ----------------------------
    q = pallas_linear(x, p["ca_w_q"], p["ca_b_q"], x_add=query_pos)
    k = pallas_linear(mem, p["ca_w_k"], p["ca_b_k"], x_add=pos)
    v = pallas_linear(mem, p["ca_w_v"], p["ca_b_v"])
    ca = pallas_mha(split_heads(q, L), split_heads(k, S), split_heads(v, S),
                    cam_mask)                                             # (N, L, E)
    x = pallas_linear(ca.reshape(N * L, E), p["ca_w_o"], p["ca_b_o"],
                      residual=x, ln_gamma=p["ln2_g"], ln_beta=p["ln2_b"])

    # ---------------- FFN ----------------------------------------------------
    h = pallas_linear(x, p["ffn_w1"], p["ffn_b1"], activation="relu")
    x = pallas_linear(h, p["ffn_w2"], p["ffn_b2"],
                      residual=x, ln_gamma=p["ln3_g"], ln_beta=p["ln3_b"])
    return x


def transformer_decoder_forward(params, cam_mask, tgt, memory, *,
                                num_heads, pos=None, query_pos=None,
                                return_intermediate=False):
    """Matches TransformerDecoder.forward (tgt/memory masks & key-padding
    masks are None in this port; dropout is eval-mode identity)."""
    L, N, E = tgt.shape
    S = memory.shape[0]

    # transpose to batch-first & flatten ONCE for the whole stack
    x = jnp.transpose(tgt, (1, 0, 2)).reshape(N * L, E)
    mem = jnp.transpose(memory, (1, 0, 2)).reshape(N * S, E)
    qpos = (None if query_pos is None
            else jnp.transpose(query_pos, (1, 0, 2)).reshape(N * L, E))
    posf = (None if pos is None
            else jnp.transpose(pos, (1, 0, 2)).reshape(N * S, E))

    def maybe_norm(y_flat):
        if params.get("norm_g") is None:
            return y_flat
        return pallas_layernorm(y_flat, params["norm_g"], params["norm_b"])

    intermediate = []
    for lp in params["layers"]:
        x = decoder_layer_forward(lp, x, mem, cam_mask, posf, qpos,
                                  num_heads=num_heads, batch=N,
                                  tgt_len=L, mem_len=S)
        if return_intermediate:
            intermediate.append(maybe_norm(x).reshape(N, L, E))

    if return_intermediate:
        out = jnp.stack(intermediate, axis=0)                      # (nl, N, L, E)
        return jnp.transpose(out, (0, 2, 1, 3))                    # (nl, L, N, E)

    xn = maybe_norm(x).reshape(N, L, E)
    return jnp.transpose(xn, (1, 0, 2))[None]                      # (1, L, N, E)


# ----------------------------------------------------------------------------
# Demo
# ----------------------------------------------------------------------------

if __name__ == "__main__":
    embed_dim = 32
    num_heads = 4
    ffn_dim = 64
    num_layers = 2
    L = 8     # number of decoder queries (tgt length)
    S = 16    # memory length
    N = 2     # batch size

    root = jax.random.PRNGKey(0)
    kp, kt, km, kc, kpos, kqpos = jax.random.split(root, 6)

    params = init_transformer_decoder_params(kp, num_layers, embed_dim, ffn_dim,
                                             with_norm=True)

    tgt = jax.random.normal(kt, (L, N, embed_dim), jnp.float32)
    memory = jax.random.normal(km, (S, N, embed_dim), jnp.float32)
    cam_mask = jax.nn.sigmoid(jax.random.normal(kc, (N, L, S), jnp.float32))
    pos = 0.1 * jax.random.normal(kpos, (S, N, embed_dim), jnp.float32)
    query_pos = 0.1 * jax.random.normal(kqpos, (L, N, embed_dim), jnp.float32)

    fwd = jax.jit(functools.partial(transformer_decoder_forward,
                                    num_heads=num_heads,
                                    return_intermediate=False))

    out = fwd(params, cam_mask, tgt, memory, pos=pos, query_pos=query_pos)
    out = jax.block_until_ready(out)

    assert out.shape == (1, L, N, embed_dim), out.shape
    assert bool(jnp.all(jnp.isfinite(out)))

    print("KERNEL_OK")
</pallas_src>

<mosaic_0001>
module attributes {stable_mosaic.version = 11 : i64} {
  func.func @_linear_kernel(%arg0: i32, %arg1: i32, %arg2: i32, %arg3: memref<16x32xf32, #tpu.memory_space<vmem>>, %arg4: memref<16x32xf32, #tpu.memory_space<vmem>>, %arg5: memref<32x64xf32, #tpu.memory_space<vmem>>, %arg6: memref<1x64xf32, #tpu.memory_space<vmem>>, %arg7: memref<16x64xf32, #tpu.memory_space<vmem>>, %arg8: memref<16x64xf32, #tpu.memory_space<vmem>>) attributes {dimension_semantics = [#tpu.dimension_semantics<parallel>, #tpu.dimension_semantics<parallel>, #tpu.dimension_semantics<arbitrary>], iteration_bounds = array<i64: 1, 1, 1>, scalar_prefetch = 0 : i64, scratch_operands = 1 : i64, tpu.core_type = #tpu.core_type<tc>, window_params = [{transform_indices = @transform_0, window_bounds = array<i64: 16, 32>}, {transform_indices = @transform_1, window_bounds = array<i64: 16, 32>}, {transform_indices = @transform_2, window_bounds = array<i64: 32, 64>}, {transform_indices = @transform_3, window_bounds = array<i64: 1, 64>}, {transform_indices = @transform_4, window_bounds = array<i64: 16, 64>}]} {
    %c0_i32 = arith.constant 0 : i32
    %0 = arith.cmpi eq, %arg2, %c0_i32 : i32
    %1 = arith.extui %0 : i1 to i32
    %c0_i32_0 = arith.constant 0 : i32
    %2 = arith.cmpi ne, %1, %c0_i32_0 : i32
    scf.if %2 {
      %cst_12 = arith.constant 0.000000e+00 : f32
      %16 = vector.broadcast %cst_12 : f32 to vector<16x64xf32>
      %c0_13 = arith.constant 0 : index
      %c0_14 = arith.constant 0 : index
      %17 = vector.load %arg8[%c0_13, %c0_14] : memref<16x64xf32, #tpu.memory_space<vmem>>, vector<16x64xf32>
      tpu.vector_store %arg8[%c0_13, %c0_14], %16 {strides = array<i32>} : memref<16x64xf32, #tpu.memory_space<vmem>>, vector<16x64xf32>,
    } else {
    }
    %c0 = arith.constant 0 : index
    %c0_1 = arith.constant 0 : index
    %3 = vector.load %arg3[%c0, %c0_1] : memref<16x32xf32, #tpu.memory_space<vmem>>, vector<16x32xf32>
    %c0_2 = arith.constant 0 : index
    %c0_3 = arith.constant 0 : index
    %4 = vector.load %arg4[%c0_2, %c0_3] : memref<16x32xf32, #tpu.memory_space<vmem>>, vector<16x32xf32>
    %5 = arith.addf %3, %4 : vector<16x32xf32>
    %c0_4 = arith.constant 0 : index
    %c0_5 = arith.constant 0 : index
    %6 = vector.load %arg8[%c0_4, %c0_5] : memref<16x64xf32, #tpu.memory_space<vmem>>, vector<16x64xf32>
    %7 = arith.truncf %5 : vector<16x32xf32> to vector<16x32xbf16>
    %c0_6 = arith.constant 0 : index
    %c0_7 = arith.constant 0 : index
    %8 = vector.load %arg5[%c0_6, %c0_7] : memref<32x64xf32, #tpu.memory_space<vmem>>, vector<32x64xf32>
    %9 = arith.truncf %8 : vector<32x64xf32> to vector<32x64xbf16>
    %cst = arith.constant dense<0.000000e+00> : vector<16x64xf32>
    %10 = tpu.matmul %7, %9, %cst {dimension_numbers = #tpu.dot_dimension_numbers<[1], [0], [0], [1], [0, 0, 1, 1], [], []>} : vector<16x32xbf16>, vector<32x64xbf16>, vector<16x64xf32> -> vector<16x64xf32>
    %11 = arith.addf %6, %10 : vector<16x64xf32>
    %c0_8 = arith.constant 0 : index
    %c0_9 = arith.constant 0 : index
    %12 = vector.load %arg8[%c0_8, %c0_9] : memref<16x64xf32, #tpu.memory_space<vmem>>, vector<16x64xf32>
    tpu.vector_store %arg8[%c0_8, %c0_9], %11 {strides = array<i32>} : memref<16x64xf32, #tpu.memory_space<vmem>>, vector<16x64xf32>,
    %c0_i32_10 = arith.constant 0 : i32
    %13 = arith.cmpi eq, %arg2, %c0_i32_10 : i32
    %14 = arith.extui %13 : i1 to i32
    %c0_i32_11 = arith.constant 0 : i32
    %15 = arith.cmpi ne, %14, %c0_i32_11 : i32
    scf.if %15 {
      %c0_12 = arith.constant 0 : index
      %c0_13 = arith.constant 0 : index
      %16 = vector.load %arg8[%c0_12, %c0_13] : memref<16x64xf32, #tpu.memory_space<vmem>>, vector<16x64xf32>
      %c0_14 = arith.constant 0 : index
      %c0_15 = arith.constant 0 : index
      %17 = vector.load %arg6[%c0_14, %c0_15] : memref<1x64xf32, #tpu.memory_space<vmem>>, vector<1x64xf32>
      %18 = vector.broadcast %17 : vector<1x64xf32> to vector<16x64xf32>
      %19 = arith.addf %16, %18 : vector<16x64xf32>
      %c0_16 = arith.constant 0 : index
      %c0_17 = arith.constant 0 : index
      %20 = vector.load %arg7[%c0_16, %c0_17] : memref<16x64xf32, #tpu.memory_space<vmem>>, vector<16x64xf32>
      tpu.vector_store %arg7[%c0_16, %c0_17], %19 {strides = array<i32>} : memref<16x64xf32, #tpu.memory_space<vmem>>, vector<16x64xf32>,
    } else {
    }
    return
  }
  func.func @transform_0(%arg0: i32, %arg1: i32, %arg2: i32) -> (i32, i32) {
    %c0_i32 = arith.constant 0 : i32
    return %arg0, %arg2 : i32, i32
  }
  func.func @transform_1(%arg0: i32, %arg1: i32, %arg2: i32) -> (i32, i32) {
    %c0_i32 = arith.constant 0 : i32
    return %arg0, %arg2 : i32, i32
  }
  func.func @transform_2(%arg0: i32, %arg1: i32, %arg2: i32) -> (i32, i32) {
    %c0_i32 = arith.constant 0 : i32
    return %arg2, %arg1 : i32, i32
  }
  func.func @transform_3(%arg0: i32, %arg1: i32, %arg2: i32) -> (i32, i32) {
    %c0_i32 = arith.constant 0 : i32
    %c0_i32_0 = arith.constant 0 : i32
    return %c0_i32, %arg1 : i32, i32
  }
  func.func @transform_4(%arg0: i32, %arg1: i32, %arg2: i32) -> (i32, i32) {
    %c0_i32 = arith.constant 0 : i32
    return %arg0, %arg1 : i32, i32
  }
}

module attributes {stable_mosaic.version = 11 : i64} {
  func.func @_mha_kernel(%arg0: i32, %arg1: i32, %arg2: i32, %arg3: memref<1x4x8x8xf32, #tpu.memory_space<vmem>>, %arg4: memref<1x4x8x8xf32, #tpu.memory_space<vmem>>, %arg5: memref<1x4x8x8xf32, #tpu.memory_space<vmem>>, %arg6: memref<1x8x32xf32, #tpu.memory_space<vmem>>, %arg7: memref<4x8x1xf32, #tpu.memory_space<vmem>>, %arg8: memref<4x8x1xf32, #tpu.memory_space<vmem>>, %arg9: memref<4x8x8xf32, #tpu.memory_space<vmem>>) attributes {dimension_semantics = [#tpu.dimension_semantics<parallel>, #tpu.dimension_semantics<parallel>, #tpu.dimension_semantics<arbitrary>], iteration_bounds = array<i64: 2, 1, 1>, scalar_prefetch = 0 : i64, scratch_operands = 3 : i64, tpu.core_type = #tpu.core_type<tc>, window_params = [{transform_indices = @transform_0, window_bounds = array<i64: 1, 4, 8, 8>}, {transform_indices = @transform_1, window_bounds = array<i64: 1, 4, 8, 8>}, {transform_indices = @transform_2, window_bounds = array<i64: 1, 4, 8, 8>}, {transform_indices = @transform_3, window_bounds = array<i64: 1, 8, 32>}]} {
    %c0_i32 = arith.constant 0 : i32
    %0 = arith.cmpi eq, %arg2, %c0_i32 : i32
    %1 = arith.extui %0 : i1 to i32
    %c0_i32_0 = arith.constant 0 : i32
    %2 = arith.cmpi ne, %1, %c0_i32_0 : i32
    scf.if %2 {
      %cst_36 = arith.constant 0xFF800000 : f32
      %41 = vector.broadcast %cst_36 : f32 to vector<4x8x1xf32>
      %c0_37 = arith.constant 0 : index
      %c0_38 = arith.constant 0 : index
      %c0_39 = arith.constant 0 : index
      %42 = vector.load %arg7[%c0_37, %c0_38, %c0_39] : memref<4x8x1xf32, #tpu.memory_space<vmem>>, vector<4x8x1xf32>
      tpu.vector_store %arg7[%c0_37, %c0_38, %c0_39], %41 {strides = array<i32>} : memref<4x8x1xf32, #tpu.memory_space<vmem>>, vector<4x8x1xf32>,
      %cst_40 = arith.constant 0.000000e+00 : f32
      %43 = vector.broadcast %cst_40 : f32 to vector<4x8x1xf32>
      %c0_41 = arith.constant 0 : index
      %c0_42 = arith.constant 0 : index
      %c0_43 = arith.constant 0 : index
      %44 = vector.load %arg8[%c0_41, %c0_42, %c0_43] : memref<4x8x1xf32, #tpu.memory_space<vmem>>, vector<4x8x1xf32>
      tpu.vector_store %arg8[%c0_41, %c0_42, %c0_43], %43 {strides = array<i32>} : memref<4x8x1xf32, #tpu.memory_space<vmem>>, vector<4x8x1xf32>,
      %cst_44 = arith.constant 0.000000e+00 : f32
      %45 = vector.broadcast %cst_44 : f32 to vector<4x8x8xf32>
      %c0_45 = arith.constant 0 : index
      %c0_46 = arith.constant 0 : index
      %c0_47 = arith.constant 0 : index
      %46 = vector.load %arg9[%c0_45, %c0_46, %c0_47] : memref<4x8x8xf32, #tpu.memory_space<vmem>>, vector<4x8x8xf32>
      tpu.vector_store %arg9[%c0_45, %c0_46, %c0_47], %45 {strides = array<i32>} : memref<4x8x8xf32, #tpu.memory_space<vmem>>, vector<4x8x8xf32>,
    } else {
    }
    %c0 = arith.constant 0 : index
    %c0_1 = arith.constant 0 : index
    %c0_2 = arith.constant 0 : index
    %c0_3 = arith.constant 0 : index
    %3 = vector.load %arg3[%c0, %c0_1, %c0_2, %c0_3] : memref<1x4x8x8xf32, #tpu.memory_space<vmem>>, vector<1x4x8x8xf32>
    %4 = vector.shape_cast %3 : vector<1x4x8x8xf32> to vector<4x8x8xf32>
    %cst = arith.constant 0.353553385 : f32
    %5 = vector.broadcast %cst : f32 to vector<4x8x8xf32>
    %6 = arith.mulf %4, %5 : vector<4x8x8xf32>
    %7 = arith.truncf %6 : vector<4x8x8xf32> to vector<4x8x8xbf16>
    %c0_4 = arith.constant 0 : index
    %c0_5 = arith.constant 0 : index
    %c0_6 = arith.constant 0 : index
    %c0_7 = arith.constant 0 : index
    %8 = vector.load %arg4[%c0_4, %c0_5, %c0_6, %c0_7] : memref<1x4x8x8xf32, #tpu.memory_space<vmem>>, vector<1x4x8x8xf32>
    %9 = vector.shape_cast %8 : vector<1x4x8x8xf32> to vector<4x8x8xf32>
    %10 = arith.truncf %9 : vector<4x8x8xf32> to vector<4x8x8xbf16>
    %c0_8 = arith.constant 0 : index
    %c0_9 = arith.constant 0 : index
    %c0_10 = arith.constant 0 : index
    %c0_11 = arith.constant 0 : index
    %11 = vector.load %arg5[%c0_8, %c0_9, %c0_10, %c0_11] : memref<1x4x8x8xf32, #tpu.memory_space<vmem>>, vector<1x4x8x8xf32>
    %12 = vector.shape_cast %11 : vector<1x4x8x8xf32> to vector<4x8x8xf32>
    %13 = arith.truncf %12 : vector<4x8x8xf32> to vector<4x8x8xbf16>
    %cst_12 = arith.constant dense<0.000000e+00> : vector<4x8x8xf32>
    %14 = tpu.matmul %7, %10, %cst_12 {dimension_numbers = #tpu.dot_dimension_numbers<[2], [2], [1], [1], [0, 0, 0, 1, 1, 1], [0], [0]>} : vector<4x8x8xbf16>, vector<4x8x8xbf16>, vector<4x8x8xf32> -> vector<4x8x8xf32>
    %c0_13 = arith.constant 0 : index
    %c0_14 = arith.constant 0 : index
    %c0_15 = arith.constant 0 : index
    %15 = vector.load %arg7[%c0_13, %c0_14, %c0_15] : memref<4x8x1xf32, #tpu.memory_space<vmem>>, vector<4x8x1xf32>
    %cst_16 = arith.constant dense<0xFF800000> : vector<4x8xf32>
    %16 = vector.multi_reduction <maximumf>, %14, %cst_16 [2] : vector<4x8x8xf32> to vector<4x8xf32>
    %17 = vector.shape_cast %16 : vector<4x8xf32> to vector<4x8x1xf32>
    %18 = arith.maximumf %15, %17 : vector<4x8x1xf32>
    %19 = arith.subf %15, %18 : vector<4x8x1xf32>
    %20 = math.exp %19 : vector<4x8x1xf32>
    %21 = vector.broadcast %18 : vector<4x8x1xf32> to vector<4x8x8xf32>
    %22 = arith.subf %14, %21 : vector<4x8x8xf32>
    %23 = math.exp %22 : vector<4x8x8xf32>
    %c0_17 = arith.constant 0 : index
    %c0_18 = arith.constant 0 : index
    %c0_19 = arith.constant 0 : index
    %24 = vector.load %arg8[%c0_17, %c0_18, %c0_19] : memref<4x8x1xf32, #tpu.memory_space<vmem>>, vector<4x8x1xf32>
    %25 = arith.mulf %20, %24 : vector<4x8x1xf32>
    %cst_20 = arith.constant dense<0.000000e+00> : vector<4x8xf32>
    %26 = vector.multi_reduction <add>, %23, %cst_20 [2] : vector<4x8x8xf32> to vector<4x8xf32>
    %27 = vector.shape_cast %26 : vector<4x8xf32> to vector<4x8x1xf32>
    %28 = arith.addf %25, %27 : vector<4x8x1xf32>
    %c0_21 = arith.constant 0 : index
    %c0_22 = arith.constant 0 : index
    %c0_23 = arith.constant 0 : index
    %29 = vector.load %arg8[%c0_21, %c0_22, %c0_23] : memref<4x8x1xf32, #tpu.memory_space<vmem>>, vector<4x8x1xf32>
    tpu.vector_store %arg8[%c0_21, %c0_22, %c0_23], %28 {strides = array<i32>} : memref<4x8x1xf32, #tpu.memory_space<vmem>>, vector<4x8x1xf32>,
    %c0_24 = arith.constant 0 : index
    %c0_25 = arith.constant 0 : index
    %c0_26 = arith.constant 0 : index
    %30 = vector.load %arg9[%c0_24, %c0_25, %c0_26] : memref<4x8x8xf32, #tpu.memory_space<vmem>>, vector<4x8x8xf32>
    %31 = vector.broadcast %20 : vector<4x8x1xf32> to vector<4x8x8xf32>
    %32 = arith.mulf %31, %30 : vector<4x8x8xf32>
    %33 = arith.truncf %23 : vector<4x8x8xf32> to vector<4x8x8xbf16>
    %cst_27 = arith.constant dense<0.000000e+00> : vector<4x8x8xf32>
    %34 = tpu.matmul %33, %13, %cst_27 {dimension_numbers = #tpu.dot_dimension_numbers<[2], [1], [1], [2], [0, 0, 0, 1, 1, 2], [0], [0]>} : vector<4x8x8xbf16>, vector<4x8x8xbf16>, vector<4x8x8xf32> -> vector<4x8x8xf32>
    %35 = arith.addf %32, %34 : vector<4x8x8xf32>
    %c0_28 = arith.constant 0 : index
    %c0_29 = arith.constant 0 : index
    %c0_30 = arith.constant 0 : index
    %36 = vector.load %arg9[%c0_28, %c0_29, %c0_30] : memref<4x8x8xf32, #tpu.memory_space<vmem>>, vector<4x8x8xf32>
    tpu.vector_store %arg9[%c0_28, %c0_29, %c0_30], %35 {strides = array<i32>} : memref<4x8x8xf32, #tpu.memory_space<vmem>>, vector<4x8x8xf32>,
    %c0_31 = arith.constant 0 : index
    %c0_32 = arith.constant 0 : index
    %c0_33 = arith.constant 0 : index
    %37 = vector.load %arg7[%c0_31, %c0_32, %c0_33] : memref<4x8x1xf32, #tpu.memory_space<vmem>>, vector<4x8x1xf32>
    tpu.vector_store %arg7[%c0_31, %c0_32, %c0_33], %18 {strides = array<i32>} : memref<4x8x1xf32, #tpu.memory_space<vmem>>, vector<4x8x1xf32>,
    %c0_i32_34 = arith.constant 0 : i32
    %38 = arith.cmpi eq, %arg2, %c0_i32_34 : i32
    %39 = arith.extui %38 : i1 to i32
    %c0_i32_35 = arith.constant 0 : i32
    %40 = arith.cmpi ne, %39, %c0_i32_35 : i32
    scf.if %40 {
      %c0_36 = arith.constant 0 : index
      %c0_37 = arith.constant 0 : index
      %c0_38 = arith.constant 0 : index
      %41 = vector.load %arg9[%c0_36, %c0_37, %c0_38] : memref<4x8x8xf32, #tpu.memory_space<vmem>>, vector<4x8x8xf32>
      %c0_39 = arith.constant 0 : index
      %c0_40 = arith.constant 0 : index
      %c0_41 = arith.constant 0 : index
      %42 = vector.load %arg8[%c0_39, %c0_40, %c0_41] : memref<4x8x1xf32, #tpu.memory_space<vmem>>, vector<4x8x1xf32>
      %43 = tpu.reciprocal %42 {approx = true} : vector<4x8x1xf32> -> vector<4x8x1xf32>
      %44 = vector.broadcast %43 : vector<4x8x1xf32> to vector<4x8x8xf32>
      %45 = arith.mulf %41, %44 : vector<4x8x8xf32>
      %46 = vector.extract_strided_slice %45 {offsets = [0, 0, 0], sizes = [1, 8, 8], strides = [1, 1, 1]} : vector<4x8x8xf32> to vector<1x8x8xf32>
      %47 = vector.shape_cast %46 : vector<1x8x8xf32> to vector<8x8xf32>
      %48 = vector.extract_strided_slice %45 {offsets = [1, 0, 0], sizes = [1, 8, 8], strides = [1, 1, 1]} : vector<4x8x8xf32> to vector<1x8x8xf32>
      %49 = vector.shape_cast %48 : vector<1x8x8xf32> to vector<8x8xf32>
      %50 = vector.extract_strided_slice %45 {offsets = [2, 0, 0], sizes = [1, 8, 8], strides = [1, 1, 1]} : vector<4x8x8xf32> to vector<1x8x8xf32>
      %51 = vector.shape_cast %50 : vector<1x8x8xf32> to vector<8x8xf32>
      %52 = vector.extract_strided_slice %45 {offsets = [3, 0, 0], sizes = [1, 8, 8], strides = [1, 1, 1]} : vector<4x8x8xf32> to vector<1x8x8xf32>
      %53 = vector.shape_cast %52 : vector<1x8x8xf32> to vector<8x8xf32>
      %54 = tpu.concatenate %47, %49, %51, %53 in 1 : vector<8x8xf32>, vector<8x8xf32>, vector<8x8xf32>, vector<8x8xf32> -> vector<8x32xf32>
      %c0_42 = arith.constant 0 : index
      %c0_43 = arith.constant 0 : index
      %c0_44 = arith.constant 0 : index
      %55 = vector.load %arg6[%c0_42, %c0_43, %c0_44] : memref<1x8x32xf32, #tpu.memory_space<vmem>>, vector<1x8x32xf32>
      %56 = vector.shape_cast %55 : vector<1x8x32xf32> to vector<8x32xf32>
      %57 = vector.shape_cast %54 : vector<8x32xf32> to vector<1x8x32xf32>
      tpu.vector_store %arg6[%c0_42, %c0_43, %c0_44], %57 {strides = array<i32>} : memref<1x8x32xf32, #tpu.memory_space<vmem>>, vector<1x8x32xf32>,
    } else {
    }
    return
  }
  func.func @transform_0(%arg0: i32, %arg1: i32, %arg2: i32) -> (i32, i32, i32, i32) {
    %c0_i32 = arith.constant 0 : i32
    %c0_i32_0 = arith.constant 0 : i32
    %c0_i32_1 = arith.constant 0 : i32
    return %arg0, %c0_i32, %arg1, %c0_i32_0 : i32, i32, i32, i32
  }
  func.func @transform_1(%arg0: i32, %arg1: i32, %arg2: i32) -> (i32, i32, i32, i32) {
    %c0_i32 = arith.constant 0 : i32
    %c0_i32_0 = arith.constant 0 : i32
    %c0_i32_1 = arith.constant 0 : i32
    return %arg0, %c0_i32, %arg2, %c0_i32_0 : i32, i32, i32, i32
  }
  func.func @transform_2(%arg0: i32, %arg1: i32, %arg2: i32) -> (i32, i32, i32, i32) {
    %c0_i32 = arith.constant 0 : i32
    %c0_i32_0 = arith.constant 0 : i32
    %c0_i32_1 = arith.constant 0 : i32
    return %arg0, %c0_i32, %arg2, %c0_i32_0 : i32, i32, i32, i32
  }
  func.func @transform_3(%arg0: i32, %arg1: i32, %arg2: i32) -> (i32, i32, i32) {
    %c0_i32 = arith.constant 0 : i32
    %c0_i32_0 = arith.constant 0 : i32
    return %arg0, %arg1, %c0_i32 : i32, i32, i32
  }
}

module attributes {stable_mosaic.version = 11 : i64} {
  func.func @_linear_kernel(%arg0: i32, %arg1: i32, %arg2: i32, %arg3: memref<16x32xf32, #tpu.memory_space<vmem>>, %arg4: memref<32x32xf32, #tpu.memory_space<vmem>>, %arg5: memref<1x32xf32, #tpu.memory_space<vmem>>, %arg6: memref<16x32xf32, #tpu.memory_space<vmem>>, %arg7: memref<16x32xf32, #tpu.memory_space<vmem>>) attributes {dimension_semantics = [#tpu.dimension_semantics<parallel>, #tpu.dimension_semantics<parallel>, #tpu.dimension_semantics<arbitrary>], iteration_bounds = array<i64: 1, 1, 1>, scalar_prefetch = 0 : i64, scratch_operands = 1 : i64, tpu.core_type = #tpu.core_type<tc>, window_params = [{transform_indices = @transform_0, window_bounds = array<i64: 16, 32>}, {transform_indices = @transform_1, window_bounds = array<i64: 32, 32>}, {transform_indices = @transform_2, window_bounds = array<i64: 1, 32>}, {transform_indices = @transform_3, window_bounds = array<i64: 16, 32>}]} {
    %c0_i32 = arith.constant 0 : i32
    %0 = arith.cmpi eq, %arg2, %c0_i32 : i32
    %1 = arith.extui %0 : i1 to i32
    %c0_i32_0 = arith.constant 0 : i32
    %2 = arith.cmpi ne, %1, %c0_i32_0 : i32
    scf.if %2 {
      %cst_10 = arith.constant 0.000000e+00 : f32
      %14 = vector.broadcast %cst_10 : f32 to vector<16x32xf32>
      %c0_11 = arith.constant 0 : index
      %c0_12 = arith.constant 0 : index
      %15 = vector.load %arg7[%c0_11, %c0_12] : memref<16x32xf32, #tpu.memory_space<vmem>>, vector<16x32xf32>
      tpu.vector_store %arg7[%c0_11, %c0_12], %14 {strides = array<i32>} : memref<16x32xf32, #tpu.memory_space<vmem>>, vector<16x32xf32>,
    } else {
    }
    %c0 = arith.constant 0 : index
    %c0_1 = arith.constant 0 : index
    %3 = vector.load %arg3[%c0, %c0_1] : memref<16x32xf32, #tpu.memory_space<vmem>>, vector<16x32xf32>
    %c0_2 = arith.constant 0 : index
    %c0_3 = arith.constant 0 : index
    %4 = vector.load %arg7[%c0_2, %c0_3] : memref<16x32xf32, #tpu.memory_space<vmem>>, vector<16x32xf32>
    %5 = arith.truncf %3 : vector<16x32xf32> to vector<16x32xbf16>
    %c0_4 = arith.constant 0 : index
    %c0_5 = arith.constant 0 : index
    %6 = vector.load %arg4[%c0_4, %c0_5] : memref<32x32xf32, #tpu.memory_space<vmem>>, vector<32x32xf32>
    %7 = arith.truncf %6 : vector<32x32xf32> to vector<32x32xbf16>
    %cst = arith.constant dense<0.000000e+00> : vector<16x32xf32>
    %8 = tpu.matmul %5, %7, %cst {dimension_numbers = #tpu.dot_dimension_numbers<[1], [0], [0], [1], [0, 0, 1, 1], [], []>} : vector<16x32xbf16>, vector<32x32xbf16>, vector<16x32xf32> -> vector<16x32xf32>
    %9 = arith.addf %4, %8 : vector<16x32xf32>
    %c0_6 = arith.constant 0 : index
    %c0_7 = arith.constant 0 : index
    %10 = vector.load %arg7[%c0_6, %c0_7] : memref<16x32xf32, #tpu.memory_space<vmem>>, vector<16x32xf32>
    tpu.vector_store %arg7[%c0_6, %c0_7], %9 {strides = array<i32>} : memref<16x32xf32, #tpu.memory_space<vmem>>, vector<16x32xf32>,
    %c0_i32_8 = arith.constant 0 : i32
    %11 = arith.cmpi eq, %arg2, %c0_i32_8 : i32
    %12 = arith.extui %11 : i1 to i32
    %c0_i32_9 = arith.constant 0 : i32
    %13 = arith.cmpi ne, %12, %c0_i32_9 : i32
    scf.if %13 {
      %c0_10 = arith.constant 0 : index
      %c0_11 = arith.constant 0 : index
      %14 = vector.load %arg7[%c0_10, %c0_11] : memref<16x32xf32, #tpu.memory_space<vmem>>, vector<16x32xf32>
      %c0_12 = arith.constant 0 : index
      %c0_13 = arith.constant 0 : index
      %15 = vector.load %arg5[%c0_12, %c0_13] : memref<1x32xf32, #tpu.memory_space<vmem>>, vector<1x32xf32>
      %16 = vector.broadcast %15 : vector<1x32xf32> to vector<16x32xf32>
      %17 = arith.addf %14, %16 : vector<16x32xf32>
      %c0_14 = arith.constant 0 : index
      %c0_15 = arith.constant 0 : index
      %18 = vector.load %arg6[%c0_14, %c0_15] : memref<16x32xf32, #tpu.memory_space<vmem>>, vector<16x32xf32>
      tpu.vector_store %arg6[%c0_14, %c0_15], %17 {strides = array<i32>} : memref<16x32xf32, #tpu.memory_space<vmem>>, vector<16x32xf32>,
    } else {
    }
    return
  }
  func.func @transform_0(%arg0: i32, %arg1: i32, %arg2: i32) -> (i32, i32) {
    %c0_i32 = arith.constant 0 : i32
    return %arg0, %arg2 : i32, i32
  }
  func.func @transform_1(%arg0: i32, %arg1: i32, %arg2: i32) -> (i32, i32) {
    %c0_i32 = arith.constant 0 : i32
    return %arg2, %arg1 : i32, i32
  }
  func.func @transform_2(%arg0: i32, %arg1: i32, %arg2: i32) -> (i32, i32) {
    %c0_i32 = arith.constant 0 : i32
    %c0_i32_0 = arith.constant 0 : i32
    return %c0_i32, %arg1 : i32, i32
  }
  func.func @transform_3(%arg0: i32, %arg1: i32, %arg2: i32) -> (i32, i32) {
    %c0_i32 = arith.constant 0 : i32
    return %arg0, %arg1 : i32, i32
  }
}

module attributes {stable_mosaic.version = 11 : i64} {
  func.func @_linear_kernel(%arg0: i32, %arg1: i32, %arg2: i32, %arg3: memref<16x32xf32, #tpu.memory_space<vmem>>, %arg4: memref<32x32xf32, #tpu.memory_space<vmem>>, %arg5: memref<1x32xf32, #tpu.memory_space<vmem>>, %arg6: memref<16x32xf32, #tpu.memory_space<vmem>>, %arg7: memref<1x32xf32, #tpu.memory_space<vmem>>, %arg8: memref<1x32xf32, #tpu.memory_space<vmem>>, %arg9: memref<16x32xf32, #tpu.memory_space<vmem>>, %arg10: memref<16x32xf32, #tpu.memory_space<vmem>>) attributes {dimension_semantics = [#tpu.dimension_semantics<parallel>, #tpu.dimension_semantics<parallel>, #tpu.dimension_semantics<arbitrary>], iteration_bounds = array<i64: 1, 1, 1>, scalar_prefetch = 0 : i64, scratch_operands = 1 : i64, tpu.core_type = #tpu.core_type<tc>, window_params = [{transform_indices = @transform_0, window_bounds = array<i64: 16, 32>}, {transform_indices = @transform_1, window_bounds = array<i64: 32, 32>}, {transform_indices = @transform_2, window_bounds = array<i64: 1, 32>}, {transform_indices = @transform_3, window_bounds = array<i64: 16, 32>}, {transform_indices = @transform_4, window_bounds = array<i64: 1, 32>}, {transform_indices = @transform_5, window_bounds = array<i64: 1, 32>}, {transform_indices = @transform_6, window_bounds = array<i64: 16, 32>}]} {
    %c0_i32 = arith.constant 0 : i32
    %0 = arith.cmpi eq, %arg2, %c0_i32 : i32
    %1 = arith.extui %0 : i1 to i32
    %c0_i32_0 = arith.constant 0 : i32
    %2 = arith.cmpi ne, %1, %c0_i32_0 : i32
    scf.if %2 {
      %cst_10 = arith.constant 0.000000e+00 : f32
      %14 = vector.broadcast %cst_10 : f32 to vector<16x32xf32>
      %c0_11 = arith.constant 0 : index
      %c0_12 = arith.constant 0 : index
      %15 = vector.load %arg10[%c0_11, %c0_12] : memref<16x32xf32, #tpu.memory_space<vmem>>, vector<16x32xf32>
      tpu.vector_store %arg10[%c0_11, %c0_12], %14 {strides = array<i32>} : memref<16x32xf32, #tpu.memory_space<vmem>>, vector<16x32xf32>,
    } else {
    }
    %c0 = arith.constant 0 : index
    %c0_1 = arith.constant 0 : index
    %3 = vector.load %arg3[%c0, %c0_1] : memref<16x32xf32, #tpu.memory_space<vmem>>, vector<16x32xf32>
    %c0_2 = arith.constant 0 : index
    %c0_3 = arith.constant 0 : index
    %4 = vector.load %arg10[%c0_2, %c0_3] : memref<16x32xf32, #tpu.memory_space<vmem>>, vector<16x32xf32>
    %5 = arith.truncf %3 : vector<16x32xf32> to vector<16x32xbf16>
    %c0_4 = arith.constant 0 : index
    %c0_5 = arith.constant 0 : index
    %6 = vector.load %arg4[%c0_4, %c0_5] : memref<32x32xf32, #tpu.memory_space<vmem>>, vector<32x32xf32>
    %7 = arith.truncf %6 : vector<32x32xf32> to vector<32x32xbf16>
    %cst = arith.constant dense<0.000000e+00> : vector<16x32xf32>
    %8 = tpu.matmul %5, %7, %cst {dimension_numbers = #tpu.dot_dimension_numbers<[1], [0], [0], [1], [0, 0, 1, 1], [], []>} : vector<16x32xbf16>, vector<32x32xbf16>, vector<16x32xf32> -> vector<16x32xf32>
    %9 = arith.addf %4, %8 : vector<16x32xf32>
    %c0_6 = arith.constant 0 : index
    %c0_7 = arith.constant 0 : index
    %10 = vector.load %arg10[%c0_6, %c0_7] : memref<16x32xf32, #tpu.memory_space<vmem>>, vector<16x32xf32>
    tpu.vector_store %arg10[%c0_6, %c0_7], %9 {strides = array<i32>} : memref<16x32xf32, #tpu.memory_space<vmem>>, vector<16x32xf32>,
    %c0_i32_8 = arith.constant 0 : i32
    %11 = arith.cmpi eq, %arg2, %c0_i32_8 : i32
    %12 = arith.extui %11 : i1 to i32
    %c0_i32_9 = arith.constant 0 : i32
    %13 = arith.cmpi ne, %12, %c0_i32_9 : i32
    scf.if %13 {
      %c0_10 = arith.constant 0 : index
      %c0_11 = arith.constant 0 : index
      %14 = vector.load %arg10[%c0_10, %c0_11] : memref<16x32xf32, #tpu.memory_space<vmem>>, vector<16x32xf32>
      %c0_12 = arith.constant 0 : index
      %c0_13 = arith.constant 0 : index
      %15 = vector.load %arg5[%c0_12, %c0_13] : memref<1x32xf32, #tpu.memory_space<vmem>>, vector<1x32xf32>
      %16 = vector.broadcast %15 : vector<1x32xf32> to vector<16x32xf32>
      %17 = arith.addf %14, %16 : vector<16x32xf32>
      %c0_14 = arith.constant 0 : index
      %c0_15 = arith.constant 0 : index
      %18 = vector.load %arg6[%c0_14, %c0_15] : memref<16x32xf32, #tpu.memory_space<vmem>>, vector<16x32xf32>
      %19 = arith.addf %17, %18 : vector<16x32xf32>
      %cst_16 = arith.constant dense<0.000000e+00> : vector<16xf32>
      %20 = vector.multi_reduction <add>, %19, %cst_16 [1] : vector<16x32xf32> to vector<16xf32>
      %21 = vector.shape_cast %20 : vector<16xf32> to vector<16x1xf32>
      %cst_17 = arith.constant 3.200000e+01 : f32
      %22 = vector.broadcast %cst_17 : f32 to vector<16x1xf32>
      %23 = arith.divf %21, %22 : vector<16x1xf32>
      %24 = vector.broadcast %23 : vector<16x1xf32> to vector<16x32xf32>
      %25 = arith.subf %19, %24 : vector<16x32xf32>
      %26 = arith.mulf %25, %25 : vector<16x32xf32>
      %cst_18 = arith.constant dense<0.000000e+00> : vector<16xf32>
      %27 = vector.multi_reduction <add>, %26, %cst_18 [1] : vector<16x32xf32> to vector<16xf32>
      %28 = vector.shape_cast %27 : vector<16xf32> to vector<16x1xf32>
      %cst_19 = arith.constant 3.200000e+01 : f32
      %29 = vector.broadcast %cst_19 : f32 to vector<16x1xf32>
      %30 = arith.divf %28, %29 : vector<16x1xf32>
      %cst_20 = arith.constant 9.99999974E-6 : f32
      %31 = vector.broadcast %cst_20 : f32 to vector<16x1xf32>
      %32 = arith.addf %30, %31 : vector<16x1xf32>
      %33 = math.rsqrt %32 : vector<16x1xf32>
      %34 = vector.broadcast %33 : vector<16x1xf32> to vector<16x32xf32>
      %35 = arith.mulf %25, %34 : vector<16x32xf32>
      %c0_21 = arith.constant 0 : index
      %c0_22 = arith.constant 0 : index
      %36 = vector.load %arg7[%c0_21, %c0_22] : memref<1x32xf32, #tpu.memory_space<vmem>>, vector<1x32xf32>
      %37 = vector.broadcast %36 : vector<1x32xf32> to vector<16x32xf32>
      %38 = arith.mulf %35, %37 : vector<16x32xf32>
      %c0_23 = arith.constant 0 : index
      %c0_24 = arith.constant 0 : index
      %39 = vector.load %arg8[%c0_23, %c0_24] : memref<1x32xf32, #tpu.memory_space<vmem>>, vector<1x32xf32>
      %40 = vector.broadcast %39 : vector<1x32xf32> to vector<16x32xf32>
      %41 = arith.addf %38, %40 : vector<16x32xf32>
      %c0_25 = arith.constant 0 : index
      %c0_26 = arith.constant 0 : index
      %42 = vector.load %arg9[%c0_25, %c0_26] : memref<16x32xf32, #tpu.memory_space<vmem>>, vector<16x32xf32>
      tpu.vector_store %arg9[%c0_25, %c0_26], %41 {strides = array<i32>} : memref<16x32xf32, #tpu.memory_space<vmem>>, vector<16x32xf32>,
    } else {
    }
    return
  }
  func.func @transform_0(%arg0: i32, %arg1: i32, %arg2: i32) -> (i32, i32) {
    %c0_i32 = arith.constant 0 : i32
    return %arg0, %arg2 : i32, i32
  }
  func.func @transform_1(%arg0: i32, %arg1: i32, %arg2: i32) -> (i32, i32) {
    %c0_i32 = arith.constant 0 : i32
    return %arg2, %arg1 : i32, i32
  }
  func.func @transform_2(%arg0: i32, %arg1: i32, %arg2: i32) -> (i32, i32) {
    %c0_i32 = arith.constant 0 : i32
    %c0_i32_0 = arith.constant 0 : i32
    return %c0_i32, %arg1 : i32, i32
  }
  func.func @transform_3(%arg0: i32, %arg1: i32, %arg2: i32) -> (i32, i32) {
    %c0_i32 = arith.constant 0 : i32
    return %arg0, %arg1 : i32, i32
  }
  func.func @transform_4(%arg0: i32, %arg1: i32, %arg2: i32) -> (i32, i32) {
    %c0_i32 = arith.constant 0 : i32
    %c0_i32_0 = arith.constant 0 : i32
    return %c0_i32, %arg1 : i32, i32
  }
  func.func @transform_5(%arg0: i32, %arg1: i32, %arg2: i32) -> (i32, i32) {
    %c0_i32 = arith.constant 0 : i32
    %c0_i32_0 = arith.constant 0 : i32
    return %c0_i32, %arg1 : i32, i32
  }
  func.func @transform_6(%arg0: i32, %arg1: i32, %arg2: i32) -> (i32, i32) {
    %c0_i32 = arith.constant 0 : i32
    return %arg0, %arg1 : i32, i32
  }
}

module attributes {stable_mosaic.version = 11 : i64} {
  func.func @_linear_kernel(%arg0: i32, %arg1: i32, %arg2: i32, %arg3: memref<16x32xf32, #tpu.memory_space<vmem>>, %arg4: memref<16x32xf32, #tpu.memory_space<vmem>>, %arg5: memref<32x32xf32, #tpu.memory_space<vmem>>, %arg6: memref<1x32xf32, #tpu.memory_space<vmem>>, %arg7: memref<16x32xf32, #tpu.memory_space<vmem>>, %arg8: memref<16x32xf32, #tpu.memory_space<vmem>>) attributes {dimension_semantics = [#tpu.dimension_semantics<parallel>, #tpu.dimension_semantics<parallel>, #tpu.dimension_semantics<arbitrary>], iteration_bounds = array<i64: 1, 1, 1>, scalar_prefetch = 0 : i64, scratch_operands = 1 : i64, tpu.core_type = #tpu.core_type<tc>, window_params = [{transform_indices = @transform_0, window_bounds = array<i64: 16, 32>}, {transform_indices = @transform_1, window_bounds = array<i64: 16, 32>}, {transform_indices = @transform_2, window_bounds = array<i64: 32, 32>}, {transform_indices = @transform_3, window_bounds = array<i64: 1, 32>}, {transform_indices = @transform_4, window_bounds = array<i64: 16, 32>}]} {
    %c0_i32 = arith.constant 0 : i32
    %0 = arith.cmpi eq, %arg2, %c0_i32 : i32
    %1 = arith.extui %0 : i1 to i32
    %c0_i32_0 = arith.constant 0 : i32
    %2 = arith.cmpi ne, %1, %c0_i32_0 : i32
    scf.if %2 {
      %cst_12 = arith.constant 0.000000e+00 : f32
      %16 = vector.broadcast %cst_12 : f32 to vector<16x32xf32>
      %c0_13 = arith.constant 0 : index
      %c0_14 = arith.constant 0 : index
      %17 = vector.load %arg8[%c0_13, %c0_14] : memref<16x32xf32, #tpu.memory_space<vmem>>, vector<16x32xf32>
      tpu.vector_store %arg8[%c0_13, %c0_14], %16 {strides = array<i32>} : memref<16x32xf32, #tpu.memory_space<vmem>>, vector<16x32xf32>,
    } else {
    }
    %c0 = arith.constant 0 : index
    %c0_1 = arith.constant 0 : index
    %3 = vector.load %arg3[%c0, %c0_1] : memref<16x32xf32, #tpu.memory_space<vmem>>, vector<16x32xf32>
    %c0_2 = arith.constant 0 : index
    %c0_3 = arith.constant 0 : index
    %4 = vector.load %arg4[%c0_2, %c0_3] : memref<16x32xf32, #tpu.memory_space<vmem>>, vector<16x32xf32>
    %5 = arith.addf %3, %4 : vector<16x32xf32>
    %c0_4 = arith.constant 0 : index
    %c0_5 = arith.constant 0 : index
    %6 = vector.load %arg8[%c0_4, %c0_5] : memref<16x32xf32, #tpu.memory_space<vmem>>, vector<16x32xf32>
    %7 = arith.truncf %5 : vector<16x32xf32> to vector<16x32xbf16>
    %c0_6 = arith.constant 0 : index
    %c0_7 = arith.constant 0 : index
    %8 = vector.load %arg5[%c0_6, %c0_7] : memref<32x32xf32, #tpu.memory_space<vmem>>, vector<32x32xf32>
    %9 = arith.truncf %8 : vector<32x32xf32> to vector<32x32xbf16>
    %cst = arith.constant dense<0.000000e+00> : vector<16x32xf32>
    %10 = tpu.matmul %7, %9, %cst {dimension_numbers = #tpu.dot_dimension_numbers<[1], [0], [0], [1], [0, 0, 1, 1], [], []>} : vector<16x32xbf16>, vector<32x32xbf16>, vector<16x32xf32> -> vector<16x32xf32>
    %11 = arith.addf %6, %10 : vector<16x32xf32>
    %c0_8 = arith.constant 0 : index
    %c0_9 = arith.constant 0 : index
    %12 = vector.load %arg8[%c0_8, %c0_9] : memref<16x32xf32, #tpu.memory_space<vmem>>, vector<16x32xf32>
    tpu.vector_store %arg8[%c0_8, %c0_9], %11 {strides = array<i32>} : memref<16x32xf32, #tpu.memory_space<vmem>>, vector<16x32xf32>,
    %c0_i32_10 = arith.constant 0 : i32
    %13 = arith.cmpi eq, %arg2, %c0_i32_10 : i32
    %14 = arith.extui %13 : i1 to i32
    %c0_i32_11 = arith.constant 0 : i32
    %15 = arith.cmpi ne, %14, %c0_i32_11 : i32
    scf.if %15 {
      %c0_12 = arith.constant 0 : index
      %c0_13 = arith.constant 0 : index
      %16 = vector.load %arg8[%c0_12, %c0_13] : memref<16x32xf32, #tpu.memory_space<vmem>>, vector<16x32xf32>
      %c0_14 = arith.constant 0 : index
      %c0_15 = arith.constant 0 : index
      %17 = vector.load %arg6[%c0_14, %c0_15] : memref<1x32xf32, #tpu.memory_space<vmem>>, vector<1x32xf32>
      %18 = vector.broadcast %17 : vector<1x32xf32> to vector<16x32xf32>
      %19 = arith.addf %16, %18 : vector<16x32xf32>
      %c0_16 = arith.constant 0 : index
      %c0_17 = arith.constant 0 : index
      %20 = vector.load %arg7[%c0_16, %c0_17] : memref<16x32xf32, #tpu.memory_space<vmem>>, vector<16x32xf32>
      tpu.vector_store %arg7[%c0_16, %c0_17], %19 {strides = array<i32>} : memref<16x32xf32, #tpu.memory_space<vmem>>, vector<16x32xf32>,
    } else {
    }
    return
  }
  func.func @transform_0(%arg0: i32, %arg1: i32, %arg2: i32) -> (i32, i32) {
    %c0_i32 = arith.constant 0 : i32
    return %arg0, %arg2 : i32, i32
  }
  func.func @transform_1(%arg0: i32, %arg1: i32, %arg2: i32) -> (i32, i32) {
    %c0_i32 = arith.constant 0 : i32
    return %arg0, %arg2 : i32, i32
  }
  func.func @transform_2(%arg0: i32, %arg1: i32, %arg2: i32) -> (i32, i32) {
    %c0_i32 = arith.constant 0 : i32
    return %arg2, %arg1 : i32, i32
  }
  func.func @transform_3(%arg0: i32, %arg1: i32, %arg2: i32) -> (i32, i32) {
    %c0_i32 = arith.constant 0 : i32
    %c0_i32_0 = arith.constant 0 : i32
    return %c0_i32, %arg1 : i32, i32
  }
  func.func @transform_4(%arg0: i32, %arg1: i32, %arg2: i32) -> (i32, i32) {
    %c0_i32 = arith.constant 0 : i32
    return %arg0, %arg1 : i32, i32
  }
}

module attributes {stable_mosaic.version = 11 : i64} {
  func.func @_linear_kernel(%arg0: i32, %arg1: i32, %arg2: i32, %arg3: memref<32x32xf32, #tpu.memory_space<vmem>>, %arg4: memref<32x32xf32, #tpu.memory_space<vmem>>, %arg5: memref<32x32xf32, #tpu.memory_space<vmem>>, %arg6: memref<1x32xf32, #tpu.memory_space<vmem>>, %arg7: memref<32x32xf32, #tpu.memory_space<vmem>>, %arg8: memref<32x32xf32, #tpu.memory_space<vmem>>) attributes {dimension_semantics = [#tpu.dimension_semantics<parallel>, #tpu.dimension_semantics<parallel>, #tpu.dimension_semantics<arbitrary>], iteration_bounds = array<i64: 1, 1, 1>, scalar_prefetch = 0 : i64, scratch_operands = 1 : i64, tpu.core_type = #tpu.core_type<tc>, window_params = [{transform_indices = @transform_0, window_bounds = array<i64: 32, 32>}, {transform_indices = @transform_1, window_bounds = array<i64: 32, 32>}, {transform_indices = @transform_2, window_bounds = array<i64: 32, 32>}, {transform_indices = @transform_3, window_bounds = array<i64: 1, 32>}, {transform_indices = @transform_4, window_bounds = array<i64: 32, 32>}]} {
    %c0_i32 = arith.constant 0 : i32
    %0 = arith.cmpi eq, %arg2, %c0_i32 : i32
    %1 = arith.extui %0 : i1 to i32
    %c0_i32_0 = arith.constant 0 : i32
    %2 = arith.cmpi ne, %1, %c0_i32_0 : i32
    scf.if %2 {
      %cst_12 = arith.constant 0.000000e+00 : f32
      %16 = vector.broadcast %cst_12 : f32 to vector<32x32xf32>
      %c0_13 = arith.constant 0 : index
      %c0_14 = arith.constant 0 : index
      %17 = vector.load %arg8[%c0_13, %c0_14] : memref<32x32xf32, #tpu.memory_space<vmem>>, vector<32x32xf32>
      tpu.vector_store %arg8[%c0_13, %c0_14], %16 {strides = array<i32>} : memref<32x32xf32, #tpu.memory_space<vmem>>, vector<32x32xf32>,
    } else {
    }
    %c0 = arith.constant 0 : index
    %c0_1 = arith.constant 0 : index
    %3 = vector.load %arg3[%c0, %c0_1] : memref<32x32xf32, #tpu.memory_space<vmem>>, vector<32x32xf32>
    %c0_2 = arith.constant 0 : index
    %c0_3 = arith.constant 0 : index
    %4 = vector.load %arg4[%c0_2, %c0_3] : memref<32x32xf32, #tpu.memory_space<vmem>>, vector<32x32xf32>
    %5 = arith.addf %3, %4 : vector<32x32xf32>
    %c0_4 = arith.constant 0 : index
    %c0_5 = arith.constant 0 : index
    %6 = vector.load %arg8[%c0_4, %c0_5] : memref<32x32xf32, #tpu.memory_space<vmem>>, vector<32x32xf32>
    %7 = arith.truncf %5 : vector<32x32xf32> to vector<32x32xbf16>
    %c0_6 = arith.constant 0 : index
    %c0_7 = arith.constant 0 : index
    %8 = vector.load %arg5[%c0_6, %c0_7] : memref<32x32xf32, #tpu.memory_space<vmem>>, vector<32x32xf32>
    %9 = arith.truncf %8 : vector<32x32xf32> to vector<32x32xbf16>
    %cst = arith.constant dense<0.000000e+00> : vector<32x32xf32>
    %10 = tpu.matmul %7, %9, %cst {dimension_numbers = #tpu.dot_dimension_numbers<[1], [0], [0], [1], [0, 0, 1, 1], [], []>} : vector<32x32xbf16>, vector<32x32xbf16>, vector<32x32xf32> -> vector<32x32xf32>
    %11 = arith.addf %6, %10 : vector<32x32xf32>
    %c0_8 = arith.constant 0 : index
    %c0_9 = arith.constant 0 : index
    %12 = vector.load %arg8[%c0_8, %c0_9] : memref<32x32xf32, #tpu.memory_space<vmem>>, vector<32x32xf32>
    tpu.vector_store %arg8[%c0_8, %c0_9], %11 {strides = array<i32>} : memref<32x32xf32, #tpu.memory_space<vmem>>, vector<32x32xf32>,
    %c0_i32_10 = arith.constant 0 : i32
    %13 = arith.cmpi eq, %arg2, %c0_i32_10 : i32
    %14 = arith.extui %13 : i1 to i32
    %c0_i32_11 = arith.constant 0 : i32
    %15 = arith.cmpi ne, %14, %c0_i32_11 : i32
    scf.if %15 {
      %c0_12 = arith.constant 0 : index
      %c0_13 = arith.constant 0 : index
      %16 = vector.load %arg8[%c0_12, %c0_13] : memref<32x32xf32, #tpu.memory_space<vmem>>, vector<32x32xf32>
      %c0_14 = arith.constant 0 : index
      %c0_15 = arith.constant 0 : index
      %17 = vector.load %arg6[%c0_14, %c0_15] : memref<1x32xf32, #tpu.memory_space<vmem>>, vector<1x32xf32>
      %18 = vector.broadcast %17 : vector<1x32xf32> to vector<32x32xf32>
      %19 = arith.addf %16, %18 : vector<32x32xf32>
      %c0_16 = arith.constant 0 : index
      %c0_17 = arith.constant 0 : index
      %20 = vector.load %arg7[%c0_16, %c0_17] : memref<32x32xf32, #tpu.memory_space<vmem>>, vector<32x32xf32>
      tpu.vector_store %arg7[%c0_16, %c0_17], %19 {strides = array<i32>} : memref<32x32xf32, #tpu.memory_space<vmem>>, vector<32x32xf32>,
    } else {
    }
    return
  }
  func.func @transform_0(%arg0: i32, %arg1: i32, %arg2: i32) -> (i32, i32) {
    %c0_i32 = arith.constant 0 : i32
    return %arg0, %arg2 : i32, i32
  }
  func.func @transform_1(%arg0: i32, %arg1: i32, %arg2: i32) -> (i32, i32) {
    %c0_i32 = arith.constant 0 : i32
    return %arg0, %arg2 : i32, i32
  }
  func.func @transform_2(%arg0: i32, %arg1: i32, %arg2: i32) -> (i32, i32) {
    %c0_i32 = arith.constant 0 : i32
    return %arg2, %arg1 : i32, i32
  }
  func.func @transform_3(%arg0: i32, %arg1: i32, %arg2: i32) -> (i32, i32) {
    %c0_i32 = arith.constant 0 : i32
    %c0_i32_0 = arith.constant 0 : i32
    return %c0_i32, %arg1 : i32, i32
  }
  func.func @transform_4(%arg0: i32, %arg1: i32, %arg2: i32) -> (i32, i32) {
    %c0_i32 = arith.constant 0 : i32
    return %arg0, %arg1 : i32, i32
  }
}

module attributes {stable_mosaic.version = 11 : i64} {
  func.func @_linear_kernel(%arg0: i32, %arg1: i32, %arg2: i32, %arg3: memref<32x32xf32, #tpu.memory_space<vmem>>, %arg4: memref<32x32xf32, #tpu.memory_space<vmem>>, %arg5: memref<1x32xf32, #tpu.memory_space<vmem>>, %arg6: memref<32x32xf32, #tpu.memory_space<vmem>>, %arg7: memref<32x32xf32, #tpu.memory_space<vmem>>) attributes {dimension_semantics = [#tpu.dimension_semantics<parallel>, #tpu.dimension_semantics<parallel>, #tpu.dimension_semantics<arbitrary>], iteration_bounds = array<i64: 1, 1, 1>, scalar_prefetch = 0 : i64, scratch_operands = 1 : i64, tpu.core_type = #tpu.core_type<tc>, window_params = [{transform_indices = @transform_0, window_bounds = array<i64: 32, 32>}, {transform_indices = @transform_1, window_bounds = array<i64: 32, 32>}, {transform_indices = @transform_2, window_bounds = array<i64: 1, 32>}, {transform_indices = @transform_3, window_bounds = array<i64: 32, 32>}]} {
    %c0_i32 = arith.constant 0 : i32
    %0 = arith.cmpi eq, %arg2, %c0_i32 : i32
    %1 = arith.extui %0 : i1 to i32
    %c0_i32_0 = arith.constant 0 : i32
    %2 = arith.cmpi ne, %1, %c0_i32_0 : i32
    scf.if %2 {
      %cst_10 = arith.constant 0.000000e+00 : f32
      %14 = vector.broadcast %cst_10 : f32 to vector<32x32xf32>
      %c0_11 = arith.constant 0 : index
      %c0_12 = arith.constant 0 : index
      %15 = vector.load %arg7[%c0_11, %c0_12] : memref<32x32xf32, #tpu.memory_space<vmem>>, vector<32x32xf32>
      tpu.vector_store %arg7[%c0_11, %c0_12], %14 {strides = array<i32>} : memref<32x32xf32, #tpu.memory_space<vmem>>, vector<32x32xf32>,
    } else {
    }
    %c0 = arith.constant 0 : index
    %c0_1 = arith.constant 0 : index
    %3 = vector.load %arg3[%c0, %c0_1] : memref<32x32xf32, #tpu.memory_space<vmem>>, vector<32x32xf32>
    %c0_2 = arith.constant 0 : index
    %c0_3 = arith.constant 0 : index
    %4 = vector.load %arg7[%c0_2, %c0_3] : memref<32x32xf32, #tpu.memory_space<vmem>>, vector<32x32xf32>
    %5 = arith.truncf %3 : vector<32x32xf32> to vector<32x32xbf16>
    %c0_4 = arith.constant 0 : index
    %c0_5 = arith.constant 0 : index
    %6 = vector.load %arg4[%c0_4, %c0_5] : memref<32x32xf32, #tpu.memory_space<vmem>>, vector<32x32xf32>
    %7 = arith.truncf %6 : vector<32x32xf32> to vector<32x32xbf16>
    %cst = arith.constant dense<0.000000e+00> : vector<32x32xf32>
    %8 = tpu.matmul %5, %7, %cst {dimension_numbers = #tpu.dot_dimension_numbers<[1], [0], [0], [1], [0, 0, 1, 1], [], []>} : vector<32x32xbf16>, vector<32x32xbf16>, vector<32x32xf32> -> vector<32x32xf32>
    %9 = arith.addf %4, %8 : vector<32x32xf32>
    %c0_6 = arith.constant 0 : index
    %c0_7 = arith.constant 0 : index
    %10 = vector.load %arg7[%c0_6, %c0_7] : memref<32x32xf32, #tpu.memory_space<vmem>>, vector<32x32xf32>
    tpu.vector_store %arg7[%c0_6, %c0_7], %9 {strides = array<i32>} : memref<32x32xf32, #tpu.memory_space<vmem>>, vector<32x32xf32>,
    %c0_i32_8 = arith.constant 0 : i32
    %11 = arith.cmpi eq, %arg2, %c0_i32_8 : i32
    %12 = arith.extui %11 : i1 to i32
    %c0_i32_9 = arith.constant 0 : i32
    %13 = arith.cmpi ne, %12, %c0_i32_9 : i32
    scf.if %13 {
      %c0_10 = arith.constant 0 : index
      %c0_11 = arith.constant 0 : index
      %14 = vector.load %arg7[%c0_10, %c0_11] : memref<32x32xf32, #tpu.memory_space<vmem>>, vector<32x32xf32>
      %c0_12 = arith.constant 0 : index
      %c0_13 = arith.constant 0 : index
      %15 = vector.load %arg5[%c0_12, %c0_13] : memref<1x32xf32, #tpu.memory_space<vmem>>, vector<1x32xf32>
      %16 = vector.broadcast %15 : vector<1x32xf32> to vector<32x32xf32>
      %17 = arith.addf %14, %16 : vector<32x32xf32>
      %c0_14 = arith.constant 0 : index
      %c0_15 = arith.constant 0 : index
      %18 = vector.load %arg6[%c0_14, %c0_15] : memref<32x32xf32, #tpu.memory_space<vmem>>, vector<32x32xf32>
      tpu.vector_store %arg6[%c0_14, %c0_15], %17 {strides = array<i32>} : memref<32x32xf32, #tpu.memory_space<vmem>>, vector<32x32xf32>,
    } else {
    }
    return
  }
  func.func @transform_0(%arg0: i32, %arg1: i32, %arg2: i32) -> (i32, i32) {
    %c0_i32 = arith.constant 0 : i32
    return %arg0, %arg2 : i32, i32
  }
  func.func @transform_1(%arg0: i32, %arg1: i32, %arg2: i32) -> (i32, i32) {
    %c0_i32 = arith.constant 0 : i32
    return %arg2, %arg1 : i32, i32
  }
  func.func @transform_2(%arg0: i32, %arg1: i32, %arg2: i32) -> (i32, i32) {
    %c0_i32 = arith.constant 0 : i32
    %c0_i32_0 = arith.constant 0 : i32
    return %c0_i32, %arg1 : i32, i32
  }
  func.func @transform_3(%arg0: i32, %arg1: i32, %arg2: i32) -> (i32, i32) {
    %c0_i32 = arith.constant 0 : i32
    return %arg0, %arg1 : i32, i32
  }
}

module attributes {stable_mosaic.version = 11 : i64} {
  func.func @_mha_kernel(%arg0: i32, %arg1: i32, %arg2: i32, %arg3: memref<1x4x8x8xf32, #tpu.memory_space<vmem>>, %arg4: memref<1x4x16x8xf32, #tpu.memory_space<vmem>>, %arg5: memref<1x4x16x8xf32, #tpu.memory_space<vmem>>, %arg6: memref<1x8x16xf32, #tpu.memory_space<vmem>>, %arg7: memref<1x8x32xf32, #tpu.memory_space<vmem>>, %arg8: memref<4x8x1xf32, #tpu.memory_space<vmem>>, %arg9: memref<4x8x1xf32, #tpu.memory_space<vmem>>, %arg10: memref<4x8x8xf32, #tpu.memory_space<vmem>>) attributes {dimension_semantics = [#tpu.dimension_semantics<parallel>, #tpu.dimension_semantics<parallel>, #tpu.dimension_semantics<arbitrary>], iteration_bounds = array<i64: 2, 1, 1>, scalar_prefetch = 0 : i64, scratch_operands = 3 : i64, tpu.core_type = #tpu.core_type<tc>, window_params = [{transform_indices = @transform_0, window_bounds = array<i64: 1, 4, 8, 8>}, {transform_indices = @transform_1, window_bounds = array<i64: 1, 4, 16, 8>}, {transform_indices = @transform_2, window_bounds = array<i64: 1, 4, 16, 8>}, {transform_indices = @transform_3, window_bounds = array<i64: 1, 8, 16>}, {transform_indices = @transform_4, window_bounds = array<i64: 1, 8, 32>}]} {
    %c0_i32 = arith.constant 0 : i32
    %0 = arith.cmpi eq, %arg2, %c0_i32 : i32
    %1 = arith.extui %0 : i1 to i32
    %c0_i32_0 = arith.constant 0 : i32
    %2 = arith.cmpi ne, %1, %c0_i32_0 : i32
    scf.if %2 {
      %cst_39 = arith.constant 0xFF800000 : f32
      %46 = vector.broadcast %cst_39 : f32 to vector<4x8x1xf32>
      %c0_40 = arith.constant 0 : index
      %c0_41 = arith.constant 0 : index
      %c0_42 = arith.constant 0 : index
      %47 = vector.load %arg8[%c0_40, %c0_41, %c0_42] : memref<4x8x1xf32, #tpu.memory_space<vmem>>, vector<4x8x1xf32>
      tpu.vector_store %arg8[%c0_40, %c0_41, %c0_42], %46 {strides = array<i32>} : memref<4x8x1xf32, #tpu.memory_space<vmem>>, vector<4x8x1xf32>,
      %cst_43 = arith.constant 0.000000e+00 : f32
      %48 = vector.broadcast %cst_43 : f32 to vector<4x8x1xf32>
      %c0_44 = arith.constant 0 : index
      %c0_45 = arith.constant 0 : index
      %c0_46 = arith.constant 0 : index
      %49 = vector.load %arg9[%c0_44, %c0_45, %c0_46] : memref<4x8x1xf32, #tpu.memory_space<vmem>>, vector<4x8x1xf32>
      tpu.vector_store %arg9[%c0_44, %c0_45, %c0_46], %48 {strides = array<i32>} : memref<4x8x1xf32, #tpu.memory_space<vmem>>, vector<4x8x1xf32>,
      %cst_47 = arith.constant 0.000000e+00 : f32
      %50 = vector.broadcast %cst_47 : f32 to vector<4x8x8xf32>
      %c0_48 = arith.constant 0 : index
      %c0_49 = arith.constant 0 : index
      %c0_50 = arith.constant 0 : index
      %51 = vector.load %arg10[%c0_48, %c0_49, %c0_50] : memref<4x8x8xf32, #tpu.memory_space<vmem>>, vector<4x8x8xf32>
      tpu.vector_store %arg10[%c0_48, %c0_49, %c0_50], %50 {strides = array<i32>} : memref<4x8x8xf32, #tpu.memory_space<vmem>>, vector<4x8x8xf32>,
    } else {
    }
    %c0 = arith.constant 0 : index
    %c0_1 = arith.constant 0 : index
    %c0_2 = arith.constant 0 : index
    %c0_3 = arith.constant 0 : index
    %3 = vector.load %arg3[%c0, %c0_1, %c0_2, %c0_3] : memref<1x4x8x8xf32, #tpu.memory_space<vmem>>, vector<1x4x8x8xf32>
    %4 = vector.shape_cast %3 : vector<1x4x8x8xf32> to vector<4x8x8xf32>
    %cst = arith.constant 0.353553385 : f32
    %5 = vector.broadcast %cst : f32 to vector<4x8x8xf32>
    %6 = arith.mulf %4, %5 : vector<4x8x8xf32>
    %7 = arith.truncf %6 : vector<4x8x8xf32> to vector<4x8x8xbf16>
    %c0_4 = arith.constant 0 : index
    %c0_5 = arith.constant 0 : index
    %c0_6 = arith.constant 0 : index
    %c0_7 = arith.constant 0 : index
    %8 = vector.load %arg4[%c0_4, %c0_5, %c0_6, %c0_7] : memref<1x4x16x8xf32, #tpu.memory_space<vmem>>, vector<1x4x16x8xf32>
    %9 = vector.shape_cast %8 : vector<1x4x16x8xf32> to vector<4x16x8xf32>
    %10 = arith.truncf %9 : vector<4x16x8xf32> to vector<4x16x8xbf16>
    %c0_8 = arith.constant 0 : index
    %c0_9 = arith.constant 0 : index
    %c0_10 = arith.constant 0 : index
    %c0_11 = arith.constant 0 : index
    %11 = vector.load %arg5[%c0_8, %c0_9, %c0_10, %c0_11] : memref<1x4x16x8xf32, #tpu.memory_space<vmem>>, vector<1x4x16x8xf32>
    %12 = vector.shape_cast %11 : vector<1x4x16x8xf32> to vector<4x16x8xf32>
    %13 = arith.truncf %12 : vector<4x16x8xf32> to vector<4x16x8xbf16>
    %cst_12 = arith.constant dense<0.000000e+00> : vector<4x8x16xf32>
    %14 = tpu.matmul %7, %10, %cst_12 {dimension_numbers = #tpu.dot_dimension_numbers<[2], [2], [1], [1], [0, 0, 0, 1, 1, 1], [0], [0]>} : vector<4x8x8xbf16>, vector<4x16x8xbf16>, vector<4x8x16xf32> -> vector<4x8x16xf32>
    %c0_13 = arith.constant 0 : index
    %c0_14 = arith.constant 0 : index
    %c0_15 = arith.constant 0 : index
    %15 = vector.load %arg8[%c0_13, %c0_14, %c0_15] : memref<4x8x1xf32, #tpu.memory_space<vmem>>, vector<4x8x1xf32>
    %cst_16 = arith.constant dense<0xFF800000> : vector<4x8xf32>
    %16 = vector.multi_reduction <maximumf>, %14, %cst_16 [2] : vector<4x8x16xf32> to vector<4x8xf32>
    %17 = vector.shape_cast %16 : vector<4x8xf32> to vector<4x8x1xf32>
    %18 = arith.maximumf %15, %17 : vector<4x8x1xf32>
    %19 = arith.subf %15, %18 : vector<4x8x1xf32>
    %20 = math.exp %19 : vector<4x8x1xf32>
    %21 = vector.broadcast %18 : vector<4x8x1xf32> to vector<4x8x16xf32>
    %22 = arith.subf %14, %21 : vector<4x8x16xf32>
    %23 = math.exp %22 : vector<4x8x16xf32>
    %c0_17 = arith.constant 0 : index
    %c0_18 = arith.constant 0 : index
    %c0_19 = arith.constant 0 : index
    %24 = vector.load %arg9[%c0_17, %c0_18, %c0_19] : memref<4x8x1xf32, #tpu.memory_space<vmem>>, vector<4x8x1xf32>
    %25 = arith.mulf %20, %24 : vector<4x8x1xf32>
    %cst_20 = arith.constant dense<0.000000e+00> : vector<4x8xf32>
    %26 = vector.multi_reduction <add>, %23, %cst_20 [2] : vector<4x8x16xf32> to vector<4x8xf32>
    %27 = vector.shape_cast %26 : vector<4x8xf32> to vector<4x8x1xf32>
    %28 = arith.addf %25, %27 : vector<4x8x1xf32>
    %c0_21 = arith.constant 0 : index
    %c0_22 = arith.constant 0 : index
    %c0_23 = arith.constant 0 : index
    %29 = vector.load %arg9[%c0_21, %c0_22, %c0_23] : memref<4x8x1xf32, #tpu.memory_space<vmem>>, vector<4x8x1xf32>
    tpu.vector_store %arg9[%c0_21, %c0_22, %c0_23], %28 {strides = array<i32>} : memref<4x8x1xf32, #tpu.memory_space<vmem>>, vector<4x8x1xf32>,
    %c0_24 = arith.constant 0 : index
    %c0_25 = arith.constant 0 : index
    %c0_26 = arith.constant 0 : index
    %30 = vector.load %arg6[%c0_24, %c0_25, %c0_26] : memref<1x8x16xf32, #tpu.memory_space<vmem>>, vector<1x8x16xf32>
    %31 = vector.shape_cast %30 : vector<1x8x16xf32> to vector<8x16xf32>
    %32 = vector.shape_cast %31 : vector<8x16xf32> to vector<1x8x16xf32>
    %33 = vector.broadcast %32 : vector<1x8x16xf32> to vector<4x8x16xf32>
    %34 = arith.mulf %23, %33 : vector<4x8x16xf32>
    %c0_27 = arith.constant 0 : index
    %c0_28 = arith.constant 0 : index
    %c0_29 = arith.constant 0 : index
    %35 = vector.load %arg10[%c0_27, %c0_28, %c0_29] : memref<4x8x8xf32, #tpu.memory_space<vmem>>, vector<4x8x8xf32>
    %36 = vector.broadcast %20 : vector<4x8x1xf32> to vector<4x8x8xf32>
    %37 = arith.mulf %36, %35 : vector<4x8x8xf32>
    %38 = arith.truncf %34 : vector<4x8x16xf32> to vector<4x8x16xbf16>
    %cst_30 = arith.constant dense<0.000000e+00> : vector<4x8x8xf32>
    %39 = tpu.matmul %38, %13, %cst_30 {dimension_numbers = #tpu.dot_dimension_numbers<[2], [1], [1], [2], [0, 0, 0, 1, 1, 2], [0], [0]>} : vector<4x8x16xbf16>, vector<4x16x8xbf16>, vector<4x8x8xf32> -> vector<4x8x8xf32>
    %40 = arith.addf %37, %39 : vector<4x8x8xf32>
    %c0_31 = arith.constant 0 : index
    %c0_32 = arith.constant 0 : index
    %c0_33 = arith.constant 0 : index
    %41 = vector.load %arg10[%c0_31, %c0_32, %c0_33] : memref<4x8x8xf32, #tpu.memory_space<vmem>>, vector<4x8x8xf32>
    tpu.vector_store %arg10[%c0_31, %c0_32, %c0_33], %40 {strides = array<i32>} : memref<4x8x8xf32, #tpu.memory_space<vmem>>, vector<4x8x8xf32>,
    %c0_34 = arith.constant 0 : index
    %c0_35 = arith.constant 0 : index
    %c0_36 = arith.constant 0 : index
    %42 = vector.load %arg8[%c0_34, %c0_35, %c0_36] : memref<4x8x1xf32, #tpu.memory_space<vmem>>, vector<4x8x1xf32>
    tpu.vector_store %arg8[%c0_34, %c0_35, %c0_36], %18 {strides = array<i32>} : memref<4x8x1xf32, #tpu.memory_space<vmem>>, vector<4x8x1xf32>,
    %c0_i32_37 = arith.constant 0 : i32
    %43 = arith.cmpi eq, %arg2, %c0_i32_37 : i32
    %44 = arith.extui %43 : i1 to i32
    %c0_i32_38 = arith.constant 0 : i32
    %45 = arith.cmpi ne, %44, %c0_i32_38 : i32
    scf.if %45 {
      %c0_39 = arith.constant 0 : index
      %c0_40 = arith.constant 0 : index
      %c0_41 = arith.constant 0 : index
      %46 = vector.load %arg10[%c0_39, %c0_40, %c0_41] : memref<4x8x8xf32, #tpu.memory_space<vmem>>, vector<4x8x8xf32>
      %c0_42 = arith.constant 0 : index
      %c0_43 = arith.constant 0 : index
      %c0_44 = arith.constant 0 : index
      %47 = vector.load %arg9[%c0_42, %c0_43, %c0_44] : memref<4x8x1xf32, #tpu.memory_space<vmem>>, vector<4x8x1xf32>
      %48 = tpu.reciprocal %47 {approx = true} : vector<4x8x1xf32> -> vector<4x8x1xf32>
      %49 = vector.broadcast %48 : vector<4x8x1xf32> to vector<4x8x8xf32>
      %50 = arith.mulf %46, %49 : vector<4x8x8xf32>
      %51 = vector.extract_strided_slice %50 {offsets = [0, 0, 0], sizes = [1, 8, 8], strides = [1, 1, 1]} : vector<4x8x8xf32> to vector<1x8x8xf32>
      %52 = vector.shape_cast %51 : vector<1x8x8xf32> to vector<8x8xf32>
      %53 = vector.extract_strided_slice %50 {offsets = [1, 0, 0], sizes = [1, 8, 8], strides = [1, 1, 1]} : vector<4x8x8xf32> to vector<1x8x8xf32>
      %54 = vector.shape_cast %53 : vector<1x8x8xf32> to vector<8x8xf32>
      %55 = vector.extract_strided_slice %50 {offsets = [2, 0, 0], sizes = [1, 8, 8], strides = [1, 1, 1]} : vector<4x8x8xf32> to vector<1x8x8xf32>
      %56 = vector.shape_cast %55 : vector<1x8x8xf32> to vector<8x8xf32>
      %57 = vector.extract_strided_slice %50 {offsets = [3, 0, 0], sizes = [1, 8, 8], strides = [1, 1, 1]} : vector<4x8x8xf32> to vector<1x8x8xf32>
      %58 = vector.shape_cast %57 : vector<1x8x8xf32> to vector<8x8xf32>
      %59 = tpu.concatenate %52, %54, %56, %58 in 1 : vector<8x8xf32>, vector<8x8xf32>, vector<8x8xf32>, vector<8x8xf32> -> vector<8x32xf32>
      %c0_45 = arith.constant 0 : index
      %c0_46 = arith.constant 0 : index
      %c0_47 = arith.constant 0 : index
      %60 = vector.load %arg7[%c0_45, %c0_46, %c0_47] : memref<1x8x32xf32, #tpu.memory_space<vmem>>, vector<1x8x32xf32>
      %61 = vector.shape_cast %60 : vector<1x8x32xf32> to vector<8x32xf32>
      %62 = vector.shape_cast %59 : vector<8x32xf32> to vector<1x8x32xf32>
      tpu.vector_store %arg7[%c0_45, %c0_46, %c0_47], %62 {strides = array<i32>} : memref<1x8x32xf32, #tpu.memory_space<vmem>>, vector<1x8x32xf32>,
    } else {
    }
    return
  }
  func.func @transform_0(%arg0: i32, %arg1: i32, %arg2: i32) -> (i32, i32, i32, i32) {
    %c0_i32 = arith.constant 0 : i32
    %c0_i32_0 = arith.constant 0 : i32
    %c0_i32_1 = arith.constant 0 : i32
    return %arg0, %c0_i32, %arg1, %c0_i32_0 : i32, i32, i32, i32
  }
  func.func @transform_1(%arg0: i32, %arg1: i32, %arg2: i32) -> (i32, i32, i32, i32) {
    %c0_i32 = arith.constant 0 : i32
    %c0_i32_0 = arith.constant 0 : i32
    %c0_i32_1 = arith.constant 0 : i32
    return %arg0, %c0_i32, %arg2, %c0_i32_0 : i32, i32, i32, i32
  }
  func.func @transform_2(%arg0: i32, %arg1: i32, %arg2: i32) -> (i32, i32, i32, i32) {
    %c0_i32 = arith.constant 0 : i32
    %c0_i32_0 = arith.constant 0 : i32
    %c0_i32_1 = arith.constant 0 : i32
    return %arg0, %c0_i32, %arg2, %c0_i32_0 : i32, i32, i32, i32
  }
  func.func @transform_3(%arg0: i32, %arg1: i32, %arg2: i32) -> (i32, i32, i32) {
    %c0_i32 = arith.constant 0 : i32
    return %arg0, %arg1, %arg2 : i32, i32, i32
  }
  func.func @transform_4(%arg0: i32, %arg1: i32, %arg2: i32) -> (i32, i32, i32) {
    %c0_i32 = arith.constant 0 : i32
    %c0_i32_0 = arith.constant 0 : i32
    return %arg0, %arg1, %c0_i32 : i32, i32, i32
  }
}

module attributes {stable_mosaic.version = 11 : i64} {
  func.func @_linear_kernel(%arg0: i32, %arg1: i32, %arg2: i32, %arg3: memref<16x32xf32, #tpu.memory_space<vmem>>, %arg4: memref<32x64xf32, #tpu.memory_space<vmem>>, %arg5: memref<1x64xf32, #tpu.memory_space<vmem>>, %arg6: memref<16x64xf32, #tpu.memory_space<vmem>>, %arg7: memref<16x64xf32, #tpu.memory_space<vmem>>) attributes {dimension_semantics = [#tpu.dimension_semantics<parallel>, #tpu.dimension_semantics<parallel>, #tpu.dimension_semantics<arbitrary>], iteration_bounds = array<i64: 1, 1, 1>, scalar_prefetch = 0 : i64, scratch_operands = 1 : i64, tpu.core_type = #tpu.core_type<tc>, window_params = [{transform_indices = @transform_0, window_bounds = array<i64: 16, 32>}, {transform_indices = @transform_1, window_bounds = array<i64: 32, 64>}, {transform_indices = @transform_2, window_bounds = array<i64: 1, 64>}, {transform_indices = @transform_3, window_bounds = array<i64: 16, 64>}]} {
    %c0_i32 = arith.constant 0 : i32
    %0 = arith.cmpi eq, %arg2, %c0_i32 : i32
    %1 = arith.extui %0 : i1 to i32
    %c0_i32_0 = arith.constant 0 : i32
    %2 = arith.cmpi ne, %1, %c0_i32_0 : i32
    scf.if %2 {
      %cst_10 = arith.constant 0.000000e+00 : f32
      %14 = vector.broadcast %cst_10 : f32 to vector<16x64xf32>
      %c0_11 = arith.constant 0 : index
      %c0_12 = arith.constant 0 : index
      %15 = vector.load %arg7[%c0_11, %c0_12] : memref<16x64xf32, #tpu.memory_space<vmem>>, vector<16x64xf32>
      tpu.vector_store %arg7[%c0_11, %c0_12], %14 {strides = array<i32>} : memref<16x64xf32, #tpu.memory_space<vmem>>, vector<16x64xf32>,
    } else {
    }
    %c0 = arith.constant 0 : index
    %c0_1 = arith.constant 0 : index
    %3 = vector.load %arg3[%c0, %c0_1] : memref<16x32xf32, #tpu.memory_space<vmem>>, vector<16x32xf32>
    %c0_2 = arith.constant 0 : index
    %c0_3 = arith.constant 0 : index
    %4 = vector.load %arg7[%c0_2, %c0_3] : memref<16x64xf32, #tpu.memory_space<vmem>>, vector<16x64xf32>
    %5 = arith.truncf %3 : vector<16x32xf32> to vector<16x32xbf16>
    %c0_4 = arith.constant 0 : index
    %c0_5 = arith.constant 0 : index
    %6 = vector.load %arg4[%c0_4, %c0_5] : memref<32x64xf32, #tpu.memory_space<vmem>>, vector<32x64xf32>
    %7 = arith.truncf %6 : vector<32x64xf32> to vector<32x64xbf16>
    %cst = arith.constant dense<0.000000e+00> : vector<16x64xf32>
    %8 = tpu.matmul %5, %7, %cst {dimension_numbers = #tpu.dot_dimension_numbers<[1], [0], [0], [1], [0, 0, 1, 1], [], []>} : vector<16x32xbf16>, vector<32x64xbf16>, vector<16x64xf32> -> vector<16x64xf32>
    %9 = arith.addf %4, %8 : vector<16x64xf32>
    %c0_6 = arith.constant 0 : index
    %c0_7 = arith.constant 0 : index
    %10 = vector.load %arg7[%c0_6, %c0_7] : memref<16x64xf32, #tpu.memory_space<vmem>>, vector<16x64xf32>
    tpu.vector_store %arg7[%c0_6, %c0_7], %9 {strides = array<i32>} : memref<16x64xf32, #tpu.memory_space<vmem>>, vector<16x64xf32>,
    %c0_i32_8 = arith.constant 0 : i32
    %11 = arith.cmpi eq, %arg2, %c0_i32_8 : i32
    %12 = arith.extui %11 : i1 to i32
    %c0_i32_9 = arith.constant 0 : i32
    %13 = arith.cmpi ne, %12, %c0_i32_9 : i32
    scf.if %13 {
      %c0_10 = arith.constant 0 : index
      %c0_11 = arith.constant 0 : index
      %14 = vector.load %arg7[%c0_10, %c0_11] : memref<16x64xf32, #tpu.memory_space<vmem>>, vector<16x64xf32>
      %c0_12 = arith.constant 0 : index
      %c0_13 = arith.constant 0 : index
      %15 = vector.load %arg5[%c0_12, %c0_13] : memref<1x64xf32, #tpu.memory_space<vmem>>, vector<1x64xf32>
      %16 = vector.broadcast %15 : vector<1x64xf32> to vector<16x64xf32>
      %17 = arith.addf %14, %16 : vector<16x64xf32>
      %cst_14 = arith.constant 0.000000e+00 : f32
      %18 = vector.broadcast %cst_14 : f32 to vector<16x64xf32>
      %19 = arith.maximumf %17, %18 : vector<16x64xf32>
      %c0_15 = arith.constant 0 : index
      %c0_16 = arith.constant 0 : index
      %20 = vector.load %arg6[%c0_15, %c0_16] : memref<16x64xf32, #tpu.memory_space<vmem>>, vector<16x64xf32>
      tpu.vector_store %arg6[%c0_15, %c0_16], %19 {strides = array<i32>} : memref<16x64xf32, #tpu.memory_space<vmem>>, vector<16x64xf32>,
    } else {
    }
    return
  }
  func.func @transform_0(%arg0: i32, %arg1: i32, %arg2: i32) -> (i32, i32) {
    %c0_i32 = arith.constant 0 : i32
    return %arg0, %arg2 : i32, i32
  }
  func.func @transform_1(%arg0: i32, %arg1: i32, %arg2: i32) -> (i32, i32) {
    %c0_i32 = arith.constant 0 : i32
    return %arg2, %arg1 : i32, i32
  }
  func.func @transform_2(%arg0: i32, %arg1: i32, %arg2: i32) -> (i32, i32) {
    %c0_i32 = arith.constant 0 : i32
    %c0_i32_0 = arith.constant 0 : i32
    return %c0_i32, %arg1 : i32, i32
  }
  func.func @transform_3(%arg0: i32, %arg1: i32, %arg2: i32) -> (i32, i32) {
    %c0_i32 = arith.constant 0 : i32
    return %arg0, %arg1 : i32, i32
  }
}

module attributes {stable_mosaic.version = 11 : i64} {
  func.func @_linear_kernel(%arg0: i32, %arg1: i32, %arg2: i32, %arg3: memref<16x64xf32, #tpu.memory_space<vmem>>, %arg4: memref<64x32xf32, #tpu.memory_space<vmem>>, %arg5: memref<1x32xf32, #tpu.memory_space<vmem>>, %arg6: memref<16x32xf32, #tpu.memory_space<vmem>>, %arg7: memref<1x32xf32, #tpu.memory_space<vmem>>, %arg8: memref<1x32xf32, #tpu.memory_space<vmem>>, %arg9: memref<16x32xf32, #tpu.memory_space<vmem>>, %arg10: memref<16x32xf32, #tpu.memory_space<vmem>>) attributes {dimension_semantics = [#tpu.dimension_semantics<parallel>, #tpu.dimension_semantics<parallel>, #tpu.dimension_semantics<arbitrary>], iteration_bounds = array<i64: 1, 1, 1>, scalar_prefetch = 0 : i64, scratch_operands = 1 : i64, tpu.core_type = #tpu.core_type<tc>, window_params = [{transform_indices = @transform_0, window_bounds = array<i64: 16, 64>}, {transform_indices = @transform_1, window_bounds = array<i64: 64, 32>}, {transform_indices = @transform_2, window_bounds = array<i64: 1, 32>}, {transform_indices = @transform_3, window_bounds = array<i64: 16, 32>}, {transform_indices = @transform_4, window_bounds = array<i64: 1, 32>}, {transform_indices = @transform_5, window_bounds = array<i64: 1, 32>}, {transform_indices = @transform_6, window_bounds = array<i64: 16, 32>}]} {
    %c0_i32 = arith.constant 0 : i32
    %0 = arith.cmpi eq, %arg2, %c0_i32 : i32
    %1 = arith.extui %0 : i1 to i32
    %c0_i32_0 = arith.constant 0 : i32
    %2 = arith.cmpi ne, %1, %c0_i32_0 : i32
    scf.if %2 {
      %cst_10 = arith.constant 0.000000e+00 : f32
      %14 = vector.broadcast %cst_10 : f32 to vector<16x32xf32>
      %c0_11 = arith.constant 0 : index
      %c0_12 = arith.constant 0 : index
      %15 = vector.load %arg10[%c0_11, %c0_12] : memref<16x32xf32, #tpu.memory_space<vmem>>, vector<16x32xf32>
      tpu.vector_store %arg10[%c0_11, %c0_12], %14 {strides = array<i32>} : memref<16x32xf32, #tpu.memory_space<vmem>>, vector<16x32xf32>,
    } else {
    }
    %c0 = arith.constant 0 : index
    %c0_1 = arith.constant 0 : index
    %3 = vector.load %arg3[%c0, %c0_1] : memref<16x64xf32, #tpu.memory_space<vmem>>, vector<16x64xf32>
    %c0_2 = arith.constant 0 : index
    %c0_3 = arith.constant 0 : index
    %4 = vector.load %arg10[%c0_2, %c0_3] : memref<16x32xf32, #tpu.memory_space<vmem>>, vector<16x32xf32>
    %5 = arith.truncf %3 : vector<16x64xf32> to vector<16x64xbf16>
    %c0_4 = arith.constant 0 : index
    %c0_5 = arith.constant 0 : index
    %6 = vector.load %arg4[%c0_4, %c0_5] : memref<64x32xf32, #tpu.memory_space<vmem>>, vector<64x32xf32>
    %7 = arith.truncf %6 : vector<64x32xf32> to vector<64x32xbf16>
    %cst = arith.constant dense<0.000000e+00> : vector<16x32xf32>
    %8 = tpu.matmul %5, %7, %cst {dimension_numbers = #tpu.dot_dimension_numbers<[1], [0], [0], [1], [0, 0, 1, 1], [], []>} : vector<16x64xbf16>, vector<64x32xbf16>, vector<16x32xf32> -> vector<16x32xf32>
    %9 = arith.addf %4, %8 : vector<16x32xf32>
    %c0_6 = arith.constant 0 : index
    %c0_7 = arith.constant 0 : index
    %10 = vector.load %arg10[%c0_6, %c0_7] : memref<16x32xf32, #tpu.memory_space<vmem>>, vector<16x32xf32>
    tpu.vector_store %arg10[%c0_6, %c0_7], %9 {strides = array<i32>} : memref<16x32xf32, #tpu.memory_space<vmem>>, vector<16x32xf32>,
    %c0_i32_8 = arith.constant 0 : i32
    %11 = arith.cmpi eq, %arg2, %c0_i32_8 : i32
    %12 = arith.extui %11 : i1 to i32
    %c0_i32_9 = arith.constant 0 : i32
    %13 = arith.cmpi ne, %12, %c0_i32_9 : i32
    scf.if %13 {
      %c0_10 = arith.constant 0 : index
      %c0_11 = arith.constant 0 : index
      %14 = vector.load %arg10[%c0_10, %c0_11] : memref<16x32xf32, #tpu.memory_space<vmem>>, vector<16x32xf32>
      %c0_12 = arith.constant 0 : index
      %c0_13 = arith.constant 0 : index
      %15 = vector.load %arg5[%c0_12, %c0_13] : memref<1x32xf32, #tpu.memory_space<vmem>>, vector<1x32xf32>
      %16 = vector.broadcast %15 : vector<1x32xf32> to vector<16x32xf32>
      %17 = arith.addf %14, %16 : vector<16x32xf32>
      %c0_14 = arith.constant 0 : index
      %c0_15 = arith.constant 0 : index
      %18 = vector.load %arg6[%c0_14, %c0_15] : memref<16x32xf32, #tpu.memory_space<vmem>>, vector<16x32xf32>
      %19 = arith.addf %17, %18 : vector<16x32xf32>
      %cst_16 = arith.constant dense<0.000000e+00> : vector<16xf32>
      %20 = vector.multi_reduction <add>, %19, %cst_16 [1] : vector<16x32xf32> to vector<16xf32>
      %21 = vector.shape_cast %20 : vector<16xf32> to vector<16x1xf32>
      %cst_17 = arith.constant 3.200000e+01 : f32
      %22 = vector.broadcast %cst_17 : f32 to vector<16x1xf32>
      %23 = arith.divf %21, %22 : vector<16x1xf32>
      %24 = vector.broadcast %23 : vector<16x1xf32> to vector<16x32xf32>
      %25 = arith.subf %19, %24 : vector<16x32xf32>
      %26 = arith.mulf %25, %25 : vector<16x32xf32>
      %cst_18 = arith.constant dense<0.000000e+00> : vector<16xf32>
      %27 = vector.multi_reduction <add>, %26, %cst_18 [1] : vector<16x32xf32> to vector<16xf32>
      %28 = vector.shape_cast %27 : vector<16xf32> to vector<16x1xf32>
      %cst_19 = arith.constant 3.200000e+01 : f32
      %29 = vector.broadcast %cst_19 : f32 to vector<16x1xf32>
      %30 = arith.divf %28, %29 : vector<16x1xf32>
      %cst_20 = arith.constant 9.99999974E-6 : f32
      %31 = vector.broadcast %cst_20 : f32 to vector<16x1xf32>
      %32 = arith.addf %30, %31 : vector<16x1xf32>
      %33 = math.rsqrt %32 : vector<16x1xf32>
      %34 = vector.broadcast %33 : vector<16x1xf32> to vector<16x32xf32>
      %35 = arith.mulf %25, %34 : vector<16x32xf32>
      %c0_21 = arith.constant 0 : index
      %c0_22 = arith.constant 0 : index
      %36 = vector.load %arg7[%c0_21, %c0_22] : memref<1x32xf32, #tpu.memory_space<vmem>>, vector<1x32xf32>
      %37 = vector.broadcast %36 : vector<1x32xf32> to vector<16x32xf32>
      %38 = arith.mulf %35, %37 : vector<16x32xf32>
      %c0_23 = arith.constant 0 : index
      %c0_24 = arith.constant 0 : index
      %39 = vector.load %arg8[%c0_23, %c0_24] : memref<1x32xf32, #tpu.memory_space<vmem>>, vector<1x32xf32>
      %40 = vector.broadcast %39 : vector<1x32xf32> to vector<16x32xf32>
      %41 = arith.addf %38, %40 : vector<16x32xf32>
      %c0_25 = arith.constant 0 : index
      %c0_26 = arith.constant 0 : index
      %42 = vector.load %arg9[%c0_25, %c0_26] : memref<16x32xf32, #tpu.memory_space<vmem>>, vector<16x32xf32>
      tpu.vector_store %arg9[%c0_25, %c0_26], %41 {strides = array<i32>} : memref<16x32xf32, #tpu.memory_space<vmem>>, vector<16x32xf32>,
    } else {
    }
    return
  }
  func.func @transform_0(%arg0: i32, %arg1: i32, %arg2: i32) -> (i32, i32) {
    %c0_i32 = arith.constant 0 : i32
    return %arg0, %arg2 : i32, i32
  }
  func.func @transform_1(%arg0: i32, %arg1: i32, %arg2: i32) -> (i32, i32) {
    %c0_i32 = arith.constant 0 : i32
    return %arg2, %arg1 : i32, i32
  }
  func.func @transform_2(%arg0: i32, %arg1: i32, %arg2: i32) -> (i32, i32) {
    %c0_i32 = arith.constant 0 : i32
    %c0_i32_0 = arith.constant 0 : i32
    return %c0_i32, %arg1 : i32, i32
  }
  func.func @transform_3(%arg0: i32, %arg1: i32, %arg2: i32) -> (i32, i32) {
    %c0_i32 = arith.constant 0 : i32
    return %arg0, %arg1 : i32, i32
  }
  func.func @transform_4(%arg0: i32, %arg1: i32, %arg2: i32) -> (i32, i32) {
    %c0_i32 = arith.constant 0 : i32
    %c0_i32_0 = arith.constant 0 : i32
    return %c0_i32, %arg1 : i32, i32
  }
  func.func @transform_5(%arg0: i32, %arg1: i32, %arg2: i32) -> (i32, i32) {
    %c0_i32 = arith.constant 0 : i32
    %c0_i32_0 = arith.constant 0 : i32
    return %c0_i32, %arg1 : i32, i32
  }
  func.func @transform_6(%arg0: i32, %arg1: i32, %arg2: i32) -> (i32, i32) {
    %c0_i32 = arith.constant 0 : i32
    return %arg0, %arg1 : i32, i32
  }
}

module attributes {stable_mosaic.version = 11 : i64} {
  func.func @_ln_kernel(%arg0: i32, %arg1: memref<16x32xf32, #tpu.memory_space<vmem>>, %arg2: memref<1x32xf32, #tpu.memory_space<vmem>>, %arg3: memref<1x32xf32, #tpu.memory_space<vmem>>, %arg4: memref<16x32xf32, #tpu.memory_space<vmem>>) attributes {dimension_semantics = [#tpu.dimension_semantics<parallel>], iteration_bounds = array<i64: 1>, scalar_prefetch = 0 : i64, scratch_operands = 0 : i64, tpu.core_type = #tpu.core_type<tc>, window_params = [{transform_indices = @transform_0, window_bounds = array<i64: 16, 32>}, {pipeline_mode = #tpu.pipeline_mode<synchronous>, transform_indices = @transform_1, window_bounds = array<i64: 1, 32>}, {pipeline_mode = #tpu.pipeline_mode<synchronous>, transform_indices = @transform_2, window_bounds = array<i64: 1, 32>}, {transform_indices = @transform_3, window_bounds = array<i64: 16, 32>}]} {
    %c0 = arith.constant 0 : index
    %c0_0 = arith.constant 0 : index
    %0 = vector.load %arg1[%c0, %c0_0] : memref<16x32xf32, #tpu.memory_space<vmem>>, vector<16x32xf32>
    %cst = arith.constant dense<0.000000e+00> : vector<16xf32>
    %1 = vector.multi_reduction <add>, %0, %cst [1] : vector<16x32xf32> to vector<16xf32>
    %2 = vector.shape_cast %1 : vector<16xf32> to vector<16x1xf32>
    %cst_1 = arith.constant 3.200000e+01 : f32
    %3 = vector.broadcast %cst_1 : f32 to vector<16x1xf32>
    %4 = arith.divf %2, %3 : vector<16x1xf32>
    %5 = vector.broadcast %4 : vector<16x1xf32> to vector<16x32xf32>
    %6 = arith.subf %0, %5 : vector<16x32xf32>
    %7 = arith.mulf %6, %6 : vector<16x32xf32>
    %cst_2 = arith.constant dense<0.000000e+00> : vector<16xf32>
    %8 = vector.multi_reduction <add>, %7, %cst_2 [1] : vector<16x32xf32> to vector<16xf32>
    %9 = vector.shape_cast %8 : vector<16xf32> to vector<16x1xf32>
    %cst_3 = arith.constant 3.200000e+01 : f32
    %10 = vector.broadcast %cst_3 : f32 to vector<16x1xf32>
    %11 = arith.divf %9, %10 : vector<16x1xf32>
    %cst_4 = arith.constant 9.99999974E-6 : f32
    %12 = vector.broadcast %cst_4 : f32 to vector<16x1xf32>
    %13 = arith.addf %11, %12 : vector<16x1xf32>
    %14 = math.rsqrt %13 : vector<16x1xf32>
    %15 = vector.broadcast %14 : vector<16x1xf32> to vector<16x32xf32>
    %16 = arith.mulf %6, %15 : vector<16x32xf32>
    %c0_5 = arith.constant 0 : index
    %c0_6 = arith.constant 0 : index
    %17 = vector.load %arg2[%c0_5, %c0_6] : memref<1x32xf32, #tpu.memory_space<vmem>>, vector<1x32xf32>
    %18 = vector.broadcast %17 : vector<1x32xf32> to vector<16x32xf32>
    %19 = arith.mulf %16, %18 : vector<16x32xf32>
    %c0_7 = arith.constant 0 : index
    %c0_8 = arith.constant 0 : index
    %20 = vector.load %arg3[%c0_7, %c0_8] : memref<1x32xf32, #tpu.memory_space<vmem>>, vector<1x32xf32>
    %21 = vector.broadcast %20 : vector<1x32xf32> to vector<16x32xf32>
    %22 = arith.addf %19, %21 : vector<16x32xf32>
    %c0_9 = arith.constant 0 : index
    %c0_10 = arith.constant 0 : index
    %23 = vector.load %arg4[%c0_9, %c0_10] : memref<16x32xf32, #tpu.memory_space<vmem>>, vector<16x32xf32>
    tpu.vector_store %arg4[%c0_9, %c0_10], %22 {strides = array<i32>} : memref<16x32xf32, #tpu.memory_space<vmem>>, vector<16x32xf32>,
    return
  }
  func.func @transform_0(%arg0: i32) -> (i32, i32) {
    %c0_i32 = arith.constant 0 : i32
    %c0_i32_0 = arith.constant 0 : i32
    return %arg0, %c0_i32 : i32, i32
  }
  func.func @transform_1(%arg0: i32) -> (i32, i32) {
    %c0_i32 = arith.constant 0 : i32
    %c0_i32_0 = arith.constant 0 : i32
    %c0_i32_1 = arith.constant 0 : i32
    return %c0_i32, %c0_i32_0 : i32, i32
  }
  func.func @transform_2(%arg0: i32) -> (i32, i32) {
    %c0_i32 = arith.constant 0 : i32
    %c0_i32_0 = arith.constant 0 : i32
    %c0_i32_1 = arith.constant 0 : i32
    return %c0_i32, %c0_i32_0 : i32, i32
  }
  func.func @transform_3(%arg0: i32) -> (i32, i32) {
    %c0_i32 = arith.constant 0 : i32
    %c0_i32_0 = arith.constant 0 : i32
    return %arg0, %c0_i32 : i32, i32
  }
}

</mosaic_0001>

<llo_original>
// kernel: transformer_decoder_forward.23
$region0: #{transformer_decoder_forward.23}
  #allocation0 [shape = 'u32[]', space=smem, size = 0x4, offset = 0x4, fixed_abs, tag = 'smem constant byte address 0x4 - core index']
  #allocation1 [shape = 'u32[144,128]{1,0:T(1,128)}', space=vmem, size = 0x12000, scoped, tag = 'internal scratch']
  #allocation2 [shape = 'f32[16,64]{1,0:T(8,128)}', space=vmem, size = 0x2000, scoped, tag = 'scratch operand']
  %s0 = inlined_call_operand.vmem [shape: f32[16,32], index: 0, kind: input, shape index: {}]
  %s1 = inlined_call_operand.vmem [shape: f32[16,32], index: 1, kind: input, shape index: {}]
  %s2 = inlined_call_operand.vmem [shape: f32[32,64], index: 2, kind: input, shape index: {}]
  %s3 = inlined_call_operand.vmem [shape: f32[1,64], index: 3, kind: input, shape index: {}]
  %s4 = inlined_call_operand.vmem [shape: f32[16,64], index: 4, kind: output, shape index: {}]
  %s5 = sld [smem:[#allocation0]]
  $region34: #{transformer_decoder_forward.23} parent=0
    _
  %s7 = ssub.s32 1, %s5
  %s8 = scalar_select 0, %s7, %s5
  // Predicated region
  $region2: #{transformer_decoder_forward.23} parent=0 // pred_check
    _
  $region3: #{transformer_decoder_forward.23} parent=0 // pred_check_branch
    %10 = sbr.rel (0) target = $region5
  $region4: #{transformer_decoder_forward.23} parent=0 // pred_region
    _
  $region5: #{transformer_decoder_forward.23} parent=0 // pred_fallthru
    _
  // Predicated region
  $region6: #{transformer_decoder_forward.23} parent=0 // pred_check
    _
  $region7: #{transformer_decoder_forward.23} parent=0 // pred_check_branch
    %12 = sbr.rel (0) target = $region9
  $region8: #{transformer_decoder_forward.23} parent=0 // pred_region
    _
  $region9: #{transformer_decoder_forward.23} parent=0 // pred_fallthru
    _
  // Predicated region
  $region10: #{transformer_decoder_forward.23} parent=0 // pred_check
    _
  $region11: #{transformer_decoder_forward.23} parent=0 // pred_check_branch
    %14 = sbr.rel (0) target = $region13
  $region12: #{transformer_decoder_forward.23} parent=0 // pred_region
    _
  $region13: #{transformer_decoder_forward.23} parent=0 // pred_fallthru
    _
  // Predicated region
  $region14: #{transformer_decoder_forward.23} parent=0 // pred_check
    _
  $region15: #{transformer_decoder_forward.23} parent=0 // pred_check_branch
    %16 = sbr.rel (0) target = $region17
  $region16: #{transformer_decoder_forward.23} parent=0 // pred_region
    _
  $region17: #{transformer_decoder_forward.23} parent=0 // pred_fallthru
    _
  %p18 = scmp.eq.s32.totalorder 0, 0
  // Predicated region
  $region18: #{transformer_decoder_forward.23} parent=0 // pred_check
    %p19 = pneg %p18
  $region19: #{transformer_decoder_forward.23} parent=0 // pred_check_branch
    %21 = sbr.rel (%p19) target = $region21
  $region20: #{transformer_decoder_forward.23} parent=0 // pred_region
    %vm22 = vcmask 523264
    %23 = vst.msk [vmem:[#allocation2] sm:$0xff] %vm22, 0.0
    %24 = vst.msk [vmem:[#allocation2 + $0x8] sm:$0xff] %vm22, 0.0
  $region21: #{transformer_decoder_forward.23} parent=0 // pred_fallthru
    _
  %v25 = vld [vmem:[%s0] sm:$0xff]
  %v26 = vld [vmem:[%s0 + $0x8] sm:$0xff]
  %v27 = vld [vmem:[%s1] sm:$0xff]
  %v28 = vld [vmem:[%s1 + $0x8] sm:$0xff]
  %v29 = vadd.f32 %v25, %v27
  %v30 = vadd.f32 %v26, %v28
  %v31 = vld [vmem:[#allocation2] sm:$0xff]
  %v32 = vld [vmem:[#allocation2 + $0x8] sm:$0xff]
  %v33 = vpack.c.bf16 %v30, %v29
  %v34 = vld [vmem:[%s2] sm:$0xff]
  %v35 = vld [vmem:[%s2 + $0x8] sm:$0xff]
  %v36 = vld [vmem:[%s2 + $0x10] sm:$0xff]
  %v37 = vld [vmem:[%s2 + $0x18] sm:$0xff]
  %v38 = vpack.c.bf16 %v35, %v34
  %v39 = vpack.c.bf16 %v37, %v36
  %vm40 = vcmask 261120
  %v42 = vsel %vm40, %v33, 0
  %44 = vmatprep.subr.bf16.mxu0 0
  %45 = vmatpush1.bf16.msra.mxu0 %v38
  %46 = vmatprep.subr.bf16.mxu0 0
  %47 = vmatpush1.bf16.msra.mxu0 %v39
  %48 = vmatprep.subr.bf16.mxu0 0
  %49 = vmatpush1.bf16.msra.mxu0 0
  %50 = vmatprep.subr.bf16.mxu0 0
  %51 = vmatpush1.bf16.msra.mxu0 0
  %52 = vmatprep.subr.bf16.mxu0 0
  %53 = vmatpush1.bf16.msra.mxu0 0
  %54 = vmatprep.subr.bf16.mxu0 0
  %55 = vmatpush1.bf16.msra.mxu0 0
  %56 = vmatprep.subr.bf16.mxu0 0
  %57 = vmatpush1.bf16.msra.mxu0 0
  %58 = vmatprep.subr.bf16.mxu0 0
  %59 = vmatpush1.bf16.msra.mxu0 0
  %60 = vmatprep.subr.bf16.mxu0 0
  %61 = vmatpush1.bf16.msra.mxu0 0
  %62 = vmatprep.subr.bf16.mxu0 0
  %63 = vmatpush1.bf16.msra.mxu0 0
  %64 = vmatprep.subr.bf16.mxu0 0
  %65 = vmatpush1.bf16.msra.mxu0 0
  %66 = vmatprep.subr.bf16.mxu0 0
  %67 = vmatpush1.bf16.msra.mxu0 0
  %68 = vmatprep.subr.bf16.mxu0 0
  %69 = vmatpush1.bf16.msra.mxu0 0
  %70 = vmatprep.subr.bf16.mxu0 0
  %71 = vmatpush1.bf16.msra.mxu0 0
  %72 = vmatprep.subr.bf16.mxu0 0
  %73 = vmatpush1.bf16.msra.mxu0 0
  %74 = vmatprep.subr.bf16.mxu0 0
  %75 = vmatpush1.bf16.msra.mxu0 0
  %76 = vmatprep.mubr.bf16.mxu0 0
  %77 = vmatmul.mubr.bf16.gmra.mrb[0].mxu0 %v42
  %v78 = vpop.f32.mrb[0].mxu0
  %v79 = vadd.f32 0.0, %v78
  %v80 = vpop.f32.mrb[0].mxu0
  %v81 = vpop.f32.mrb[0].mxu0
  %v82 = vadd.f32 0.0, %v81
  %v83 = vpop.f32.mrb[0].mxu0
  %84 = vdwg.mxu0
  %v85 = vadd.f32 %v31, %v79
  %v86 = vadd.f32 %v32, %v82
  %vm87 = vcmask 523264
  %88 = vst.msk [vmem:[#allocation2] sm:$0xff] %vm87, %v85
  %89 = vst.msk [vmem:[#allocation2 + $0x8] sm:$0xff] %vm87, %v86
  // Predicated region
  $region22: #{transformer_decoder_forward.23} parent=0 // pred_check
    %p90 = pneg %p18
  $region23: #{transformer_decoder_forward.23} parent=0 // pred_check_branch
    %92 = sbr.rel (%p90) target = $region25
  $region24: #{transformer_decoder_forward.23} parent=0 // pred_region
    %v93 = vld [vmem:[#allocation2] sm:$0xff]
    %v94 = vld [vmem:[#allocation2 + $0x8] sm:$0xff]
    %v95 = vld [vmem:[%s3] sm:$0x1]
    %v97 = vlaneseq
    %v98 = vshrl.u32 %v97, 7
    %v99 = vsub.s32 0, %v98
    %v100 = vrot.slane %v95, %v99
    %v102 = vadd.f32 %v93, %v100
    %v103 = vadd.f32 %v94, %v100
    %104 = vst.msk [vmem:[%s4] sm:$0xff] %vm87, %v102
    %105 = vst.msk [vmem:[%s4 + $0x8] sm:$0xff] %vm87, %v103
  $region25: #{transformer_decoder_forward.23} parent=0 // pred_fallthru
    _
  // Predicated region
  $region26: #{transformer_decoder_forward.23} parent=0 // pred_check
    _
  $region27: #{transformer_decoder_forward.23} parent=0 // pred_check_branch
    %107 = sbr.rel (0) target = $region29
  $region28: #{transformer_decoder_forward.23} parent=0 // pred_region
    _
  $region29: #{transformer_decoder_forward.23} parent=0 // pred_fallthru
    _
  // Predicated region
  $region30: #{transformer_decoder_forward.23} parent=0 // pred_check
    _
  $region31: #{transformer_decoder_forward.23} parent=0 // pred_check_branch
    %109 = sbr.rel (0) target = $region33
  $region32: #{transformer_decoder_forward.23} parent=0 // pred_region
    _
  $region33: #{transformer_decoder_forward.23} parent=0 // pred_fallthru
    _

// kernel: transformer_decoder_forward.25
$region0: #{transformer_decoder_forward.25}
  #allocation0 [shape = 'u32[]', space=smem, size = 0x4, offset = 0x4, fixed_abs, tag = 'smem constant byte address 0x4 - core index']
  #allocation1 [shape = 'u32[144,128]{1,0:T(1,128)}', space=vmem, size = 0x12000, scoped, tag = 'internal scratch']
  #allocation2 [shape = 'f32[4,8,1]{2,1,0:T(8,128)}', space=vmem, size = 0x4000, scoped, tag = 'scratch operand']
  #allocation3 [shape = 'f32[4,8,1]{2,1,0:T(8,128)}', space=vmem, size = 0x4000, scoped, tag = 'scratch operand']
  #allocation4 [shape = 'f32[4,8,8]{2,1,0:T(8,128)}', space=vmem, size = 0x4000, scoped, tag = 'scratch operand']
  %s0 = inlined_call_operand.vmem [shape: f32[2,4,8,8], index: 0, kind: input, shape index: {}]
  %s1 = inlined_call_operand.vmem [shape: f32[2,4,8,8], index: 1, kind: input, shape index: {}]
  %s2 = inlined_call_operand.vmem [shape: f32[2,4,8,8], index: 2, kind: input, shape index: {}]
  %s3 = inlined_call_operand.vmem [shape: f32[2,8,32], index: 3, kind: output, shape index: {}]
  %s4 = sld [smem:[#allocation0]]
  $region53: #{transformer_decoder_forward.25} parent=0
    _
  %s6 = ssub.s32 1, %s4
  %s7 = scalar_select 0, %s6, %s4
  loop: start=0, step=1, limit=4
  $region2: #{transformer_decoder_forward.25} parent=0 // loop_pre_header
    _
  $region3: #{transformer_decoder_forward.25} parent=0 // loop_header
    %s9 = sphi 0, %s13
    %p10 = scmp.ge.s32.totalorder %s9, 4
    %s16 = sphi 0, %s35
    %s17 = sphi 0, %s31
    %s18 = sphi 0, %s27
    %s19 = sphi 0, %s16
    %s20 = sphi 0, %s17
    %s21 = sphi 0, %s18
    %s22 = sphi 0, %s19
    %s23 = sphi 0, %s20
    %s24 = sphi 0, %s21
    %s40 = sphi 0, %s42
    %s43 = sphi 0, %s40
    %s44 = sphi 0, %s43
    %s60 = sphi 0, %s44
    %s68 = sphi 0, %s70
    %s71 = sphi 0, %s68
    %s72 = sphi 0, %s71
    %s88 = sphi 0, %s72
    %s96 = sphi 0, %s98
    %s99 = sphi 0, %s96
    %s100 = sphi 0, %s99
    %s116 = sphi 0, %s100
    %s124 = sphi 0, %s126
    %s127 = sphi 0, %s124
    %s128 = sphi 0, %s127
    %s144 = sphi 0, %s128
  $region4: #{transformer_decoder_forward.25} parent=0 // loop_header_branch
    %12 = sbr.rel (%p10) target = $region8
  $region5: #{transformer_decoder_forward.25} parent=0 // loop_body
    %s14 = ssub.s32 %s9, 1
    %s15 = ssub.s32 %s9, 2
    %s25 = sadd.s32 1, %s18
    %p26 = scmp.ge.s32.totalorder %s25, 1
    %s27 = scalar_select %p26, 0, %s25
    %s28 = sadd.s32 1, %s17
    %s29 = scalar_select %p26, %s28, %s17
    %p30 = scmp.ge.s32.totalorder %s29, 1
    %s31 = scalar_select %p30, 0, %s29
    %s32 = sadd.s32 1, %s16
    %s33 = scalar_select %p30, %s32, %s16
    %p34 = scmp.ge.s32.totalorder %s33, 2
    %s35 = scalar_select %p34, 0, %s33
    %s36 = ssub.s32 %s16, %s35
    %s37 = ssub.s32 %s17, %s31
    %s38 = sor.u32 %s36, %s37
    %p39 = scmp.eq.s32.totalorder %s38, 0
    %s41 = sadd.s32 %s40, 1
    %s42 = scalar_select %p39, %s40, %s41
    %p45 = pneg %p39
    %p46 = scmp.eq.s32.totalorder %s9, 1
    %p47 = por %p45, %p46
    %p48 = scmp.ne.s32.totalorder %s40, %s43
    %p49 = scmp.eq.s32.totalorder %s9, 0
    %p50 = por %p48, %p49
    %p51 = scmp.ne.s32.totalorder %s40, %s43
    %p52 = scmp.eq.s32.totalorder %s14, 1
    %p53 = por %p51, %p52
    %p54 = scmp.ne.s32.totalorder %s43, %s44
    %p55 = scmp.eq.s32.totalorder %s14, 0
    %p56 = por %p54, %p55
    %p57 = scmp.ne.s32.totalorder %s43, %s44
    %p58 = scmp.eq.s32.totalorder %s15, 1
    %p59 = por %p57, %p58
    %p61 = scmp.ne.s32.totalorder %s44, %s60
    %p62 = scmp.eq.s32.totalorder %s15, 0
    %p63 = por %p61, %p62
    %s64 = ssub.s32 %s16, %s35
    %s65 = ssub.s32 %s18, %s27
    %s66 = sor.u32 %s64, %s65
    %p67 = scmp.eq.s32.totalorder %s66, 0
    %s69 = sadd.s32 %s68, 1
    %s70 = scalar_select %p67, %s68, %s69
    %p73 = pneg %p67
    %p74 = scmp.eq.s32.totalorder %s9, 1
    %p75 = por %p73, %p74
    %p76 = scmp.ne.s32.totalorder %s68, %s71
    %p77 = scmp.eq.s32.totalorder %s9, 0
    %p78 = por %p76, %p77
    %p79 = scmp.ne.s32.totalorder %s68, %s71
    %p80 = scmp.eq.s32.totalorder %s14, 1
    %p81 = por %p79, %p80
    %p82 = scmp.ne.s32.totalorder %s71, %s72
    %p83 = scmp.eq.s32.totalorder %s14, 0
    %p84 = por %p82, %p83
    %p85 = scmp.ne.s32.totalorder %s71, %s72
    %p86 = scmp.eq.s32.totalorder %s15, 1
    %p87 = por %p85, %p86
    %p89 = scmp.ne.s32.totalorder %s72, %s88
    %p90 = scmp.eq.s32.totalorder %s15, 0
    %p91 = por %p89, %p90
    %s92 = ssub.s32 %s16, %s35
    %s93 = ssub.s32 %s18, %s27
    %s94 = sor.u32 %s92, %s93
    %p95 = scmp.eq.s32.totalorder %s94, 0
    %s97 = sadd.s32 %s96, 1
    %s98 = scalar_select %p95, %s96, %s97
    %p101 = pneg %p95
    %p102 = scmp.eq.s32.totalorder %s9, 1
    %p103 = por %p101, %p102
    %p104 = scmp.ne.s32.totalorder %s96, %s99
    %p105 = scmp.eq.s32.totalorder %s9, 0
    %p106 = por %p104, %p105
    %p107 = scmp.ne.s32.totalorder %s96, %s99
    %p108 = scmp.eq.s32.totalorder %s14, 1
    %p109 = por %p107, %p108
    %p110 = scmp.ne.s32.totalorder %s99, %s100
    %p111 = scmp.eq.s32.totalorder %s14, 0
    %p112 = por %p110, %p111
    %p113 = scmp.ne.s32.totalorder %s99, %s100
    %p114 = scmp.eq.s32.totalorder %s15, 1
    %p115 = por %p113, %p114
    %p117 = scmp.ne.s32.totalorder %s100, %s116
    %p118 = scmp.eq.s32.totalorder %s15, 0
    %p119 = por %p117, %p118
    %s120 = ssub.s32 %s16, %s35
    %s121 = ssub.s32 %s17, %s31
    %s122 = sor.u32 %s120, %s121
    %p123 = scmp.eq.s32.totalorder %s122, 0
    %s125 = sadd.s32 %s124, 1
    %s126 = scalar_select %p123, %s124, %s125
    %p129 = pneg %p123
    %p130 = scmp.eq.s32.totalorder %s9, 1
    %p131 = por %p129, %p130
    %p132 = scmp.ne.s32.totalorder %s124, %s127
    %p133 = scmp.eq.s32.totalorder %s9, 0
    %p134 = por %p132, %p133
    %p135 = scmp.ne.s32.totalorder %s124, %s127
    %p136 = scmp.eq.s32.totalorder %s14, 1
    %p137 = por %p135, %p136
    %p138 = scmp.ne.s32.totalorder %s127, %s128
    %p139 = scmp.eq.s32.totalorder %s14, 0
    %p140 = por %p138, %p139
    %p141 = scmp.ne.s32.totalorder %s127, %s128
    %p142 = scmp.eq.s32.totalorder %s15, 1
    %p143 = por %p141, %p142
    %p145 = scmp.ne.s32.totalorder %s128, %s144
    %p146 = scmp.eq.s32.totalorder %s15, 0
    %p147 = por %p145, %p146
    %p148 = scmp.le.s32.totalorder 1, %s9
    %p149 = scmp.lt.s32.totalorder %s9, 3
    %p150 = pnand %p148, %p149
    %p151 = pneg %p150
    // Predicated region
    $region9: #{transformer_decoder_forward.25} parent=5 // pred_check
      _
    $region10: #{transformer_decoder_forward.25} parent=5 // pred_check_branch
      %153 = sbr.rel (%p150) target = $region12
    $region11: #{transformer_decoder_forward.25} parent=5 // pred_region
      %s154 = ssub.s32 %s9, 1
    $region12: #{transformer_decoder_forward.25} parent=5 // pred_fallthru
      _
    %p155 = scmp.lt.s32.totalorder %s9, 2
    // Predicated region
    $region13: #{transformer_decoder_forward.25} parent=5 // pred_check
      %p156 = pneg %p155
    $region14: #{transformer_decoder_forward.25} parent=5 // pred_check_branch
      %158 = sbr.rel (%p156) target = $region16
    $region15: #{transformer_decoder_forward.25} parent=5 // pred_region
      // Predicated region
      $region17: #{transformer_decoder_forward.25} parent=15 // pred_check
        %p159 = pneg %p50
      $region18: #{transformer_decoder_forward.25} parent=15 // pred_check_branch
        %161 = sbr.rel (%p159) target = $region20
      $region19: #{transformer_decoder_forward.25} parent=15 // pred_region
        %p162 = scmp.lt.s32.totalorder %s16, 1
        %s163 = scalar_select %p162, %s16, 1
        %p164 = scmp.lt.s32.totalorder %s17, 0
        %s165 = scalar_select %p164, %s17, 0
        %s166 = smul.addr %s163, 4
        %s167 = sadd.s32 %s165, %s166
        %s168 = smul.addr %s167, 8
        %s169 = scalar_lea.vmem %s0, %s168
      $region20: #{transformer_decoder_forward.25} parent=15 // pred_fallthru
        _
      // Predicated region
      $region21: #{transformer_decoder_forward.25} parent=15 // pred_check
        %p170 = pneg %p78
      $region22: #{transformer_decoder_forward.25} parent=15 // pred_check_branch
        %172 = sbr.rel (%p170) target = $region24
      $region23: #{transformer_decoder_forward.25} parent=15 // pred_region
        %p173 = scmp.lt.s32.totalorder %s16, 1
        %s174 = scalar_select %p173, %s16, 1
        %p175 = scmp.lt.s32.totalorder %s18, 0
        %s176 = scalar_select %p175, %s18, 0
        %s177 = smul.addr %s174, 4
        %s178 = sadd.s32 %s176, %s177
        %s179 = smul.addr %s178, 8
        %s180 = scalar_lea.vmem %s1, %s179
      $region24: #{transformer_decoder_forward.25} parent=15 // pred_fallthru
        _
      // Predicated region
      $region25: #{transformer_decoder_forward.25} parent=15 // pred_check
        %p181 = pneg %p106
      $region26: #{transformer_decoder_forward.25} parent=15 // pred_check_branch
        %183 = sbr.rel (%p181) target = $region28
      $region27: #{transformer_decoder_forward.25} parent=15 // pred_region
        %p184 = scmp.lt.s32.totalorder %s16, 1
        %s185 = scalar_select %p184, %s16, 1
        %p186 = scmp.lt.s32.totalorder %s18, 0
        %s187 = scalar_select %p186, %s18, 0
        %s188 = smul.addr %s185, 4
        %s189 = sadd.s32 %s187, %s188
        %s190 = smul.addr %s189, 8
        %s191 = scalar_lea.vmem %s2, %s190
      $region28: #{transformer_decoder_forward.25} parent=15 // pred_fallthru
        _
    $region16: #{transformer_decoder_forward.25} parent=5 // pred_fallthru
      _
    %p192 = scmp.le.s32.totalorder 1, %s9
    %p193 = scmp.lt.s32.totalorder %s9, 3
    %p194 = pnand %p192, %p193
    %p195 = pneg %p194
    // Predicated region
    $region29: #{transformer_decoder_forward.25} parent=5 // pred_check
      _
    $region30: #{transformer_decoder_forward.25} parent=5 // pred_check_branch
      %197 = sbr.rel (%p194) target = $region32
    $region31: #{transformer_decoder_forward.25} parent=5 // pred_region
      %s198 = ssub.s32 %s9, 1
      %p199 = scmp.lt.s32.totalorder %s19, 1
      %s200 = scalar_select %p199, %s19, 1
      %p201 = scmp.lt.s32.totalorder %s20, 0
      %s202 = scalar_select %p201, %s20, 0
      %s203 = smul.addr %s200, 4
      %s204 = sadd.s32 %s202, %s203
      %s205 = smul.addr %s204, 8
      %s206 = scalar_lea.vmem %s0, %s205
      %p207 = pneg %p56
      %p208 = pneg %p53
      %p209 = scmp.lt.s32.totalorder %s19, 1
      %s210 = scalar_select %p209, %s19, 1
      %p211 = scmp.lt.s32.totalorder %s21, 0
      %s212 = scalar_select %p211, %s21, 0
      %s213 = smul.addr %s210, 4
      %s214 = sadd.s32 %s212, %s213
      %s215 = smul.addr %s214, 8
      %s216 = scalar_lea.vmem %s1, %s215
      %p217 = pneg %p84
      %p218 = pneg %p81
      %p219 = scmp.lt.s32.totalorder %s19, 1
      %s220 = scalar_select %p219, %s19, 1
      %p221 = scmp.lt.s32.totalorder %s21, 0
      %s222 = scalar_select %p221, %s21, 0
      %s223 = smul.addr %s220, 4
      %s224 = sadd.s32 %s222, %s223
      %s225 = smul.addr %s224, 8
      %s226 = scalar_lea.vmem %s2, %s225
      %p227 = pneg %p112
      %p228 = pneg %p109
      %p229 = pneg %p140
      %p230 = pneg %p137
      %p231 = scmp.lt.s32.totalorder %s19, 1
      %s232 = scalar_select %p231, %s19, 1
      %p233 = scmp.lt.s32.totalorder %s20, 0
      %s234 = scalar_select %p233, %s20, 0
      %s235 = sadd.s32 %s234, %s232
      %s236 = smul.addr %s235, 8
      %s237 = scalar_lea.vmem %s3, %s236
      %p238 = scmp.lt.s32.totalorder %s19, 1
      %s239 = scalar_select %p238, %s19, 1
      %p240 = scmp.lt.s32.totalorder %s20, 0
      %s241 = scalar_select %p240, %s20, 0
      %s242 = smul.addr %s239, 4
      %s243 = sadd.s32 %s241, %s242
      %s244 = smul.addr %s243, 8
      %s245 = scalar_lea.vmem %s0, %s244
      %p246 = scmp.lt.s32.totalorder %s19, 1
      %s247 = scalar_select %p246, %s19, 1
      %p248 = scmp.lt.s32.totalorder %s21, 0
      %s249 = scalar_select %p248, %s21, 0
      %s250 = smul.addr %s247, 4
      %s251 = sadd.s32 %s249, %s250
      %s252 = smul.addr %s251, 8
      %s253 = scalar_lea.vmem %s1, %s252
      %p254 = scmp.lt.s32.totalorder %s19, 1
      %s255 = scalar_select %p254, %s19, 1
      %p256 = scmp.lt.s32.totalorder %s21, 0
      %s257 = scalar_select %p256, %s21, 0
      %s258 = smul.addr %s255, 4
      %s259 = sadd.s32 %s257, %s258
      %s260 = smul.addr %s259, 8
      %s261 = scalar_lea.vmem %s2, %s260
      %p262 = scmp.lt.s32.totalorder %s19, 1
      %s263 = scalar_select %p262, %s19, 1
      %p264 = scmp.lt.s32.totalorder %s20, 0
      %s265 = scalar_select %p264, %s20, 0
      %s266 = sadd.s32 %s265, %s263
      %s267 = smul.addr %s266, 8
      %s268 = scalar_lea.vmem %s3, %s267
      %p270 = scmp.eq.s32.totalorder %s21, 0
      // Predicated region
      $region33: #{transformer_decoder_forward.25} parent=31 // pred_check
        %p271 = pneg %p270
      $region34: #{transformer_decoder_forward.25} parent=31 // pred_check_branch
        %273 = sbr.rel (%p271) target = $region36
      $region35: #{transformer_decoder_forward.25} parent=31 // pred_region
        %vm274 = vcmask 7168
        %275 = vst.msk [vmem:[#allocation2] sm:$0xff] %vm274, -inf
        %276 = vst.msk [vmem:[#allocation2 + $0x8] sm:$0xff] %vm274, -inf
        %277 = vst.msk [vmem:[#allocation2 + $0x10] sm:$0xff] %vm274, -inf
        %278 = vst.msk [vmem:[#allocation2 + $0x18] sm:$0xff] %vm274, -inf
        %279 = vst.msk [vmem:[#allocation3] sm:$0xff] %vm274, 0.0
        %280 = vst.msk [vmem:[#allocation3 + $0x8] sm:$0xff] %vm274, 0.0
        %281 = vst.msk [vmem:[#allocation3 + $0x10] sm:$0xff] %vm274, 0.0
        %282 = vst.msk [vmem:[#allocation3 + $0x18] sm:$0xff] %vm274, 0.0
        %vm283 = vcmask 64512
        %284 = vst.msk [vmem:[#allocation4] sm:$0xff] %vm283, 0.0
        %285 = vst.msk [vmem:[#allocation4 + $0x8] sm:$0xff] %vm283, 0.0
        %286 = vst.msk [vmem:[#allocation4 + $0x10] sm:$0xff] %vm283, 0.0
        %287 = vst.msk [vmem:[#allocation4 + $0x18] sm:$0xff] %vm283, 0.0
      $region36: #{transformer_decoder_forward.25} parent=31 // pred_fallthru
        _
      %v288 = vld [vmem:[%s245] sm:$0xff]
      %v289 = vld [vmem:[%s245 + $0x8] sm:$0xff]
      %v290 = vld [vmem:[%s245 + $0x10] sm:$0xff]
      %v291 = vld [vmem:[%s245 + $0x18] sm:$0xff]
      %v292 = vmul.f32 %v288, 0.35355338
      %v293 = vmul.f32 %v289, 0.35355338
      %v294 = vmul.f32 %v290, 0.35355338
      %v295 = vmul.f32 %v291, 0.35355338
      %v296 = vpack.c.bf16 %v292, %v292
      %v297 = vpack.c.bf16 %v293, %v293
      %v298 = vpack.c.bf16 %v294, %v294
      %v299 = vpack.c.bf16 %v295, %v295
      %v300 = vld [vmem:[%s253] sm:$0xff]
      %v301 = vld [vmem:[%s253 + $0x8] sm:$0xff]
      %v302 = vld [vmem:[%s253 + $0x10] sm:$0xff]
      %v303 = vld [vmem:[%s253 + $0x18] sm:$0xff]
      %v304 = vpack.c.bf16 %v300, %v300
      %v305 = vpack.c.bf16 %v301, %v301
      %v306 = vpack.c.bf16 %v302, %v302
      %v307 = vpack.c.bf16 %v303, %v303
      %v308 = vld [vmem:[%s261] sm:$0xff]
      %v309 = vld [vmem:[%s261 + $0x8] sm:$0xff]
      %v310 = vld [vmem:[%s261 + $0x10] sm:$0xff]
      %v311 = vld [vmem:[%s261 + $0x18] sm:$0xff]
      %v312 = vpack.c.bf16 %v308, %v308
      %v313 = vpack.c.bf16 %v309, %v309
      %v314 = vpack.c.bf16 %v310, %v310
      %v315 = vpack.c.bf16 %v311, %v311
      %vm316 = vcmask 64512
      %v318 = vsel %vm316, %v296, 0
      %v321 = vsel %vm316, %v304, 0
      %323 = vmatprep.subr.bf16.mxu0 0
      %324 = vmatpush1.bf16.xpose.msra.mxu0 %v321
      %325 = vmatprep.subr.bf16.mxu0 0
      %326 = vmatpush1.bf16.xpose.msra.mxu0 0
      %327 = vmatprep.subr.bf16.mxu0 0
      %328 = vmatpush1.bf16.xpose.msra.mxu0 0
      %329 = vmatprep.subr.bf16.mxu0 0
      %330 = vmatpush1.bf16.xpose.msra.mxu0 0
      %331 = vmatprep.subr.bf16.mxu0 0
      %332 = vmatpush1.bf16.xpose.msra.mxu0 0
      %333 = vmatprep.subr.bf16.mxu0 0
      %334 = vmatpush1.bf16.xpose.msra.mxu0 0
      %335 = vmatprep.subr.bf16.mxu0 0
      %336 = vmatpush1.bf16.xpose.msra.mxu0 0
      %337 = vmatprep.subr.bf16.mxu0 0
      %338 = vmatpush1.bf16.xpose.msra.mxu0 0
      %339 = vmatprep.subr.bf16.mxu0 0
      %340 = vmatpush1.bf16.xpose.msra.mxu0 0
      %341 = vmatprep.subr.bf16.mxu0 0
      %342 = vmatpush1.bf16.xpose.msra.mxu0 0
      %343 = vmatprep.subr.bf16.mxu0 0
      %344 = vmatpush1.bf16.xpose.msra.mxu0 0
      %345 = vmatprep.subr.bf16.mxu0 0
      %346 = vmatpush1.bf16.xpose.msra.mxu0 0
      %347 = vmatprep.subr.bf16.mxu0 0
      %348 = vmatpush1.bf16.xpose.msra.mxu0 0
      %349 = vmatprep.subr.bf16.mxu0 0
      %350 = vmatpush1.bf16.xpose.msra.mxu0 0
      %351 = vmatprep.subr.bf16.mxu0 0
      %352 = vmatpush1.bf16.xpose.msra.mxu0 0
      %353 = vmatprep.subr.bf16.mxu0 0
      %354 = vmatpush1.bf16.xpose.msra.mxu0 0
      %355 = vmatprep.mubr.bf16.mxu0 0
      %356 = vmatmul.mubr.bf16.gmra.mrb[0].mxu0 %v318
      %v357 = vpop.f32.mrb[0].mxu0
      %v358 = vadd.f32 0.0, %v357
      %v359 = vpop.f32.mrb[0].mxu0
      %v360 = vpop.f32.mrb[0].mxu0
      %v361 = vpop.f32.mrb[0].mxu0
      %362 = vdwg.mxu0
      %v364 = vsel %vm316, %v297, 0
      %v367 = vsel %vm316, %v305, 0
      %369 = vmatprep.subr.bf16.mxu0 0
      %370 = vmatpush1.bf16.xpose.msra.mxu0 %v367
      %371 = vmatprep.subr.bf16.mxu0 0
      %372 = vmatpush1.bf16.xpose.msra.mxu0 0
      %373 = vmatprep.subr.bf16.mxu0 0
      %374 = vmatpush1.bf16.xpose.msra.mxu0 0
      %375 = vmatprep.subr.bf16.mxu0 0
      %376 = vmatpush1.bf16.xpose.msra.mxu0 0
      %377 = vmatprep.subr.bf16.mxu0 0
      %378 = vmatpush1.bf16.xpose.msra.mxu0 0
      %379 = vmatprep.subr.bf16.mxu0 0
      %380 = vmatpush1.bf16.xpose.msra.mxu0 0
      %381 = vmatprep.subr.bf16.mxu0 0
      %382 = vmatpush1.bf16.xpose.msra.mxu0 0
      %383 = vmatprep.subr.bf16.mxu0 0
      %384 = vmatpush1.bf16.xpose.msra.mxu0 0
      %385 = vmatprep.subr.bf16.mxu0 0
      %386 = vmatpush1.bf16.xpose.msra.mxu0 0
      %387 = vmatprep.subr.bf16.mxu0 0
      %388 = vmatpush1.bf16.xpose.msra.mxu0 0
      %389 = vmatprep.subr.bf16.mxu0 0
      %390 = vmatpush1.bf16.xpose.msra.mxu0 0
      %391 = vmatprep.subr.bf16.mxu0 0
      %392 = vmatpush1.bf16.xpose.msra.mxu0 0
      %393 = vmatprep.subr.bf16.mxu0 0
      %394 = vmatpush1.bf16.xpose.msra.mxu0 0
      %395 = vmatprep.subr.bf16.mxu0 0
      %396 = vmatpush1.bf16.xpose.msra.mxu0 0
      %397 = vmatprep.subr.bf16.mxu0 0
      %398 = vmatpush1.bf16.xpose.msra.mxu0 0
      %399 = vmatprep.subr.bf16.mxu0 0
      %400 = vmatpush1.bf16.xpose.msra.mxu0 0
      %401 = vmatprep.mubr.bf16.mxu0 0
      %402 = vmatmul.mubr.bf16.gmra.mrb[0].mxu0 %v364
      %v403 = vpop.f32.mrb[0].mxu0
      %v404 = vadd.f32 0.0, %v403
      %v405 = vpop.f32.mrb[0].mxu0
      %v406 = vpop.f32.mrb[0].mxu0
      %v407 = vpop.f32.mrb[0].mxu0
      %408 = vdwg.mxu0
      %v410 = vsel %vm316, %v298, 0
      %v413 = vsel %vm316, %v306, 0
      %415 = vmatprep.subr.bf16.mxu0 0
      %416 = vmatpush1.bf16.xpose.msra.mxu0 %v413
      %417 = vmatprep.subr.bf16.mxu0 0
      %418 = vmatpush1.bf16.xpose.msra.mxu0 0
      %419 = vmatprep.subr.bf16.mxu0 0
      %420 = vmatpush1.bf16.xpose.msra.mxu0 0
      %421 = vmatprep.subr.bf16.mxu0 0
      %422 = vmatpush1.bf16.xpose.msra.mxu0 0
      %423 = vmatprep.subr.bf16.mxu0 0
      %424 = vmatpush1.bf16.xpose.msra.mxu0 0
      %425 = vmatprep.subr.bf16.mxu0 0
      %426 = vmatpush1.bf16.xpose.msra.mxu0 0
      %427 = vmatprep.subr.bf16.mxu0 0
      %428 = vmatpush1.bf16.xpose.msra.mxu0 0
      %429 = vmatprep.subr.bf16.mxu0 0
      %430 = vmatpush1.bf16.xpose.msra.mxu0 0
      %431 = vmatprep.subr.bf16.mxu0 0
      %432 = vmatpush1.bf16.xpose.msra.mxu0 0
      %433 = vmatprep.subr.bf16.mxu0 0
      %434 = vmatpush1.bf16.xpose.msra.mxu0 0
      %435 = vmatprep.subr.bf16.mxu0 0
      %436 = vmatpush1.bf16.xpose.msra.mxu0 0
      %437 = vmatprep.subr.bf16.mxu0 0
      %438 = vmatpush1.bf16.xpose.msra.mxu0 0
      %439 = vmatprep.subr.bf16.mxu0 0
      %440 = vmatpush1.bf16.xpose.msra.mxu0 0
      %441 = vmatprep.subr.bf16.mxu0 0
      %442 = vmatpush1.bf16.xpose.msra.mxu0 0
      %443 = vmatprep.subr.bf16.mxu0 0
      %444 = vmatpush1.bf16.xpose.msra.mxu0 0
      %445 = vmatprep.subr.bf16.mxu0 0
      %446 = vmatpush1.bf16.xpose.msra.mxu0 0
      %447 = vmatprep.mubr.bf16.mxu0 0
      %448 = vmatmul.mubr.bf16.gmra.mrb[0].mxu0 %v410
      %v449 = vpop.f32.mrb[0].mxu0
      %v450 = vadd.f32 0.0, %v449
      %v451 = vpop.f32.mrb[0].mxu0
      %v452 = vpop.f32.mrb[0].mxu0
      %v453 = vpop.f32.mrb[0].mxu0
      %454 = vdwg.mxu0
      %v456 = vsel %vm316, %v299, 0
      %v459 = vsel %vm316, %v307, 0
      %461 = vmatprep.subr.bf16.mxu0 0
      %462 = vmatpush1.bf16.xpose.msra.mxu0 %v459
      %463 = vmatprep.subr.bf16.mxu0 0
      %464 = vmatpush1.bf16.xpose.msra.mxu0 0
      %465 = vmatprep.subr.bf16.mxu0 0
      %466 = vmatpush1.bf16.xpose.msra.mxu0 0
      %467 = vmatprep.subr.bf16.mxu0 0
      %468 = vmatpush1.bf16.xpose.msra.mxu0 0
      %469 = vmatprep.subr.bf16.mxu0 0
      %470 = vmatpush1.bf16.xpose.msra.mxu0 0
      %471 = vmatprep.subr.bf16.mxu0 0
      %472 = vmatpush1.bf16.xpose.msra.mxu0 0
      %473 = vmatprep.subr.bf16.mxu0 0
      %474 = vmatpush1.bf16.xpose.msra.mxu0 0
      %475 = vmatprep.subr.bf16.mxu0 0
      %476 = vmatpush1.bf16.xpose.msra.mxu0 0
      %477 = vmatprep.subr.bf16.mxu0 0
      %478 = vmatpush1.bf16.xpose.msra.mxu0 0
      %479 = vmatprep.subr.bf16.mxu0 0
      %480 = vmatpush1.bf16.xpose.msra.mxu0 0
      %481 = vmatprep.subr.bf16.mxu0 0
      %482 = vmatpush1.bf16.xpose.msra.mxu0 0
      %483 = vmatprep.subr.bf16.mxu0 0
      %484 = vmatpush1.bf16.xpose.msra.mxu0 0
      %485 = vmatprep.subr.bf16.mxu0 0
      %486 = vmatpush1.bf16.xpose.msra.mxu0 0
      %487 = vmatprep.subr.bf16.mxu0 0
      %488 = vmatpush1.bf16.xpose.msra.mxu0 0
      %489 = vmatprep.subr.bf16.mxu0 0
      %490 = vmatpush1.bf16.xpose.msra.mxu0 0
      %491 = vmatprep.subr.bf16.mxu0 0
      %492 = vmatpush1.bf16.xpose.msra.mxu0 0
      %493 = vmatprep.mubr.bf16.mxu0 0
      %494 = vmatmul.mubr.bf16.gmra.mrb[0].mxu0 %v456
      %v495 = vpop.f32.mrb[0].mxu0
      %v496 = vadd.f32 0.0, %v495
      %v497 = vpop.f32.mrb[0].mxu0
      %v498 = vpop.f32.mrb[0].mxu0
      %v499 = vpop.f32.mrb[0].mxu0
      %500 = vdwg.mxu0
      %v501 = vld [vmem:[#allocation2] sm:$0xff]
      %v502 = vld [vmem:[#allocation2 + $0x8] sm:$0xff]
      %v503 = vld [vmem:[#allocation2 + $0x10] sm:$0xff]
      %v504 = vld [vmem:[#allocation2 + $0x18] sm:$0xff]
      %v505 = vsel %vm316, %v358, -inf
      %506 = vmax.xlane.f32.xlu0 %v505
      %v507 = vpop.xlane.xlu0 %506
      %v508 = vsel %vm316, %v404, -inf
      %509 = vmax.xlane.f32.xlu0 %v508
      %v510 = vpop.xlane.xlu0 %509
      %v511 = vsel %vm316, %v450, -inf
      %512 = vmax.xlane.f32.xlu0 %v511
      %v513 = vpop.xlane.xlu0 %512
      %v514 = vsel %vm316, %v496, -inf
      %515 = vmax.xlane.f32.xlu0 %v514
      %v516 = vpop.xlane.xlu0 %515
      %v517 = vmax.f32 %v501, %v507
      %v518 = vmax.f32 %v502, %v510
      %v519 = vmax.f32 %v503, %v513
      %v520 = vmax.f32 %v504, %v516
      %v521 = vsub.f32 %v501, %v517
      %v522 = vsub.f32 %v502, %v518
      %v523 = vsub.f32 %v503, %v519
      %v524 = vsub.f32 %v504, %v520
      %v525 = vmul.f32 %v521, 1.442695
      %v526 = vpow.pop %v525
      %v527 = vmul.f32 %v522, 1.442695
      %v528 = vpow.pop %v527
      %v529 = vmul.f32 %v523, 1.442695
      %v530 = vpow.pop %v529
      %v531 = vmul.f32 %v524, 1.442695
      %v532 = vpow.pop %v531
      %534 = vset.pattern.permute.xlu0 0
      %535 = vperm.xlu0 %534, %v517
      %v536 = vpop.permute.xlu0 %535
      %539 = vset.pattern.permute.xlu0 0
      %540 = vperm.xlu0 %539, %v518
      %v541 = vpop.permute.xlu0 %540
      %544 = vset.pattern.permute.xlu0 0
      %545 = vperm.xlu0 %544, %v519
      %v546 = vpop.permute.xlu0 %545
      %549 = vset.pattern.permute.xlu0 0
      %550 = vperm.xlu0 %549, %v520
      %v551 = vpop.permute.xlu0 %550
      %v553 = vsub.f32 %v358, %v536
      %v554 = vsub.f32 %v404, %v541
      %v555 = vsub.f32 %v450, %v546
      %v556 = vsub.f32 %v496, %v551
      %v557 = vmul.f32 %v553, 1.442695
      %v558 = vpow.pop %v557
      %v559 = vmul.f32 %v554, 1.442695
      %v560 = vpow.pop %v559
      %v561 = vmul.f32 %v555, 1.442695
      %v562 = vpow.pop %v561
      %v563 = vmul.f32 %v556, 1.442695
      %v564 = vpow.pop %v563
      %v565 = vld [vmem:[#allocation3] sm:$0xff]
      %v566 = vld [vmem:[#allocation3 + $0x8] sm:$0xff]
      %v567 = vld [vmem:[#allocation3 + $0x10] sm:$0xff]
      %v568 = vld [vmem:[#allocation3 + $0x18] sm:$0xff]
      %v569 = vmul.f32 %v526, %v565
      %v570 = vmul.f32 %v528, %v566
      %v571 = vmul.f32 %v530, %v567
      %v572 = vmul.f32 %v532, %v568
      %v573 = vsel %vm316, %v558, 0.0
      %574 = vadd.xlane.f32.xlu0 %v573
      %v575 = vpop.xlane.xlu0 %574
      %v576 = vsel %vm316, %v560, 0.0
      %577 = vadd.xlane.f32.xlu0 %v576
      %v578 = vpop.xlane.xlu0 %577
      %v579 = vsel %vm316, %v562, 0.0
      %580 = vadd.xlane.f32.xlu0 %v579
      %v581 = vpop.xlane.xlu0 %580
      %v582 = vsel %vm316, %v564, 0.0
      %583 = vadd.xlane.f32.xlu0 %v582
      %v584 = vpop.xlane.xlu0 %583
      %v585 = vadd.f32 %v569, %v575
      %v586 = vadd.f32 %v570, %v578
      %v587 = vadd.f32 %v571, %v581
      %v588 = vadd.f32 %v572, %v584
      %vm589 = vcmask 7168
      %590 = vst.msk [vmem:[#allocation3] sm:$0xff] %vm589, %v585
      %591 = vst.msk [vmem:[#allocation3 + $0x8] sm:$0xff] %vm589, %v586
      %592 = vst.msk [vmem:[#allocation3 + $0x10] sm:$0xff] %vm589, %v587
      %593 = vst.msk [vmem:[#allocation3 + $0x18] sm:$0xff] %vm589, %v588
      %v594 = vld [vmem:[#allocation4] sm:$0xff]
      %v595 = vld [vmem:[#allocation4 + $0x8] sm:$0xff]
      %v596 = vld [vmem:[#allocation4 + $0x10] sm:$0xff]
      %v597 = vld [vmem:[#allocation4 + $0x18] sm:$0xff]
      %599 = vset.pattern.permute.xlu0 0
      %600 = vperm.xlu0 %599, %v526
      %v601 = vpop.permute.xlu0 %600
      %604 = vset.pattern.permute.xlu0 0
      %605 = vperm.xlu0 %604, %v528
      %v606 = vpop.permute.xlu0 %605
      %609 = vset.pattern.permute.xlu0 0
      %610 = vperm.xlu0 %609, %v530
      %v611 = vpop.permute.xlu0 %610
      %614 = vset.pattern.permute.xlu0 0
      %615 = vperm.xlu0 %614, %v532
      %v616 = vpop.permute.xlu0 %615
      %v618 = vmul.f32 %v601, %v594
      %v619 = vmul.f32 %v606, %v595
      %v620 = vmul.f32 %v611, %v596
      %v621 = vmul.f32 %v616, %v597
      %v622 = vpack.c.bf16 %v558, %v558
      %v623 = vpack.c.bf16 %v560, %v560
      %v624 = vpack.c.bf16 %v562, %v562
      %v625 = vpack.c.bf16 %v564, %v564
      %v627 = vsel %vm316, %v622, 0
      %vm629 = vcmask 1043456
      %v631 = vsel %vm629, %v312, 0
      %633 = vmatprep.subr.bf16.mxu0 0
      %634 = vmatpush1.bf16.msra.mxu0 %v631
      %635 = vmatprep.subr.bf16.mxu0 0
      %636 = vmatpush1.bf16.msra.mxu0 0
      %637 = vmatprep.subr.bf16.mxu0 0
      %638 = vmatpush1.bf16.msra.mxu0 0
      %639 = vmatprep.subr.bf16.mxu0 0
      %640 = vmatpush1.bf16.msra.mxu0 0
      %641 = vmatprep.subr.bf16.mxu0 0
      %642 = vmatpush1.bf16.msra.mxu0 0
      %643 = vmatprep.subr.bf16.mxu0 0
      %644 = vmatpush1.bf16.msra.mxu0 0
      %645 = vmatprep.subr.bf16.mxu0 0
      %646 = vmatpush1.bf16.msra.mxu0 0
      %647 = vmatprep.subr.bf16.mxu0 0
      %648 = vmatpush1.bf16.msra.mxu0 0
      %649 = vmatprep.subr.bf16.mxu0 0
      %650 = vmatpush1.bf16.msra.mxu0 0
      %651 = vmatprep.subr.bf16.mxu0 0
      %652 = vmatpush1.bf16.msra.mxu0 0
      %653 = vmatprep.subr.bf16.mxu0 0
      %654 = vmatpush1.bf16.msra.mxu0 0
      %655 = vmatprep.subr.bf16.mxu0 0
      %656 = vmatpush1.bf16.msra.mxu0 0
      %657 = vmatprep.subr.bf16.mxu0 0
      %658 = vmatpush1.bf16.msra.mxu0 0
      %659 = vmatprep.subr.bf16.mxu0 0
      %660 = vmatpush1.bf16.msra.mxu0 0
      %661 = vmatprep.subr.bf16.mxu0 0
      %662 = vmatpush1.bf16.msra.mxu0 0
      %663 = vmatprep.subr.bf16.mxu0 0
      %664 = vmatpush1.bf16.msra.mxu0 0
      %665 = vmatprep.mubr.bf16.mxu0 0
      %666 = vmatmul.mubr.bf16.gmra.mrb[0].mxu0 %v627
      %v667 = vpop.f32.mrb[0].mxu0
      %v668 = vadd.f32 0.0, %v667
      %v669 = vpop.f32.mrb[0].mxu0
      %v670 = vpop.f32.mrb[0].mxu0
      %v671 = vpop.f32.mrb[0].mxu0
      %672 = vdwg.mxu0
      %v674 = vsel %vm316, %v623, 0
      %v677 = vsel %vm629, %v313, 0
      %679 = vmatprep.subr.bf16.mxu0 0
      %680 = vmatpush1.bf16.msra.mxu0 %v677
      %681 = vmatprep.subr.bf16.mxu0 0
      %682 = vmatpush1.bf16.msra.mxu0 0
      %683 = vmatprep.subr.bf16.mxu0 0
      %684 = vmatpush1.bf16.msra.mxu0 0
      %685 = vmatprep.subr.bf16.mxu0 0
      %686 = vmatpush1.bf16.msra.mxu0 0
      %687 = vmatprep.subr.bf16.mxu0 0
      %688 = vmatpush1.bf16.msra.mxu0 0
      %689 = vmatprep.subr.bf16.mxu0 0
      %690 = vmatpush1.bf16.msra.mxu0 0
      %691 = vmatprep.subr.bf16.mxu0 0
      %692 = vmatpush1.bf16.msra.mxu0 0
      %693 = vmatprep.subr.bf16.mxu0 0
      %694 = vmatpush1.bf16.msra.mxu0 0
      %695 = vmatprep.subr.bf16.mxu0 0
      %696 = vmatpush1.bf16.msra.mxu0 0
      %697 = vmatprep.subr.bf16.mxu0 0
      %698 = vmatpush1.bf16.msra.mxu0 0
      %699 = vmatprep.subr.bf16.mxu0 0
      %700 = vmatpush1.bf16.msra.mxu0 0
      %701 = vmatprep.subr.bf16.mxu0 0
      %702 = vmatpush1.bf16.msra.mxu0 0
      %703 = vmatprep.subr.bf16.mxu0 0
      %704 = vmatpush1.bf16.msra.mxu0 0
      %705 = vmatprep.subr.bf16.mxu0 0
      %706 = vmatpush1.bf16.msra.mxu0 0
      %707 = vmatprep.subr.bf16.mxu0 0
      %708 = vmatpush1.bf16.msra.mxu0 0
      %709 = vmatprep.subr.bf16.mxu0 0
      %710 = vmatpush1.bf16.msra.mxu0 0
      %711 = vmatprep.mubr.bf16.mxu0 0
      %712 = vmatmul.mubr.bf16.gmra.mrb[0].mxu0 %v674
      %v713 = vpop.f32.mrb[0].mxu0
      %v714 = vadd.f32 0.0, %v713
      %v715 = vpop.f32.mrb[0].mxu0
      %v716 = vpop.f32.mrb[0].mxu0
      %v717 = vpop.f32.mrb[0].mxu0
      %718 = vdwg.mxu0
      %v720 = vsel %vm316, %v624, 0
      %v723 = vsel %vm629, %v314, 0
      %725 = vmatprep.subr.bf16.mxu0 0
      %726 = vmatpush1.bf16.msra.mxu0 %v723
      %727 = vmatprep.subr.bf16.mxu0 0
      %728 = vmatpush1.bf16.msra.mxu0 0
      %729 = vmatprep.subr.bf16.mxu0 0
      %730 = vmatpush1.bf16.msra.mxu0 0
      %731 = vmatprep.subr.bf16.mxu0 0
      %732 = vmatpush1.bf16.msra.mxu0 0
      %733 = vmatprep.subr.bf16.mxu0 0
      %734 = vmatpush1.bf16.msra.mxu0 0
      %735 = vmatprep.subr.bf16.mxu0 0
      %736 = vmatpush1.bf16.msra.mxu0 0
      %737 = vmatprep.subr.bf16.mxu0 0
      %738 = vmatpush1.bf16.msra.mxu0 0
      %739 = vmatprep.subr.bf16.mxu0 0
      %740 = vmatpush1.bf16.msra.mxu0 0
      %741 = vmatprep.subr.bf16.mxu0 0
      %742 = vmatpush1.bf16.msra.mxu0 0
      %743 = vmatprep.subr.bf16.mxu0 0
      %744 = vmatpush1.bf16.msra.mxu0 0
      %745 = vmatprep.subr.bf16.mxu0 0
      %746 = vmatpush1.bf16.msra.mxu0 0
      %747 = vmatprep.subr.bf16.mxu0 0
      %748 = vmatpush1.bf16.msra.mxu0 0
      %749 = vmatprep.subr.bf16.mxu0 0
      %750 = vmatpush1.bf16.msra.mxu0 0
      %751 = vmatprep.subr.bf16.mxu0 0
      %752 = vmatpush1.bf16.msra.mxu0 0
      %753 = vmatprep.subr.bf16.mxu0 0
      %754 = vmatpush1.bf16.msra.mxu0 0
      %755 = vmatprep.subr.bf16.mxu0 0
      %756 = vmatpush1.bf16.msra.mxu0 0
      %757 = vmatprep.mubr.bf16.mxu0 0
      %758 = vmatmul.mubr.bf16.gmra.mrb[0].mxu0 %v720
      %v759 = vpop.f32.mrb[0].mxu0
      %v760 = vadd.f32 0.0, %v759
      %v761 = vpop.f32.mrb[0].mxu0
      %v762 = vpop.f32.mrb[0].mxu0
      %v763 = vpop.f32.mrb[0].mxu0
      %764 = vdwg.mxu0
      %v766 = vsel %vm316, %v625, 0
      %v769 = vsel %vm629, %v315, 0
      %771 = vmatprep.subr.bf16.mxu0 0
      %772 = vmatpush1.bf16.msra.mxu0 %v769
      %773 = vmatprep.subr.bf16.mxu0 0
      %774 = vmatpush1.bf16.msra.mxu0 0
      %775 = vmatprep.subr.bf16.mxu0 0
      %776 = vmatpush1.bf16.msra.mxu0 0
      %777 = vmatprep.subr.bf16.mxu0 0
      %778 = vmatpush1.bf16.msra.mxu0 0
      %779 = vmatprep.subr.bf16.mxu0 0
      %780 = vmatpush1.bf16.msra.mxu0 0
      %781 = vmatprep.subr.bf16.mxu0 0
      %782 = vmatpush1.bf16.msra.mxu0 0
      %783 = vmatprep.subr.bf16.mxu0 0
      %784 = vmatpush1.bf16.msra.mxu0 0
      %785 = vmatprep.subr.bf16.mxu0 0
      %786 = vmatpush1.bf16.msra.mxu0 0
      %787 = vmatprep.subr.bf16.mxu0 0
      %788 = vmatpush1.bf16.msra.mxu0 0
      %789 = vmatprep.subr.bf16.mxu0 0
      %790 = vmatpush1.bf16.msra.mxu0 0
      %791 = vmatprep.subr.bf16.mxu0 0
      %792 = vmatpush1.bf16.msra.mxu0 0
      %793 = vmatprep.subr.bf16.mxu0 0
      %794 = vmatpush1.bf16.msra.mxu0 0
      %795 = vmatprep.subr.bf16.mxu0 0
      %796 = vmatpush1.bf16.msra.mxu0 0
      %797 = vmatprep.subr.bf16.mxu0 0
      %798 = vmatpush1.bf16.msra.mxu0 0
      %799 = vmatprep.subr.bf16.mxu0 0
      %800 = vmatpush1.bf16.msra.mxu0 0
      %801 = vmatprep.subr.bf16.mxu0 0
      %802 = vmatpush1.bf16.msra.mxu0 0
      %803 = vmatprep.mubr.bf16.mxu0 0
      %804 = vmatmul.mubr.bf16.gmra.mrb[0].mxu0 %v766
      %v805 = vpop.f32.mrb[0].mxu0
      %v806 = vadd.f32 0.0, %v805
      %v807 = vpop.f32.mrb[0].mxu0
      %v808 = vpop.f32.mrb[0].mxu0
      %v809 = vpop.f32.mrb[0].mxu0
      %810 = vdwg.mxu0
      %v811 = vadd.f32 %v618, %v668
      %v812 = vadd.f32 %v619, %v714
      %v813 = vadd.f32 %v620, %v760
      %v814 = vadd.f32 %v621, %v806
      %815 = vst.msk [vmem:[#allocation4] sm:$0xff] %vm316, %v811
      %816 = vst.msk [vmem:[#allocation4 + $0x8] sm:$0xff] %vm316, %v812
      %817 = vst.msk [vmem:[#allocation4 + $0x10] sm:$0xff] %vm316, %v813
      %818 = vst.msk [vmem:[#allocation4 + $0x18] sm:$0xff] %vm316, %v814
      %819 = vst.msk [vmem:[#allocation2] sm:$0xff] %vm589, %v517
      %820 = vst.msk [vmem:[#allocation2 + $0x8] sm:$0xff] %vm589, %v518
      %821 = vst.msk [vmem:[#allocation2 + $0x10] sm:$0xff] %vm589, %v519
      %822 = vst.msk [vmem:[#allocation2 + $0x18] sm:$0xff] %vm589, %v520
      // Predicated region
      $region37: #{transformer_decoder_forward.25} parent=31 // pred_check
        %p823 = pneg %p270
      $region38: #{transformer_decoder_forward.25} parent=31 // pred_check_branch
        %825 = sbr.rel (%p823) target = $region40
      $region39: #{transformer_decoder_forward.25} parent=31 // pred_region
        %v826 = vld [vmem:[#allocation4] sm:$0xff]
        %v827 = vld [vmem:[#allocation4 + $0x8] sm:$0xff]
        %v828 = vld [vmem:[#allocation4 + $0x10] sm:$0xff]
        %v829 = vld [vmem:[#allocation4 + $0x18] sm:$0xff]
        %v830 = vld [vmem:[#allocation3] sm:$0xff]
        %v831 = vld [vmem:[#allocation3 + $0x8] sm:$0xff]
        %v832 = vld [vmem:[#allocation3 + $0x10] sm:$0xff]
        %v833 = vld [vmem:[#allocation3 + $0x18] sm:$0xff]
        %v834 = vrcp.pop %v830
        %v835 = vrcp.pop %v831
        %v836 = vrcp.pop %v832
        %v837 = vrcp.pop %v833
        %839 = vset.pattern.permute.xlu0 0
        %840 = vperm.xlu0 %839, %v834
        %v841 = vpop.permute.xlu0 %840
        %844 = vset.pattern.permute.xlu0 0
        %845 = vperm.xlu0 %844, %v835
        %v846 = vpop.permute.xlu0 %845
        %849 = vset.pattern.permute.xlu0 0
        %850 = vperm.xlu0 %849, %v836
        %v851 = vpop.permute.xlu0 %850
        %854 = vset.pattern.permute.xlu0 0
        %855 = vperm.xlu0 %854, %v837
        %v856 = vpop.permute.xlu0 %855
        %v858 = vmul.f32 %v826, %v841
        %v859 = vmul.f32 %v827, %v846
        %v860 = vmul.f32 %v828, %v851
        %v861 = vmul.f32 %v829, %v856
        %863 = vrot.lane.b32.xlu0 %v859, 8
        %v864 = vpop.permute.xlu0 %863
        %867 = vrot.lane.b32.xlu0 %v860, 16
        %v868 = vpop.permute.xlu0 %867
        %871 = vrot.lane.b32.xlu0 %v861, 24
        %v872 = vpop.permute.xlu0 %871
        %v874 = vsel %vm316, %v858, %v864
        %vm875 = vcmask 130048
        %v876 = vsel %vm875, %v874, %v868
        %vm877 = vcmask 195584
        %v878 = vsel %vm877, %v876, %v872
        %vm879 = vcmask 261120
        %880 = vst.msk [vmem:[%s268] sm:$0xff] %vm879, %v878
      $region40: #{transformer_decoder_forward.25} parent=31 // pred_fallthru
        _
      %p881 = scmp.lt.s32.totalorder %s19, 1
      %s882 = scalar_select %p881, %s19, 1
      %p883 = scmp.lt.s32.totalorder %s20, 0
      %s884 = scalar_select %p883, %s20, 0
      %s885 = sadd.s32 %s884, %s882
      %s886 = smul.addr %s885, 8
      %s887 = scalar_lea.vmem %s3, %s886
      // Predicated region
      $region41: #{transformer_decoder_forward.25} parent=31 // pred_check
        %p888 = pneg %p137
      $region42: #{transformer_decoder_forward.25} parent=31 // pred_check_branch
        %890 = sbr.rel (%p888) target = $region44
      $region43: #{transformer_decoder_forward.25} parent=31 // pred_region
        _
      $region44: #{transformer_decoder_forward.25} parent=31 // pred_fallthru
        _
    $region32: #{transformer_decoder_forward.25} parent=5 // pred_fallthru
      _
    %p891 = scmp.le.s32.totalorder 2, %s9
    // Predicated region
    $region45: #{transformer_decoder_forward.25} parent=5 // pred_check
      %p892 = pneg %p891
    $region46: #{transformer_decoder_forward.25} parent=5 // pred_check_branch
      %894 = sbr.rel (%p892) target = $region48
    $region47: #{transformer_decoder_forward.25} parent=5 // pred_region
      %s895 = ssub.s32 %s9, 2
      // Predicated region
      $region49: #{transformer_decoder_forward.25} parent=47 // pred_check
        %p896 = pneg %p143
      $region50: #{transformer_decoder_forward.25} parent=47 // pred_check_branch
        %898 = sbr.rel (%p896) target = $region52
      $region51: #{transformer_decoder_forward.25} parent=47 // pred_region
        %p899 = scmp.lt.s32.totalorder %s22, 1
        %s900 = scalar_select %p899, %s22, 1
        %p901 = scmp.lt.s32.totalorder %s23, 0
        %s902 = scalar_select %p901, %s23, 0
        %s903 = sadd.s32 %s902, %s900
        %s904 = smul.addr %s903, 8
        %s905 = scalar_lea.vmem %s3, %s904
      $region52: #{transformer_decoder_forward.25} parent=47 // pred_fallthru
        _
    $region48: #{transformer_decoder_forward.25} parent=5 // pred_fallthru
      _
  $region6: #{transformer_decoder_forward.25} parent=0 // loop_footer
    %s13 = sadd.s32 1, %s9
  $region7: #{transformer_decoder_forward.25} parent=0 // loop_footer_branch
    %8 = sbr.rel target = $region3
  $region8: #{transformer_decoder_forward.25} parent=0 // loop_exit
    _

// kernel: transformer_decoder_forward.24
$region0: #{transformer_decoder_forward.24}
  #allocation0 [shape = 'u32[]', space=smem, size = 0x4, offset = 0x4, fixed_abs, tag = 'smem constant byte address 0x4 - core index']
  #allocation1 [shape = 'u32[144,128]{1,0:T(1,128)}', space=vmem, size = 0x12000, scoped, tag = 'internal scratch']
  #allocation2 [shape = 'f32[16,32]{1,0:T(8,128)}', space=vmem, size = 0x2000, scoped, tag = 'scratch operand']
  %s0 = inlined_call_operand.vmem [shape: f32[16,32], index: 0, kind: input, shape index: {}]
  %s1 = inlined_call_operand.vmem [shape: f32[32,32], index: 1, kind: input, shape index: {}]
  %s2 = inlined_call_operand.vmem [shape: f32[1,32], index: 2, kind: input, shape index: {}]
  %s3 = inlined_call_operand.vmem [shape: f32[16,32], index: 3, kind: output, shape index: {}]
  %s4 = sld [smem:[#allocation0]]
  $region30: #{transformer_decoder_forward.24} parent=0
    _
  %s6 = ssub.s32 1, %s4
  %s7 = scalar_select 0, %s6, %s4
  // Predicated region
  $region2: #{transformer_decoder_forward.24} parent=0 // pred_check
    _
  $region3: #{transformer_decoder_forward.24} parent=0 // pred_check_branch
    %9 = sbr.rel (0) target = $region5
  $region4: #{transformer_decoder_forward.24} parent=0 // pred_region
    _
  $region5: #{transformer_decoder_forward.24} parent=0 // pred_fallthru
    _
  // Predicated region
  $region6: #{transformer_decoder_forward.24} parent=0 // pred_check
    _
  $region7: #{transformer_decoder_forward.24} parent=0 // pred_check_branch
    %11 = sbr.rel (0) target = $region9
  $region8: #{transformer_decoder_forward.24} parent=0 // pred_region
    _
  $region9: #{transformer_decoder_forward.24} parent=0 // pred_fallthru
    _
  // Predicated region
  $region10: #{transformer_decoder_forward.24} parent=0 // pred_check
    _
  $region11: #{transformer_decoder_forward.24} parent=0 // pred_check_branch
    %13 = sbr.rel (0) target = $region13
  $region12: #{transformer_decoder_forward.24} parent=0 // pred_region
    _
  $region13: #{transformer_decoder_forward.24} parent=0 // pred_fallthru
    _
  %p15 = scmp.eq.s32.totalorder 0, 0
  // Predicated region
  $region14: #{transformer_decoder_forward.24} parent=0 // pred_check
    %p16 = pneg %p15
  $region15: #{transformer_decoder_forward.24} parent=0 // pred_check_branch
    %18 = sbr.rel (%p16) target = $region17
  $region16: #{transformer_decoder_forward.24} parent=0 // pred_region
    %vm19 = vcmask 261120
    %20 = vst.msk [vmem:[#allocation2] sm:$0xff] %vm19, 0.0
    %21 = vst.msk [vmem:[#allocation2 + $0x8] sm:$0xff] %vm19, 0.0
  $region17: #{transformer_decoder_forward.24} parent=0 // pred_fallthru
    _
  %v22 = vld [vmem:[%s0] sm:$0xff]
  %v23 = vld [vmem:[%s0 + $0x8] sm:$0xff]
  %v24 = vld [vmem:[#allocation2] sm:$0xff]
  %v25 = vld [vmem:[#allocation2 + $0x8] sm:$0xff]
  %v26 = vpack.c.bf16 %v23, %v22
  %v27 = vld [vmem:[%s1] sm:$0xff]
  %v28 = vld [vmem:[%s1 + $0x8] sm:$0xff]
  %v29 = vld [vmem:[%s1 + $0x10] sm:$0xff]
  %v30 = vld [vmem:[%s1 + $0x18] sm:$0xff]
  %v31 = vpack.c.bf16 %v28, %v27
  %v32 = vpack.c.bf16 %v30, %v29
  %vm33 = vcmask 261120
  %v35 = vsel %vm33, %v26, 0
  %37 = vmatprep.subr.bf16.mxu0 0
  %38 = vmatpush1.bf16.msra.mxu0 %v31
  %39 = vmatprep.subr.bf16.mxu0 0
  %40 = vmatpush1.bf16.msra.mxu0 %v32
  %41 = vmatprep.subr.bf16.mxu0 0
  %42 = vmatpush1.bf16.msra.mxu0 0
  %43 = vmatprep.subr.bf16.mxu0 0
  %44 = vmatpush1.bf16.msra.mxu0 0
  %45 = vmatprep.subr.bf16.mxu0 0
  %46 = vmatpush1.bf16.msra.mxu0 0
  %47 = vmatprep.subr.bf16.mxu0 0
  %48 = vmatpush1.bf16.msra.mxu0 0
  %49 = vmatprep.subr.bf16.mxu0 0
  %50 = vmatpush1.bf16.msra.mxu0 0
  %51 = vmatprep.subr.bf16.mxu0 0
  %52 = vmatpush1.bf16.msra.mxu0 0
  %53 = vmatprep.subr.bf16.mxu0 0
  %54 = vmatpush1.bf16.msra.mxu0 0
  %55 = vmatprep.subr.bf16.mxu0 0
  %56 = vmatpush1.bf16.msra.mxu0 0
  %57 = vmatprep.subr.bf16.mxu0 0
  %58 = vmatpush1.bf16.msra.mxu0 0
  %59 = vmatprep.subr.bf16.mxu0 0
  %60 = vmatpush1.bf16.msra.mxu0 0
  %61 = vmatprep.subr.bf16.mxu0 0
  %62 = vmatpush1.bf16.msra.mxu0 0
  %63 = vmatprep.subr.bf16.mxu0 0
  %64 = vmatpush1.bf16.msra.mxu0 0
  %65 = vmatprep.subr.bf16.mxu0 0
  %66 = vmatpush1.bf16.msra.mxu0 0
  %67 = vmatprep.subr.bf16.mxu0 0
  %68 = vmatpush1.bf16.msra.mxu0 0
  %69 = vmatprep.mubr.bf16.mxu0 0
  %70 = vmatmul.mubr.bf16.gmra.mrb[0].mxu0 %v35
  %v71 = vpop.f32.mrb[0].mxu0
  %v72 = vadd.f32 0.0, %v71
  %v73 = vpop.f32.mrb[0].mxu0
  %v74 = vpop.f32.mrb[0].mxu0
  %v75 = vadd.f32 0.0, %v74
  %v76 = vpop.f32.mrb[0].mxu0
  %77 = vdwg.mxu0
  %v78 = vadd.f32 %v24, %v72
  %v79 = vadd.f32 %v25, %v75
  %80 = vst.msk [vmem:[#allocation2] sm:$0xff] %vm33, %v78
  %81 = vst.msk [vmem:[#allocation2 + $0x8] sm:$0xff] %vm33, %v79
  // Predicated region
  $region18: #{transformer_decoder_forward.24} parent=0 // pred_check
    %p82 = pneg %p15
  $region19: #{transformer_decoder_forward.24} parent=0 // pred_check_branch
    %84 = sbr.rel (%p82) target = $region21
  $region20: #{transformer_decoder_forward.24} parent=0 // pred_region
    %v85 = vld [vmem:[#allocation2] sm:$0xff]
    %v86 = vld [vmem:[#allocation2 + $0x8] sm:$0xff]
    %v87 = vld [vmem:[%s2] sm:$0x1]
    %v89 = vlaneseq
    %v90 = vshrl.u32 %v89, 7
    %v91 = vsub.s32 0, %v90
    %v92 = vrot.slane %v87, %v91
    %v94 = vadd.f32 %v85, %v92
    %v95 = vadd.f32 %v86, %v92
    %96 = vst.msk [vmem:[%s3] sm:$0xff] %vm33, %v94
    %97 = vst.msk [vmem:[%s3 + $0x8] sm:$0xff] %vm33, %v95
  $region21: #{transformer_decoder_forward.24} parent=0 // pred_fallthru
    _
  // Predicated region
  $region22: #{transformer_decoder_forward.24} parent=0 // pred_check
    _
  $region23: #{transformer_decoder_forward.24} parent=0 // pred_check_branch
    %99 = sbr.rel (0) target = $region25
  $region24: #{transformer_decoder_forward.24} parent=0 // pred_region
    _
  $region25: #{transformer_decoder_forward.24} parent=0 // pred_fallthru
    _
  // Predicated region
  $region26: #{transformer_decoder_forward.24} parent=0 // pred_check
    _
  $region27: #{transformer_decoder_forward.24} parent=0 // pred_check_branch
    %101 = sbr.rel (0) target = $region29
  $region28: #{transformer_decoder_forward.24} parent=0 // pred_region
    _
  $region29: #{transformer_decoder_forward.24} parent=0 // pred_fallthru
    _

// kernel: transformer_decoder_forward.26
$region0: #{transformer_decoder_forward.26}
  #allocation0 [shape = 'u32[]', space=smem, size = 0x4, offset = 0x4, fixed_abs, tag = 'smem constant byte address 0x4 - core index']
  #allocation1 [shape = 'u32[144,128]{1,0:T(1,128)}', space=vmem, size = 0x12000, scoped, tag = 'internal scratch']
  #allocation2 [shape = 'f32[16,32]{1,0:T(8,128)}', space=vmem, size = 0x2000, scoped, tag = 'scratch operand']
  %s0 = inlined_call_operand.vmem [shape: f32[16,32], index: 0, kind: input, shape index: {}]
  %s1 = inlined_call_operand.vmem [shape: f32[32,32], index: 1, kind: input, shape index: {}]
  %s2 = inlined_call_operand.vmem [shape: f32[1,32], index: 2, kind: input, shape index: {}]
  %s3 = inlined_call_operand.vmem [shape: f32[16,32], index: 3, kind: input, shape index: {}]
  %s4 = inlined_call_operand.vmem [shape: f32[1,32], index: 4, kind: input, shape index: {}]
  %s5 = inlined_call_operand.vmem [shape: f32[1,32], index: 5, kind: input, shape index: {}]
  %s6 = inlined_call_operand.vmem [shape: f32[16,32], index: 6, kind: output, shape index: {}]
  %s7 = sld [smem:[#allocation0]]
  $region42: #{transformer_decoder_forward.26} parent=0
    _
  %s9 = ssub.s32 1, %s7
  %s10 = scalar_select 0, %s9, %s7
  // Predicated region
  $region2: #{transformer_decoder_forward.26} parent=0 // pred_check
    _
  $region3: #{transformer_decoder_forward.26} parent=0 // pred_check_branch
    %12 = sbr.rel (0) target = $region5
  $region4: #{transformer_decoder_forward.26} parent=0 // pred_region
    _
  $region5: #{transformer_decoder_forward.26} parent=0 // pred_fallthru
    _
  // Predicated region
  $region6: #{transformer_decoder_forward.26} parent=0 // pred_check
    _
  $region7: #{transformer_decoder_forward.26} parent=0 // pred_check_branch
    %14 = sbr.rel (0) target = $region9
  $region8: #{transformer_decoder_forward.26} parent=0 // pred_region
    _
  $region9: #{transformer_decoder_forward.26} parent=0 // pred_fallthru
    _
  // Predicated region
  $region10: #{transformer_decoder_forward.26} parent=0 // pred_check
    _
  $region11: #{transformer_decoder_forward.26} parent=0 // pred_check_branch
    %16 = sbr.rel (0) target = $region13
  $region12: #{transformer_decoder_forward.26} parent=0 // pred_region
    _
  $region13: #{transformer_decoder_forward.26} parent=0 // pred_fallthru
    _
  // Predicated region
  $region14: #{transformer_decoder_forward.26} parent=0 // pred_check
    _
  $region15: #{transformer_decoder_forward.26} parent=0 // pred_check_branch
    %18 = sbr.rel (0) target = $region17
  $region16: #{transformer_decoder_forward.26} parent=0 // pred_region
    _
  $region17: #{transformer_decoder_forward.26} parent=0 // pred_fallthru
    _
  // Predicated region
  $region18: #{transformer_decoder_forward.26} parent=0 // pred_check
    _
  $region19: #{transformer_decoder_forward.26} parent=0 // pred_check_branch
    %20 = sbr.rel (0) target = $region21
  $region20: #{transformer_decoder_forward.26} parent=0 // pred_region
    _
  $region21: #{transformer_decoder_forward.26} parent=0 // pred_fallthru
    _
  // Predicated region
  $region22: #{transformer_decoder_forward.26} parent=0 // pred_check
    _
  $region23: #{transformer_decoder_forward.26} parent=0 // pred_check_branch
    %22 = sbr.rel (0) target = $region25
  $region24: #{transformer_decoder_forward.26} parent=0 // pred_region
    _
  $region25: #{transformer_decoder_forward.26} parent=0 // pred_fallthru
    _
  %p24 = scmp.eq.s32.totalorder 0, 0
  // Predicated region
  $region26: #{transformer_decoder_forward.26} parent=0 // pred_check
    %p25 = pneg %p24
  $region27: #{transformer_decoder_forward.26} parent=0 // pred_check_branch
    %27 = sbr.rel (%p25) target = $region29
  $region28: #{transformer_decoder_forward.26} parent=0 // pred_region
    %vm28 = vcmask 261120
    %29 = vst.msk [vmem:[#allocation2] sm:$0xff] %vm28, 0.0
    %30 = vst.msk [vmem:[#allocation2 + $0x8] sm:$0xff] %vm28, 0.0
  $region29: #{transformer_decoder_forward.26} parent=0 // pred_fallthru
    _
  %v31 = vld [vmem:[%s0] sm:$0xff]
  %v32 = vld [vmem:[%s0 + $0x8] sm:$0xff]
  %v33 = vld [vmem:[#allocation2] sm:$0xff]
  %v34 = vld [vmem:[#allocation2 + $0x8] sm:$0xff]
  %v35 = vpack.c.bf16 %v32, %v31
  %v36 = vld [vmem:[%s1] sm:$0xff]
  %v37 = vld [vmem:[%s1 + $0x8] sm:$0xff]
  %v38 = vld [vmem:[%s1 + $0x10] sm:$0xff]
  %v39 = vld [vmem:[%s1 + $0x18] sm:$0xff]
  %v40 = vpack.c.bf16 %v37, %v36
  %v41 = vpack.c.bf16 %v39, %v38
  %vm42 = vcmask 261120
  %v44 = vsel %vm42, %v35, 0
  %46 = vmatprep.subr.bf16.mxu0 0
  %47 = vmatpush1.bf16.msra.mxu0 %v40
  %48 = vmatprep.subr.bf16.mxu0 0
  %49 = vmatpush1.bf16.msra.mxu0 %v41
  %50 = vmatprep.subr.bf16.mxu0 0
  %51 = vmatpush1.bf16.msra.mxu0 0
  %52 = vmatprep.subr.bf16.mxu0 0
  %53 = vmatpush1.bf16.msra.mxu0 0
  %54 = vmatprep.subr.bf16.mxu0 0
  %55 = vmatpush1.bf16.msra.mxu0 0
  %56 = vmatprep.subr.bf16.mxu0 0
  %57 = vmatpush1.bf16.msra.mxu0 0
  %58 = vmatprep.subr.bf16.mxu0 0
  %59 = vmatpush1.bf16.msra.mxu0 0
  %60 = vmatprep.subr.bf16.mxu0 0
  %61 = vmatpush1.bf16.msra.mxu0 0
  %62 = vmatprep.subr.bf16.mxu0 0
  %63 = vmatpush1.bf16.msra.mxu0 0
  %64 = vmatprep.subr.bf16.mxu0 0
  %65 = vmatpush1.bf16.msra.mxu0 0
  %66 = vmatprep.subr.bf16.mxu0 0
  %67 = vmatpush1.bf16.msra.mxu0 0
  %68 = vmatprep.subr.bf16.mxu0 0
  %69 = vmatpush1.bf16.msra.mxu0 0
  %70 = vmatprep.subr.bf16.mxu0 0
  %71 = vmatpush1.bf16.msra.mxu0 0
  %72 = vmatprep.subr.bf16.mxu0 0
  %73 = vmatpush1.bf16.msra.mxu0 0
  %74 = vmatprep.subr.bf16.mxu0 0
  %75 = vmatpush1.bf16.msra.mxu0 0
  %76 = vmatprep.subr.bf16.mxu0 0
  %77 = vmatpush1.bf16.msra.mxu0 0
  %78 = vmatprep.mubr.bf16.mxu0 0
  %79 = vmatmul.mubr.bf16.gmra.mrb[0].mxu0 %v44
  %v80 = vpop.f32.mrb[0].mxu0
  %v81 = vadd.f32 0.0, %v80
  %v82 = vpop.f32.mrb[0].mxu0
  %v83 = vpop.f32.mrb[0].mxu0
  %v84 = vadd.f32 0.0, %v83
  %v85 = vpop.f32.mrb[0].mxu0
  %86 = vdwg.mxu0
  %v87 = vadd.f32 %v33, %v81
  %v88 = vadd.f32 %v34, %v84
  %89 = vst.msk [vmem:[#allocation2] sm:$0xff] %vm42, %v87
  %90 = vst.msk [vmem:[#allocation2 + $0x8] sm:$0xff] %vm42, %v88
  // Predicated region
  $region30: #{transformer_decoder_forward.26} parent=0 // pred_check
    %p91 = pneg %p24
  $region31: #{transformer_decoder_forward.26} parent=0 // pred_check_branch
    %93 = sbr.rel (%p91) target = $region33
  $region32: #{transformer_decoder_forward.26} parent=0 // pred_region
    %v94 = vld [vmem:[#allocation2] sm:$0xff]
    %v95 = vld [vmem:[#allocation2 + $0x8] sm:$0xff]
    %v96 = vld [vmem:[%s2] sm:$0x1]
    %v98 = vlaneseq
    %v99 = vshrl.u32 %v98, 7
    %v100 = vsub.s32 0, %v99
    %v101 = vrot.slane %v96, %v100
    %v103 = vadd.f32 %v94, %v101
    %v104 = vadd.f32 %v95, %v101
    %v105 = vld [vmem:[%s3] sm:$0xff]
    %v106 = vld [vmem:[%s3 + $0x8] sm:$0xff]
    %v107 = vadd.f32 %v103, %v105
    %v108 = vadd.f32 %v104, %v106
    %v109 = vsel %vm42, %v107, 0.0
    %110 = vadd.xlane.f32.xlu0 %v109
    %v111 = vpop.xlane.xlu0 %110
    %v112 = vsel %vm42, %v108, 0.0
    %113 = vadd.xlane.f32.xlu0 %v112
    %v114 = vpop.xlane.xlu0 %113
    %v115 = vrcp.pop 32.0
    %v116 = vmul.f32 %v111, %v115
    %v117 = vmul.f32 %v114, %v115
    %v118 = vsub.f32 %v107, %v116
    %v119 = vsub.f32 %v108, %v117
    %v120 = vmul.f32 %v118, %v118
    %v121 = vmul.f32 %v119, %v119
    %v122 = vsel %vm42, %v120, 0.0
    %123 = vadd.xlane.f32.xlu0 %v122
    %v124 = vpop.xlane.xlu0 %123
    %v125 = vsel %vm42, %v121, 0.0
    %126 = vadd.xlane.f32.xlu0 %v125
    %v127 = vpop.xlane.xlu0 %126
    %v128 = vmul.f32 %v124, %v115
    %v129 = vmul.f32 %v127, %v115
    %v130 = vadd.f32 %v128, 1e-05
    %v131 = vadd.f32 %v129, 1e-05
    %v132 = vrsqrt.pop %v130
    %v133 = vrsqrt.pop %v131
    %v134 = vmul.f32 %v118, %v132
    %v135 = vmul.f32 %v119, %v133
    %v136 = vld [vmem:[%s4] sm:$0x1]
    %v138 = vlaneseq
    %v139 = vshrl.u32 %v138, 7
    %v140 = vsub.s32 0, %v139
    %v141 = vrot.slane %v136, %v140
    %v143 = vmul.f32 %v134, %v141
    %v144 = vmul.f32 %v135, %v141
    %v145 = vld [vmem:[%s5] sm:$0x1]
    %v147 = vlaneseq
    %v148 = vshrl.u32 %v147, 7
    %v149 = vsub.s32 0, %v148
    %v150 = vrot.slane %v145, %v149
    %v152 = vadd.f32 %v143, %v150
    %v153 = vadd.f32 %v144, %v150
    %154 = vst.msk [vmem:[%s6] sm:$0xff] %vm42, %v152
    %155 = vst.msk [vmem:[%s6 + $0x8] sm:$0xff] %vm42, %v153
  $region33: #{transformer_decoder_forward.26} parent=0 // pred_fallthru
    _
  // Predicated region
  $region34: #{transformer_decoder_forward.26} parent=0 // pred_check
    _
  $region35: #{transformer_decoder_forward.26} parent=0 // pred_check_branch
    %157 = sbr.rel (0) target = $region37
  $region36: #{transformer_decoder_forward.26} parent=0 // pred_region
    _
  $region37: #{transformer_decoder_forward.26} parent=0 // pred_fallthru
    _
  // Predicated region
  $region38: #{transformer_decoder_forward.26} parent=0 // pred_check
    _
  $region39: #{transformer_decoder_forward.26} parent=0 // pred_check_branch
    %159 = sbr.rel (0) target = $region41
  $region40: #{transformer_decoder_forward.26} parent=0 // pred_region
    _
  $region41: #{transformer_decoder_forward.26} parent=0 // pred_fallthru
    _

// kernel: transformer_decoder_forward.27
$region0: #{transformer_decoder_forward.27}
  #allocation0 [shape = 'u32[]', space=smem, size = 0x4, offset = 0x4, fixed_abs, tag = 'smem constant byte address 0x4 - core index']
  #allocation1 [shape = 'u32[144,128]{1,0:T(1,128)}', space=vmem, size = 0x12000, scoped, tag = 'internal scratch']
  #allocation2 [shape = 'f32[16,32]{1,0:T(8,128)}', space=vmem, size = 0x2000, scoped, tag = 'scratch operand']
  %s0 = inlined_call_operand.vmem [shape: f32[16,32], index: 0, kind: input, shape index: {}]
  %s1 = inlined_call_operand.vmem [shape: f32[16,32], index: 1, kind: input, shape index: {}]
  %s2 = inlined_call_operand.vmem [shape: f32[32,32], index: 2, kind: input, shape index: {}]
  %s3 = inlined_call_operand.vmem [shape: f32[1,32], index: 3, kind: input, shape index: {}]
  %s4 = inlined_call_operand.vmem [shape: f32[16,32], index: 4, kind: output, shape index: {}]
  %s5 = sld [smem:[#allocation0]]
  $region34: #{transformer_decoder_forward.27} parent=0
    _
  %s7 = ssub.s32 1, %s5
  %s8 = scalar_select 0, %s7, %s5
  // Predicated region
  $region2: #{transformer_decoder_forward.27} parent=0 // pred_check
    _
  $region3: #{transformer_decoder_forward.27} parent=0 // pred_check_branch
    %10 = sbr.rel (0) target = $region5
  $region4: #{transformer_decoder_forward.27} parent=0 // pred_region
    _
  $region5: #{transformer_decoder_forward.27} parent=0 // pred_fallthru
    _
  // Predicated region
  $region6: #{transformer_decoder_forward.27} parent=0 // pred_check
    _
  $region7: #{transformer_decoder_forward.27} parent=0 // pred_check_branch
    %12 = sbr.rel (0) target = $region9
  $region8: #{transformer_decoder_forward.27} parent=0 // pred_region
    _
  $region9: #{transformer_decoder_forward.27} parent=0 // pred_fallthru
    _
  // Predicated region
  $region10: #{transformer_decoder_forward.27} parent=0 // pred_check
    _
  $region11: #{transformer_decoder_forward.27} parent=0 // pred_check_branch
    %14 = sbr.rel (0) target = $region13
  $region12: #{transformer_decoder_forward.27} parent=0 // pred_region
    _
  $region13: #{transformer_decoder_forward.27} parent=0 // pred_fallthru
    _
  // Predicated region
  $region14: #{transformer_decoder_forward.27} parent=0 // pred_check
    _
  $region15: #{transformer_decoder_forward.27} parent=0 // pred_check_branch
    %16 = sbr.rel (0) target = $region17
  $region16: #{transformer_decoder_forward.27} parent=0 // pred_region
    _
  $region17: #{transformer_decoder_forward.27} parent=0 // pred_fallthru
    _
  %p18 = scmp.eq.s32.totalorder 0, 0
  // Predicated region
  $region18: #{transformer_decoder_forward.27} parent=0 // pred_check
    %p19 = pneg %p18
  $region19: #{transformer_decoder_forward.27} parent=0 // pred_check_branch
    %21 = sbr.rel (%p19) target = $region21
  $region20: #{transformer_decoder_forward.27} parent=0 // pred_region
    %vm22 = vcmask 261120
    %23 = vst.msk [vmem:[#allocation2] sm:$0xff] %vm22, 0.0
    %24 = vst.msk [vmem:[#allocation2 + $0x8] sm:$0xff] %vm22, 0.0
  $region21: #{transformer_decoder_forward.27} parent=0 // pred_fallthru
    _
  %v25 = vld [vmem:[%s0] sm:$0xff]
  %v26 = vld [vmem:[%s0 + $0x8] sm:$0xff]
  %v27 = vld [vmem:[%s1] sm:$0xff]
  %v28 = vld [vmem:[%s1 + $0x8] sm:$0xff]
  %v29 = vadd.f32 %v25, %v27
  %v30 = vadd.f32 %v26, %v28
  %v31 = vld [vmem:[#allocation2] sm:$0xff]
  %v32 = vld [vmem:[#allocation2 + $0x8] sm:$0xff]
  %v33 = vpack.c.bf16 %v30, %v29
  %v34 = vld [vmem:[%s2] sm:$0xff]
  %v35 = vld [vmem:[%s2 + $0x8] sm:$0xff]
  %v36 = vld [vmem:[%s2 + $0x10] sm:$0xff]
  %v37 = vld [vmem:[%s2 + $0x18] sm:$0xff]
  %v38 = vpack.c.bf16 %v35, %v34
  %v39 = vpack.c.bf16 %v37, %v36
  %vm40 = vcmask 261120
  %v42 = vsel %vm40, %v33, 0
  %44 = vmatprep.subr.bf16.mxu0 0
  %45 = vmatpush1.bf16.msra.mxu0 %v38
  %46 = vmatprep.subr.bf16.mxu0 0
  %47 = vmatpush1.bf16.msra.mxu0 %v39
  %48 = vmatprep.subr.bf16.mxu0 0
  %49 = vmatpush1.bf16.msra.mxu0 0
  %50 = vmatprep.subr.bf16.mxu0 0
  %51 = vmatpush1.bf16.msra.mxu0 0
  %52 = vmatprep.subr.bf16.mxu0 0
  %53 = vmatpush1.bf16.msra.mxu0 0
  %54 = vmatprep.subr.bf16.mxu0 0
  %55 = vmatpush1.bf16.msra.mxu0 0
  %56 = vmatprep.subr.bf16.mxu0 0
  %57 = vmatpush1.bf16.msra.mxu0 0
  %58 = vmatprep.subr.bf16.mxu0 0
  %59 = vmatpush1.bf16.msra.mxu0 0
  %60 = vmatprep.subr.bf16.mxu0 0
  %61 = vmatpush1.bf16.msra.mxu0 0
  %62 = vmatprep.subr.bf16.mxu0 0
  %63 = vmatpush1.bf16.msra.mxu0 0
  %64 = vmatprep.subr.bf16.mxu0 0
  %65 = vmatpush1.bf16.msra.mxu0 0
  %66 = vmatprep.subr.bf16.mxu0 0
  %67 = vmatpush1.bf16.msra.mxu0 0
  %68 = vmatprep.subr.bf16.mxu0 0
  %69 = vmatpush1.bf16.msra.mxu0 0
  %70 = vmatprep.subr.bf16.mxu0 0
  %71 = vmatpush1.bf16.msra.mxu0 0
  %72 = vmatprep.subr.bf16.mxu0 0
  %73 = vmatpush1.bf16.msra.mxu0 0
  %74 = vmatprep.subr.bf16.mxu0 0
  %75 = vmatpush1.bf16.msra.mxu0 0
  %76 = vmatprep.mubr.bf16.mxu0 0
  %77 = vmatmul.mubr.bf16.gmra.mrb[0].mxu0 %v42
  %v78 = vpop.f32.mrb[0].mxu0
  %v79 = vadd.f32 0.0, %v78
  %v80 = vpop.f32.mrb[0].mxu0
  %v81 = vpop.f32.mrb[0].mxu0
  %v82 = vadd.f32 0.0, %v81
  %v83 = vpop.f32.mrb[0].mxu0
  %84 = vdwg.mxu0
  %v85 = vadd.f32 %v31, %v79
  %v86 = vadd.f32 %v32, %v82
  %87 = vst.msk [vmem:[#allocation2] sm:$0xff] %vm40, %v85
  %88 = vst.msk [vmem:[#allocation2 + $0x8] sm:$0xff] %vm40, %v86
  // Predicated region
  $region22: #{transformer_decoder_forward.27} parent=0 // pred_check
    %p89 = pneg %p18
  $region23: #{transformer_decoder_forward.27} parent=0 // pred_check_branch
    %91 = sbr.rel (%p89) target = $region25
  $region24: #{transformer_decoder_forward.27} parent=0 // pred_region
    %v92 = vld [vmem:[#allocation2] sm:$0xff]
    %v93 = vld [vmem:[#allocation2 + $0x8] sm:$0xff]
    %v94 = vld [vmem:[%s3] sm:$0x1]
    %v96 = vlaneseq
    %v97 = vshrl.u32 %v96, 7
    %v98 = vsub.s32 0, %v97
    %v99 = vrot.slane %v94, %v98
    %v101 = vadd.f32 %v92, %v99
    %v102 = vadd.f32 %v93, %v99
    %103 = vst.msk [vmem:[%s4] sm:$0xff] %vm40, %v101
    %104 = vst.msk [vmem:[%s4 + $0x8] sm:$0xff] %vm40, %v102
  $region25: #{transformer_decoder_forward.27} parent=0 // pred_fallthru
    _
  // Predicated region
  $region26: #{transformer_decoder_forward.27} parent=0 // pred_check
    _
  $region27: #{transformer_decoder_forward.27} parent=0 // pred_check_branch
    %106 = sbr.rel (0) target = $region29
  $region28: #{transformer_decoder_forward.27} parent=0 // pred_region
    _
  $region29: #{transformer_decoder_forward.27} parent=0 // pred_fallthru
    _
  // Predicated region
  $region30: #{transformer_decoder_forward.27} parent=0 // pred_check
    _
  $region31: #{transformer_decoder_forward.27} parent=0 // pred_check_branch
    %108 = sbr.rel (0) target = $region33
  $region32: #{transformer_decoder_forward.27} parent=0 // pred_region
    _
  $region33: #{transformer_decoder_forward.27} parent=0 // pred_fallthru
    _

// kernel: transformer_decoder_forward.28
$region0: #{transformer_decoder_forward.28}
  #allocation0 [shape = 'u32[]', space=smem, size = 0x4, offset = 0x4, fixed_abs, tag = 'smem constant byte address 0x4 - core index']
  #allocation1 [shape = 'u32[144,128]{1,0:T(1,128)}', space=vmem, size = 0x12000, scoped, tag = 'internal scratch']
  #allocation2 [shape = 'f32[32,32]{1,0:T(8,128)}', space=vmem, size = 0x4000, scoped, tag = 'scratch operand']
  %s0 = inlined_call_operand.vmem [shape: f32[32,32], index: 0, kind: input, shape index: {}]
  %s1 = inlined_call_operand.vmem [shape: f32[32,32], index: 1, kind: input, shape index: {}]
  %s2 = inlined_call_operand.vmem [shape: f32[32,32], index: 2, kind: input, shape index: {}]
  %s3 = inlined_call_operand.vmem [shape: f32[1,32], index: 3, kind: input, shape index: {}]
  %s4 = inlined_call_operand.vmem [shape: f32[32,32], index: 4, kind: output, shape index: {}]
  %s5 = sld [smem:[#allocation0]]
  $region34: #{transformer_decoder_forward.28} parent=0
    _
  %s7 = ssub.s32 1, %s5
  %s8 = scalar_select 0, %s7, %s5
  // Predicated region
  $region2: #{transformer_decoder_forward.28} parent=0 // pred_check
    _
  $region3: #{transformer_decoder_forward.28} parent=0 // pred_check_branch
    %10 = sbr.rel (0) target = $region5
  $region4: #{transformer_decoder_forward.28} parent=0 // pred_region
    _
  $region5: #{transformer_decoder_forward.28} parent=0 // pred_fallthru
    _
  // Predicated region
  $region6: #{transformer_decoder_forward.28} parent=0 // pred_check
    _
  $region7: #{transformer_decoder_forward.28} parent=0 // pred_check_branch
    %12 = sbr.rel (0) target = $region9
  $region8: #{transformer_decoder_forward.28} parent=0 // pred_region
    _
  $region9: #{transformer_decoder_forward.28} parent=0 // pred_fallthru
    _
  // Predicated region
  $region10: #{transformer_decoder_forward.28} parent=0 // pred_check
    _
  $region11: #{transformer_decoder_forward.28} parent=0 // pred_check_branch
    %14 = sbr.rel (0) target = $region13
  $region12: #{transformer_decoder_forward.28} parent=0 // pred_region
    _
  $region13: #{transformer_decoder_forward.28} parent=0 // pred_fallthru
    _
  // Predicated region
  $region14: #{transformer_decoder_forward.28} parent=0 // pred_check
    _
  $region15: #{transformer_decoder_forward.28} parent=0 // pred_check_branch
    %16 = sbr.rel (0) target = $region17
  $region16: #{transformer_decoder_forward.28} parent=0 // pred_region
    _
  $region17: #{transformer_decoder_forward.28} parent=0 // pred_fallthru
    _
  %p18 = scmp.eq.s32.totalorder 0, 0
  // Predicated region
  $region18: #{transformer_decoder_forward.28} parent=0 // pred_check
    %p19 = pneg %p18
  $region19: #{transformer_decoder_forward.28} parent=0 // pred_check_branch
    %21 = sbr.rel (%p19) target = $region21
  $region20: #{transformer_decoder_forward.28} parent=0 // pred_region
    %vm22 = vcmask 261120
    %23 = vst.msk [vmem:[#allocation2] sm:$0xff] %vm22, 0.0
    %24 = vst.msk [vmem:[#allocation2 + $0x8] sm:$0xff] %vm22, 0.0
    %25 = vst.msk [vmem:[#allocation2 + $0x10] sm:$0xff] %vm22, 0.0
    %26 = vst.msk [vmem:[#allocation2 + $0x18] sm:$0xff] %vm22, 0.0
  $region21: #{transformer_decoder_forward.28} parent=0 // pred_fallthru
    _
  %v27 = vld [vmem:[%s0] sm:$0xff]
  %v28 = vld [vmem:[%s0 + $0x8] sm:$0xff]
  %v29 = vld [vmem:[%s0 + $0x10] sm:$0xff]
  %v30 = vld [vmem:[%s0 + $0x18] sm:$0xff]
  %v31 = vld [vmem:[%s1] sm:$0xff]
  %v32 = vld [vmem:[%s1 + $0x8] sm:$0xff]
  %v33 = vld [vmem:[%s1 + $0x10] sm:$0xff]
  %v34 = vld [vmem:[%s1 + $0x18] sm:$0xff]
  %v35 = vadd.f32 %v27, %v31
  %v36 = vadd.f32 %v28, %v32
  %v37 = vadd.f32 %v29, %v33
  %v38 = vadd.f32 %v30, %v34
  %v39 = vld [vmem:[#allocation2] sm:$0xff]
  %v40 = vld [vmem:[#allocation2 + $0x8] sm:$0xff]
  %v41 = vld [vmem:[#allocation2 + $0x10] sm:$0xff]
  %v42 = vld [vmem:[#allocation2 + $0x18] sm:$0xff]
  %v43 = vpack.c.bf16 %v36, %v35
  %v44 = vpack.c.bf16 %v38, %v37
  %v45 = vld [vmem:[%s2] sm:$0xff]
  %v46 = vld [vmem:[%s2 + $0x8] sm:$0xff]
  %v47 = vld [vmem:[%s2 + $0x10] sm:$0xff]
  %v48 = vld [vmem:[%s2 + $0x18] sm:$0xff]
  %v49 = vpack.c.bf16 %v46, %v45
  %v50 = vpack.c.bf16 %v48, %v47
  %vm51 = vcmask 261120
  %v53 = vsel %vm51, %v43, 0
  %v56 = vsel %vm51, %v44, 0
  %58 = vmatprep.subr.bf16.mxu0 0
  %59 = vmatpush1.bf16.msra.mxu0 %v49
  %60 = vmatprep.subr.bf16.mxu0 0
  %61 = vmatpush1.bf16.msra.mxu0 %v50
  %62 = vmatprep.subr.bf16.mxu0 0
  %63 = vmatpush1.bf16.msra.mxu0 0
  %64 = vmatprep.subr.bf16.mxu0 0
  %65 = vmatpush1.bf16.msra.mxu0 0
  %66 = vmatprep.subr.bf16.mxu0 0
  %67 = vmatpush1.bf16.msra.mxu0 0
  %68 = vmatprep.subr.bf16.mxu0 0
  %69 = vmatpush1.bf16.msra.mxu0 0
  %70 = vmatprep.subr.bf16.mxu0 0
  %71 = vmatpush1.bf16.msra.mxu0 0
  %72 = vmatprep.subr.bf16.mxu0 0
  %73 = vmatpush1.bf16.msra.mxu0 0
  %74 = vmatprep.subr.bf16.mxu0 0
  %75 = vmatpush1.bf16.msra.mxu0 0
  %76 = vmatprep.subr.bf16.mxu0 0
  %77 = vmatpush1.bf16.msra.mxu0 0
  %78 = vmatprep.subr.bf16.mxu0 0
  %79 = vmatpush1.bf16.msra.mxu0 0
  %80 = vmatprep.subr.bf16.mxu0 0
  %81 = vmatpush1.bf16.msra.mxu0 0
  %82 = vmatprep.subr.bf16.mxu0 0
  %83 = vmatpush1.bf16.msra.mxu0 0
  %84 = vmatprep.subr.bf16.mxu0 0
  %85 = vmatpush1.bf16.msra.mxu0 0
  %86 = vmatprep.subr.bf16.mxu0 0
  %87 = vmatpush1.bf16.msra.mxu0 0
  %88 = vmatprep.subr.bf16.mxu0 0
  %89 = vmatpush1.bf16.msra.mxu0 0
  %90 = vmatprep.mubr.bf16.mxu0 0
  %91 = vmatmul.mubr.bf16.gmra.mrb[0].mxu0 %v53
  %v92 = vpop.f32.mrb[0].mxu0
  %v93 = vadd.f32 0.0, %v92
  %v94 = vpop.f32.mrb[0].mxu0
  %v95 = vpop.f32.mrb[0].mxu0
  %v96 = vadd.f32 0.0, %v95
  %v97 = vpop.f32.mrb[0].mxu0
  %98 = vmatprep.mubr.bf16.mxu0 0
  %99 = vmatmul.mubr.bf16.gmra.mrb[0].mxu0 %v56
  %v100 = vpop.f32.mrb[0].mxu0
  %v101 = vadd.f32 0.0, %v100
  %v102 = vpop.f32.mrb[0].mxu0
  %v103 = vpop.f32.mrb[0].mxu0
  %v104 = vadd.f32 0.0, %v103
  %v105 = vpop.f32.mrb[0].mxu0
  %106 = vdwg.mxu0
  %v107 = vadd.f32 %v39, %v93
  %v108 = vadd.f32 %v40, %v96
  %v109 = vadd.f32 %v41, %v101
  %v110 = vadd.f32 %v42, %v104
  %111 = vst.msk [vmem:[#allocation2] sm:$0xff] %vm51, %v107
  %112 = vst.msk [vmem:[#allocation2 + $0x8] sm:$0xff] %vm51, %v108
  %113 = vst.msk [vmem:[#allocation2 + $0x10] sm:$0xff] %vm51, %v109
  %114 = vst.msk [vmem:[#allocation2 + $0x18] sm:$0xff] %vm51, %v110
  // Predicated region
  $region22: #{transformer_decoder_forward.28} parent=0 // pred_check
    %p115 = pneg %p18
  $region23: #{transformer_decoder_forward.28} parent=0 // pred_check_branch
    %117 = sbr.rel (%p115) target = $region25
  $region24: #{transformer_decoder_forward.28} parent=0 // pred_region
    %v118 = vld [vmem:[#allocation2] sm:$0xff]
    %v119 = vld [vmem:[#allocation2 + $0x8] sm:$0xff]
    %v120 = vld [vmem:[#allocation2 + $0x10] sm:$0xff]
    %v121 = vld [vmem:[#allocation2 + $0x18] sm:$0xff]
    %v122 = vld [vmem:[%s3] sm:$0x1]
    %v124 = vlaneseq
    %v125 = vshrl.u32 %v124, 7
    %v126 = vsub.s32 0, %v125
    %v127 = vrot.slane %v122, %v126
    %v129 = vadd.f32 %v118, %v127
    %v130 = vadd.f32 %v119, %v127
    %v131 = vadd.f32 %v120, %v127
    %v132 = vadd.f32 %v121, %v127
    %133 = vst.msk [vmem:[%s4] sm:$0xff] %vm51, %v129
    %134 = vst.msk [vmem:[%s4 + $0x8] sm:$0xff] %vm51, %v130
    %135 = vst.msk [vmem:[%s4 + $0x10] sm:$0xff] %vm51, %v131
    %136 = vst.msk [vmem:[%s4 + $0x18] sm:$0xff] %vm51, %v132
  $region25: #{transformer_decoder_forward.28} parent=0 // pred_fallthru
    _
  // Predicated region
  $region26: #{transformer_decoder_forward.28} parent=0 // pred_check
    _
  $region27: #{transformer_decoder_forward.28} parent=0 // pred_check_branch
    %138 = sbr.rel (0) target = $region29
  $region28: #{transformer_decoder_forward.28} parent=0 // pred_region
    _
  $region29: #{transformer_decoder_forward.28} parent=0 // pred_fallthru
    _
  // Predicated region
  $region30: #{transformer_decoder_forward.28} parent=0 // pred_check
    _
  $region31: #{transformer_decoder_forward.28} parent=0 // pred_check_branch
    %140 = sbr.rel (0) target = $region33
  $region32: #{transformer_decoder_forward.28} parent=0 // pred_region
    _
  $region33: #{transformer_decoder_forward.28} parent=0 // pred_fallthru
    _

// kernel: transformer_decoder_forward.29
$region0: #{transformer_decoder_forward.29}
  #allocation0 [shape = 'u32[]', space=smem, size = 0x4, offset = 0x4, fixed_abs, tag = 'smem constant byte address 0x4 - core index']
  #allocation1 [shape = 'u32[144,128]{1,0:T(1,128)}', space=vmem, size = 0x12000, scoped, tag = 'internal scratch']
  #allocation2 [shape = 'f32[32,32]{1,0:T(8,128)}', space=vmem, size = 0x4000, scoped, tag = 'scratch operand']
  %s0 = inlined_call_operand.vmem [shape: f32[32,32], index: 0, kind: input, shape index: {}]
  %s1 = inlined_call_operand.vmem [shape: f32[32,32], index: 1, kind: input, shape index: {}]
  %s2 = inlined_call_operand.vmem [shape: f32[1,32], index: 2, kind: input, shape index: {}]
  %s3 = inlined_call_operand.vmem [shape: f32[32,32], index: 3, kind: output, shape index: {}]
  %s4 = sld [smem:[#allocation0]]
  $region30: #{transformer_decoder_forward.29} parent=0
    _
  %s6 = ssub.s32 1, %s4
  %s7 = scalar_select 0, %s6, %s4
  // Predicated region
  $region2: #{transformer_decoder_forward.29} parent=0 // pred_check
    _
  $region3: #{transformer_decoder_forward.29} parent=0 // pred_check_branch
    %9 = sbr.rel (0) target = $region5
  $region4: #{transformer_decoder_forward.29} parent=0 // pred_region
    _
  $region5: #{transformer_decoder_forward.29} parent=0 // pred_fallthru
    _
  // Predicated region
  $region6: #{transformer_decoder_forward.29} parent=0 // pred_check
    _
  $region7: #{transformer_decoder_forward.29} parent=0 // pred_check_branch
    %11 = sbr.rel (0) target = $region9
  $region8: #{transformer_decoder_forward.29} parent=0 // pred_region
    _
  $region9: #{transformer_decoder_forward.29} parent=0 // pred_fallthru
    _
  // Predicated region
  $region10: #{transformer_decoder_forward.29} parent=0 // pred_check
    _
  $region11: #{transformer_decoder_forward.29} parent=0 // pred_check_branch
    %13 = sbr.rel (0) target = $region13
  $region12: #{transformer_decoder_forward.29} parent=0 // pred_region
    _
  $region13: #{transformer_decoder_forward.29} parent=0 // pred_fallthru
    _
  %p15 = scmp.eq.s32.totalorder 0, 0
  // Predicated region
  $region14: #{transformer_decoder_forward.29} parent=0 // pred_check
    %p16 = pneg %p15
  $region15: #{transformer_decoder_forward.29} parent=0 // pred_check_branch
    %18 = sbr.rel (%p16) target = $region17
  $region16: #{transformer_decoder_forward.29} parent=0 // pred_region
    %vm19 = vcmask 261120
    %20 = vst.msk [vmem:[#allocation2] sm:$0xff] %vm19, 0.0
    %21 = vst.msk [vmem:[#allocation2 + $0x8] sm:$0xff] %vm19, 0.0
    %22 = vst.msk [vmem:[#allocation2 + $0x10] sm:$0xff] %vm19, 0.0
    %23 = vst.msk [vmem:[#allocation2 + $0x18] sm:$0xff] %vm19, 0.0
  $region17: #{transformer_decoder_forward.29} parent=0 // pred_fallthru
    _
  %v24 = vld [vmem:[%s0] sm:$0xff]
  %v25 = vld [vmem:[%s0 + $0x8] sm:$0xff]
  %v26 = vld [vmem:[%s0 + $0x10] sm:$0xff]
  %v27 = vld [vmem:[%s0 + $0x18] sm:$0xff]
  %v28 = vld [vmem:[#allocation2] sm:$0xff]
  %v29 = vld [vmem:[#allocation2 + $0x8] sm:$0xff]
  %v30 = vld [vmem:[#allocation2 + $0x10] sm:$0xff]
  %v31 = vld [vmem:[#allocation2 + $0x18] sm:$0xff]
  %v32 = vpack.c.bf16 %v25, %v24
  %v33 = vpack.c.bf16 %v27, %v26
  %v34 = vld [vmem:[%s1] sm:$0xff]
  %v35 = vld [vmem:[%s1 + $0x8] sm:$0xff]
  %v36 = vld [vmem:[%s1 + $0x10] sm:$0xff]
  %v37 = vld [vmem:[%s1 + $0x18] sm:$0xff]
  %v38 = vpack.c.bf16 %v35, %v34
  %v39 = vpack.c.bf16 %v37, %v36
  %vm40 = vcmask 261120
  %v42 = vsel %vm40, %v32, 0
  %v45 = vsel %vm40, %v33, 0
  %47 = vmatprep.subr.bf16.mxu0 0
  %48 = vmatpush1.bf16.msra.mxu0 %v38
  %49 = vmatprep.subr.bf16.mxu0 0
  %50 = vmatpush1.bf16.msra.mxu0 %v39
  %51 = vmatprep.subr.bf16.mxu0 0
  %52 = vmatpush1.bf16.msra.mxu0 0
  %53 = vmatprep.subr.bf16.mxu0 0
  %54 = vmatpush1.bf16.msra.mxu0 0
  %55 = vmatprep.subr.bf16.mxu0 0
  %56 = vmatpush1.bf16.msra.mxu0 0
  %57 = vmatprep.subr.bf16.mxu0 0
  %58 = vmatpush1.bf16.msra.mxu0 0
  %59 = vmatprep.subr.bf16.mxu0 0
  %60 = vmatpush1.bf16.msra.mxu0 0
  %61 = vmatprep.subr.bf16.mxu0 0
  %62 = vmatpush1.bf16.msra.mxu0 0
  %63 = vmatprep.subr.bf16.mxu0 0
  %64 = vmatpush1.bf16.msra.mxu0 0
  %65 = vmatprep.subr.bf16.mxu0 0
  %66 = vmatpush1.bf16.msra.mxu0 0
  %67 = vmatprep.subr.bf16.mxu0 0
  %68 = vmatpush1.bf16.msra.mxu0 0
  %69 = vmatprep.subr.bf16.mxu0 0
  %70 = vmatpush1.bf16.msra.mxu0 0
  %71 = vmatprep.subr.bf16.mxu0 0
  %72 = vmatpush1.bf16.msra.mxu0 0
  %73 = vmatprep.subr.bf16.mxu0 0
  %74 = vmatpush1.bf16.msra.mxu0 0
  %75 = vmatprep.subr.bf16.mxu0 0
  %76 = vmatpush1.bf16.msra.mxu0 0
  %77 = vmatprep.subr.bf16.mxu0 0
  %78 = vmatpush1.bf16.msra.mxu0 0
  %79 = vmatprep.mubr.bf16.mxu0 0
  %80 = vmatmul.mubr.bf16.gmra.mrb[0].mxu0 %v42
  %v81 = vpop.f32.mrb[0].mxu0
  %v82 = vadd.f32 0.0, %v81
  %v83 = vpop.f32.mrb[0].mxu0
  %v84 = vpop.f32.mrb[0].mxu0
  %v85 = vadd.f32 0.0, %v84
  %v86 = vpop.f32.mrb[0].mxu0
  %87 = vmatprep.mubr.bf16.mxu0 0
  %88 = vmatmul.mubr.bf16.gmra.mrb[0].mxu0 %v45
  %v89 = vpop.f32.mrb[0].mxu0
  %v90 = vadd.f32 0.0, %v89
  %v91 = vpop.f32.mrb[0].mxu0
  %v92 = vpop.f32.mrb[0].mxu0
  %v93 = vadd.f32 0.0, %v92
  %v94 = vpop.f32.mrb[0].mxu0
  %95 = vdwg.mxu0
  %v96 = vadd.f32 %v28, %v82
  %v97 = vadd.f32 %v29, %v85
  %v98 = vadd.f32 %v30, %v90
  %v99 = vadd.f32 %v31, %v93
  %100 = vst.msk [vmem:[#allocation2] sm:$0xff] %vm40, %v96
  %101 = vst.msk [vmem:[#allocation2 + $0x8] sm:$0xff] %vm40, %v97
  %102 = vst.msk [vmem:[#allocation2 + $0x10] sm:$0xff] %vm40, %v98
  %103 = vst.msk [vmem:[#allocation2 + $0x18] sm:$0xff] %vm40, %v99
  // Predicated region
  $region18: #{transformer_decoder_forward.29} parent=0 // pred_check
    %p104 = pneg %p15
  $region19: #{transformer_decoder_forward.29} parent=0 // pred_check_branch
    %106 = sbr.rel (%p104) target = $region21
  $region20: #{transformer_decoder_forward.29} parent=0 // pred_region
    %v107 = vld [vmem:[#allocation2] sm:$0xff]
    %v108 = vld [vmem:[#allocation2 + $0x8] sm:$0xff]
    %v109 = vld [vmem:[#allocation2 + $0x10] sm:$0xff]
    %v110 = vld [vmem:[#allocation2 + $0x18] sm:$0xff]
    %v111 = vld [vmem:[%s2] sm:$0x1]
    %v113 = vlaneseq
    %v114 = vshrl.u32 %v113, 7
    %v115 = vsub.s32 0, %v114
    %v116 = vrot.slane %v111, %v115
    %v118 = vadd.f32 %v107, %v116
    %v119 = vadd.f32 %v108, %v116
    %v120 = vadd.f32 %v109, %v116
    %v121 = vadd.f32 %v110, %v116
    %122 = vst.msk [vmem:[%s3] sm:$0xff] %vm40, %v118
    %123 = vst.msk [vmem:[%s3 + $0x8] sm:$0xff] %vm40, %v119
    %124 = vst.msk [vmem:[%s3 + $0x10] sm:$0xff] %vm40, %v120
    %125 = vst.msk [vmem:[%s3 + $0x18] sm:$0xff] %vm40, %v121
  $region21: #{transformer_decoder_forward.29} parent=0 // pred_fallthru
    _
  // Predicated region
  $region22: #{transformer_decoder_forward.29} parent=0 // pred_check
    _
  $region23: #{transformer_decoder_forward.29} parent=0 // pred_check_branch
    %127 = sbr.rel (0) target = $region25
  $region24: #{transformer_decoder_forward.29} parent=0 // pred_region
    _
  $region25: #{transformer_decoder_forward.29} parent=0 // pred_fallthru
    _
  // Predicated region
  $region26: #{transformer_decoder_forward.29} parent=0 // pred_check
    _
  $region27: #{transformer_decoder_forward.29} parent=0 // pred_check_branch
    %129 = sbr.rel (0) target = $region29
  $region28: #{transformer_decoder_forward.29} parent=0 // pred_region
    _
  $region29: #{transformer_decoder_forward.29} parent=0 // pred_fallthru
    _

// kernel: transformer_decoder_forward.32
$region0: #{transformer_decoder_forward.32}
  #allocation0 [shape = 'u32[]', space=smem, size = 0x4, offset = 0x4, fixed_abs, tag = 'smem constant byte address 0x4 - core index']
  #allocation1 [shape = 'u32[144,128]{1,0:T(1,128)}', space=vmem, size = 0x12000, scoped, tag = 'internal scratch']
  #allocation2 [shape = 'f32[16,64]{1,0:T(8,128)}', space=vmem, size = 0x2000, scoped, tag = 'scratch operand']
  %s0 = inlined_call_operand.vmem [shape: f32[16,32], index: 0, kind: input, shape index: {}]
  %s1 = inlined_call_operand.vmem [shape: f32[32,64], index: 1, kind: input, shape index: {}]
  %s2 = inlined_call_operand.vmem [shape: f32[1,64], index: 2, kind: input, shape index: {}]
  %s3 = inlined_call_operand.vmem [shape: f32[16,64], index: 3, kind: output, shape index: {}]
  %s4 = sld [smem:[#allocation0]]
  $region30: #{transformer_decoder_forward.32} parent=0
    _
  %s6 = ssub.s32 1, %s4
  %s7 = scalar_select 0, %s6, %s4
  // Predicated region
  $region2: #{transformer_decoder_forward.32} parent=0 // pred_check
    _
  $region3: #{transformer_decoder_forward.32} parent=0 // pred_check_branch
    %9 = sbr.rel (0) target = $region5
  $region4: #{transformer_decoder_forward.32} parent=0 // pred_region
    _
  $region5: #{transformer_decoder_forward.32} parent=0 // pred_fallthru
    _
  // Predicated region
  $region6: #{transformer_decoder_forward.32} parent=0 // pred_check
    _
  $region7: #{transformer_decoder_forward.32} parent=0 // pred_check_branch
    %11 = sbr.rel (0) target = $region9
  $region8: #{transformer_decoder_forward.32} parent=0 // pred_region
    _
  $region9: #{transformer_decoder_forward.32} parent=0 // pred_fallthru
    _
  // Predicated region
  $region10: #{transformer_decoder_forward.32} parent=0 // pred_check
    _
  $region11: #{transformer_decoder_forward.32} parent=0 // pred_check_branch
    %13 = sbr.rel (0) target = $region13
  $region12: #{transformer_decoder_forward.32} parent=0 // pred_region
    _
  $region13: #{transformer_decoder_forward.32} parent=0 // pred_fallthru
    _
  %p15 = scmp.eq.s32.totalorder 0, 0
  // Predicated region
  $region14: #{transformer_decoder_forward.32} parent=0 // pred_check
    %p16 = pneg %p15
  $region15: #{transformer_decoder_forward.32} parent=0 // pred_check_branch
    %18 = sbr.rel (%p16) target = $region17
  $region16: #{transformer_decoder_forward.32} parent=0 // pred_region
    %vm19 = vcmask 523264
    %20 = vst.msk [vmem:[#allocation2] sm:$0xff] %vm19, 0.0
    %21 = vst.msk [vmem:[#allocation2 + $0x8] sm:$0xff] %vm19, 0.0
  $region17: #{transformer_decoder_forward.32} parent=0 // pred_fallthru
    _
  %v22 = vld [vmem:[%s0] sm:$0xff]
  %v23 = vld [vmem:[%s0 + $0x8] sm:$0xff]
  %v24 = vld [vmem:[#allocation2] sm:$0xff]
  %v25 = vld [vmem:[#allocation2 + $0x8] sm:$0xff]
  %v26 = vpack.c.bf16 %v23, %v22
  %v27 = vld [vmem:[%s1] sm:$0xff]
  %v28 = vld [vmem:[%s1 + $0x8] sm:$0xff]
  %v29 = vld [vmem:[%s1 + $0x10] sm:$0xff]
  %v30 = vld [vmem:[%s1 + $0x18] sm:$0xff]
  %v31 = vpack.c.bf16 %v28, %v27
  %v32 = vpack.c.bf16 %v30, %v29
  %vm33 = vcmask 261120
  %v35 = vsel %vm33, %v26, 0
  %37 = vmatprep.subr.bf16.mxu0 0
  %38 = vmatpush1.bf16.msra.mxu0 %v31
  %39 = vmatprep.subr.bf16.mxu0 0
  %40 = vmatpush1.bf16.msra.mxu0 %v32
  %41 = vmatprep.subr.bf16.mxu0 0
  %42 = vmatpush1.bf16.msra.mxu0 0
  %43 = vmatprep.subr.bf16.mxu0 0
  %44 = vmatpush1.bf16.msra.mxu0 0
  %45 = vmatprep.subr.bf16.mxu0 0
  %46 = vmatpush1.bf16.msra.mxu0 0
  %47 = vmatprep.subr.bf16.mxu0 0
  %48 = vmatpush1.bf16.msra.mxu0 0
  %49 = vmatprep.subr.bf16.mxu0 0
  %50 = vmatpush1.bf16.msra.mxu0 0
  %51 = vmatprep.subr.bf16.mxu0 0
  %52 = vmatpush1.bf16.msra.mxu0 0
  %53 = vmatprep.subr.bf16.mxu0 0
  %54 = vmatpush1.bf16.msra.mxu0 0
  %55 = vmatprep.subr.bf16.mxu0 0
  %56 = vmatpush1.bf16.msra.mxu0 0
  %57 = vmatprep.subr.bf16.mxu0 0
  %58 = vmatpush1.bf16.msra.mxu0 0
  %59 = vmatprep.subr.bf16.mxu0 0
  %60 = vmatpush1.bf16.msra.mxu0 0
  %61 = vmatprep.subr.bf16.mxu0 0
  %62 = vmatpush1.bf16.msra.mxu0 0
  %63 = vmatprep.subr.bf16.mxu0 0
  %64 = vmatpush1.bf16.msra.mxu0 0
  %65 = vmatprep.subr.bf16.mxu0 0
  %66 = vmatpush1.bf16.msra.mxu0 0
  %67 = vmatprep.subr.bf16.mxu0 0
  %68 = vmatpush1.bf16.msra.mxu0 0
  %69 = vmatprep.mubr.bf16.mxu0 0
  %70 = vmatmul.mubr.bf16.gmra.mrb[0].mxu0 %v35
  %v71 = vpop.f32.mrb[0].mxu0
  %v72 = vadd.f32 0.0, %v71
  %v73 = vpop.f32.mrb[0].mxu0
  %v74 = vpop.f32.mrb[0].mxu0
  %v75 = vadd.f32 0.0, %v74
  %v76 = vpop.f32.mrb[0].mxu0
  %77 = vdwg.mxu0
  %v78 = vadd.f32 %v24, %v72
  %v79 = vadd.f32 %v25, %v75
  %vm80 = vcmask 523264
  %81 = vst.msk [vmem:[#allocation2] sm:$0xff] %vm80, %v78
  %82 = vst.msk [vmem:[#allocation2 + $0x8] sm:$0xff] %vm80, %v79
  // Predicated region
  $region18: #{transformer_decoder_forward.32} parent=0 // pred_check
    %p83 = pneg %p15
  $region19: #{transformer_decoder_forward.32} parent=0 // pred_check_branch
    %85 = sbr.rel (%p83) target = $region21
  $region20: #{transformer_decoder_forward.32} parent=0 // pred_region
    %v86 = vld [vmem:[#allocation2] sm:$0xff]
    %v87 = vld [vmem:[#allocation2 + $0x8] sm:$0xff]
    %v88 = vld [vmem:[%s2] sm:$0x1]
    %v90 = vlaneseq
    %v91 = vshrl.u32 %v90, 7
    %v92 = vsub.s32 0, %v91
    %v93 = vrot.slane %v88, %v92
    %v95 = vadd.f32 %v86, %v93
    %v96 = vadd.f32 %v87, %v93
    %v97 = vmax.f32 %v95, 0.0
    %v98 = vmax.f32 %v96, 0.0
    %99 = vst.msk [vmem:[%s3] sm:$0xff] %vm80, %v97
    %100 = vst.msk [vmem:[%s3 + $0x8] sm:$0xff] %vm80, %v98
  $region21: #{transformer_decoder_forward.32} parent=0 // pred_fallthru
    _
  // Predicated region
  $region22: #{transformer_decoder_forward.32} parent=0 // pred_check
    _
  $region23: #{transformer_decoder_forward.32} parent=0 // pred_check_branch
    %102 = sbr.rel (0) target = $region25
  $region24: #{transformer_decoder_forward.32} parent=0 // pred_region
    _
  $region25: #{transformer_decoder_forward.32} parent=0 // pred_fallthru
    _
  // Predicated region
  $region26: #{transformer_decoder_forward.32} parent=0 // pred_check
    _
  $region27: #{transformer_decoder_forward.32} parent=0 // pred_check_branch
    %104 = sbr.rel (0) target = $region29
  $region28: #{transformer_decoder_forward.32} parent=0 // pred_region
    _
  $region29: #{transformer_decoder_forward.32} parent=0 // pred_fallthru
    _

// kernel: transformer_decoder_forward.33
$region0: #{transformer_decoder_forward.33}
  #allocation0 [shape = 'u32[]', space=smem, size = 0x4, offset = 0x4, fixed_abs, tag = 'smem constant byte address 0x4 - core index']
  #allocation1 [shape = 'u32[144,128]{1,0:T(1,128)}', space=vmem, size = 0x12000, scoped, tag = 'internal scratch']
  #allocation2 [shape = 'f32[16,32]{1,0:T(8,128)}', space=vmem, size = 0x2000, scoped, tag = 'scratch operand']
  %s0 = inlined_call_operand.vmem [shape: f32[16,64], index: 0, kind: input, shape index: {}]
  %s1 = inlined_call_operand.vmem [shape: f32[64,32], index: 1, kind: input, shape index: {}]
  %s2 = inlined_call_operand.vmem [shape: f32[1,32], index: 2, kind: input, shape index: {}]
  %s3 = inlined_call_operand.vmem [shape: f32[16,32], index: 3, kind: input, shape index: {}]
  %s4 = inlined_call_operand.vmem [shape: f32[1,32], index: 4, kind: input, shape index: {}]
  %s5 = inlined_call_operand.vmem [shape: f32[1,32], index: 5, kind: input, shape index: {}]
  %s6 = inlined_call_operand.vmem [shape: f32[16,32], index: 6, kind: output, shape index: {}]
  %s7 = sld [smem:[#allocation0]]
  $region42: #{transformer_decoder_forward.33} parent=0
    _
  %s9 = ssub.s32 1, %s7
  %s10 = scalar_select 0, %s9, %s7
  // Predicated region
  $region2: #{transformer_decoder_forward.33} parent=0 // pred_check
    _
  $region3: #{transformer_decoder_forward.33} parent=0 // pred_check_branch
    %12 = sbr.rel (0) target = $region5
  $region4: #{transformer_decoder_forward.33} parent=0 // pred_region
    _
  $region5: #{transformer_decoder_forward.33} parent=0 // pred_fallthru
    _
  // Predicated region
  $region6: #{transformer_decoder_forward.33} parent=0 // pred_check
    _
  $region7: #{transformer_decoder_forward.33} parent=0 // pred_check_branch
    %14 = sbr.rel (0) target = $region9
  $region8: #{transformer_decoder_forward.33} parent=0 // pred_region
    _
  $region9: #{transformer_decoder_forward.33} parent=0 // pred_fallthru
    _
  // Predicated region
  $region10: #{transformer_decoder_forward.33} parent=0 // pred_check
    _
  $region11: #{transformer_decoder_forward.33} parent=0 // pred_check_branch
    %16 = sbr.rel (0) target = $region13
  $region12: #{transformer_decoder_forward.33} parent=0 // pred_region
    _
  $region13: #{transformer_decoder_forward.33} parent=0 // pred_fallthru
    _
  // Predicated region
  $region14: #{transformer_decoder_forward.33} parent=0 // pred_check
    _
  $region15: #{transformer_decoder_forward.33} parent=0 // pred_check_branch
    %18 = sbr.rel (0) target = $region17
  $region16: #{transformer_decoder_forward.33} parent=0 // pred_region
    _
  $region17: #{transformer_decoder_forward.33} parent=0 // pred_fallthru
    _
  // Predicated region
  $region18: #{transformer_decoder_forward.33} parent=0 // pred_check
    _
  $region19: #{transformer_decoder_forward.33} parent=0 // pred_check_branch
    %20 = sbr.rel (0) target = $region21
  $region20: #{transformer_decoder_forward.33} parent=0 // pred_region
    _
  $region21: #{transformer_decoder_forward.33} parent=0 // pred_fallthru
    _
  // Predicated region
  $region22: #{transformer_decoder_forward.33} parent=0 // pred_check
    _
  $region23: #{transformer_decoder_forward.33} parent=0 // pred_check_branch
    %22 = sbr.rel (0) target = $region25
  $region24: #{transformer_decoder_forward.33} parent=0 // pred_region
    _
  $region25: #{transformer_decoder_forward.33} parent=0 // pred_fallthru
    _
  %p24 = scmp.eq.s32.totalorder 0, 0
  // Predicated region
  $region26: #{transformer_decoder_forward.33} parent=0 // pred_check
    %p25 = pneg %p24
  $region27: #{transformer_decoder_forward.33} parent=0 // pred_check_branch
    %27 = sbr.rel (%p25) target = $region29
  $region28: #{transformer_decoder_forward.33} parent=0 // pred_region
    %vm28 = vcmask 261120
    %29 = vst.msk [vmem:[#allocation2] sm:$0xff] %vm28, 0.0
    %30 = vst.msk [vmem:[#allocation2 + $0x8] sm:$0xff] %vm28, 0.0
  $region29: #{transformer_decoder_forward.33} parent=0 // pred_fallthru
    _
  %v31 = vld [vmem:[%s0] sm:$0xff]
  %v32 = vld [vmem:[%s0 + $0x8] sm:$0xff]
  %v33 = vld [vmem:[#allocation2] sm:$0xff]
  %v34 = vld [vmem:[#allocation2 + $0x8] sm:$0xff]
  %v35 = vpack.c.bf16 %v32, %v31
  %v36 = vld [vmem:[%s1] sm:$0xff]
  %v37 = vld [vmem:[%s1 + $0x8] sm:$0xff]
  %v38 = vld [vmem:[%s1 + $0x10] sm:$0xff]
  %v39 = vld [vmem:[%s1 + $0x18] sm:$0xff]
  %v40 = vld [vmem:[%s1 + $0x20] sm:$0xff]
  %v41 = vld [vmem:[%s1 + $0x28] sm:$0xff]
  %v42 = vld [vmem:[%s1 + $0x30] sm:$0xff]
  %v43 = vld [vmem:[%s1 + $0x38] sm:$0xff]
  %v44 = vpack.c.bf16 %v37, %v36
  %v45 = vpack.c.bf16 %v39, %v38
  %v46 = vpack.c.bf16 %v41, %v40
  %v47 = vpack.c.bf16 %v43, %v42
  %vm48 = vcmask 523264
  %v50 = vsel %vm48, %v35, 0
  %52 = vmatprep.subr.bf16.mxu0 0
  %53 = vmatpush1.bf16.msra.mxu0 %v44
  %54 = vmatprep.subr.bf16.mxu0 0
  %55 = vmatpush1.bf16.msra.mxu0 %v45
  %56 = vmatprep.subr.bf16.mxu0 0
  %57 = vmatpush1.bf16.msra.mxu0 %v46
  %58 = vmatprep.subr.bf16.mxu0 0
  %59 = vmatpush1.bf16.msra.mxu0 %v47
  %60 = vmatprep.subr.bf16.mxu0 0
  %61 = vmatpush1.bf16.msra.mxu0 0
  %62 = vmatprep.subr.bf16.mxu0 0
  %63 = vmatpush1.bf16.msra.mxu0 0
  %64 = vmatprep.subr.bf16.mxu0 0
  %65 = vmatpush1.bf16.msra.mxu0 0
  %66 = vmatprep.subr.bf16.mxu0 0
  %67 = vmatpush1.bf16.msra.mxu0 0
  %68 = vmatprep.subr.bf16.mxu0 0
  %69 = vmatpush1.bf16.msra.mxu0 0
  %70 = vmatprep.subr.bf16.mxu0 0
  %71 = vmatpush1.bf16.msra.mxu0 0
  %72 = vmatprep.subr.bf16.mxu0 0
  %73 = vmatpush1.bf16.msra.mxu0 0
  %74 = vmatprep.subr.bf16.mxu0 0
  %75 = vmatpush1.bf16.msra.mxu0 0
  %76 = vmatprep.subr.bf16.mxu0 0
  %77 = vmatpush1.bf16.msra.mxu0 0
  %78 = vmatprep.subr.bf16.mxu0 0
  %79 = vmatpush1.bf16.msra.mxu0 0
  %80 = vmatprep.subr.bf16.mxu0 0
  %81 = vmatpush1.bf16.msra.mxu0 0
  %82 = vmatprep.subr.bf16.mxu0 0
  %83 = vmatpush1.bf16.msra.mxu0 0
  %84 = vmatprep.mubr.bf16.mxu0 0
  %85 = vmatmul.mubr.bf16.gmra.mrb[0].mxu0 %v50
  %v86 = vpop.f32.mrb[0].mxu0
  %v87 = vadd.f32 0.0, %v86
  %v88 = vpop.f32.mrb[0].mxu0
  %v89 = vpop.f32.mrb[0].mxu0
  %v90 = vadd.f32 0.0, %v89
  %v91 = vpop.f32.mrb[0].mxu0
  %92 = vdwg.mxu0
  %v93 = vadd.f32 %v33, %v87
  %v94 = vadd.f32 %v34, %v90
  %vm95 = vcmask 261120
  %96 = vst.msk [vmem:[#allocation2] sm:$0xff] %vm95, %v93
  %97 = vst.msk [vmem:[#allocation2 + $0x8] sm:$0xff] %vm95, %v94
  // Predicated region
  $region30: #{transformer_decoder_forward.33} parent=0 // pred_check
    %p98 = pneg %p24
  $region31: #{transformer_decoder_forward.33} parent=0 // pred_check_branch
    %100 = sbr.rel (%p98) target = $region33
  $region32: #{transformer_decoder_forward.33} parent=0 // pred_region
    %v101 = vld [vmem:[#allocation2] sm:$0xff]
    %v102 = vld [vmem:[#allocation2 + $0x8] sm:$0xff]
    %v103 = vld [vmem:[%s2] sm:$0x1]
    %v105 = vlaneseq
    %v106 = vshrl.u32 %v105, 7
    %v107 = vsub.s32 0, %v106
    %v108 = vrot.slane %v103, %v107
    %v110 = vadd.f32 %v101, %v108
    %v111 = vadd.f32 %v102, %v108
    %v112 = vld [vmem:[%s3] sm:$0xff]
    %v113 = vld [vmem:[%s3 + $0x8] sm:$0xff]
    %v114 = vadd.f32 %v110, %v112
    %v115 = vadd.f32 %v111, %v113
    %v116 = vsel %vm95, %v114, 0.0
    %117 = vadd.xlane.f32.xlu0 %v116
    %v118 = vpop.xlane.xlu0 %117
    %v119 = vsel %vm95, %v115, 0.0
    %120 = vadd.xlane.f32.xlu0 %v119
    %v121 = vpop.xlane.xlu0 %120
    %v122 = vrcp.pop 32.0
    %v123 = vmul.f32 %v118, %v122
    %v124 = vmul.f32 %v121, %v122
    %v125 = vsub.f32 %v114, %v123
    %v126 = vsub.f32 %v115, %v124
    %v127 = vmul.f32 %v125, %v125
    %v128 = vmul.f32 %v126, %v126
    %v129 = vsel %vm95, %v127, 0.0
    %130 = vadd.xlane.f32.xlu0 %v129
    %v131 = vpop.xlane.xlu0 %130
    %v132 = vsel %vm95, %v128, 0.0
    %133 = vadd.xlane.f32.xlu0 %v132
    %v134 = vpop.xlane.xlu0 %133
    %v135 = vmul.f32 %v131, %v122
    %v136 = vmul.f32 %v134, %v122
    %v137 = vadd.f32 %v135, 1e-05
    %v138 = vadd.f32 %v136, 1e-05
    %v139 = vrsqrt.pop %v137
    %v140 = vrsqrt.pop %v138
    %v141 = vmul.f32 %v125, %v139
    %v142 = vmul.f32 %v126, %v140
    %v143 = vld [vmem:[%s4] sm:$0x1]
    %v145 = vlaneseq
    %v146 = vshrl.u32 %v145, 7
    %v147 = vsub.s32 0, %v146
    %v148 = vrot.slane %v143, %v147
    %v150 = vmul.f32 %v141, %v148
    %v151 = vmul.f32 %v142, %v148
    %v152 = vld [vmem:[%s5] sm:$0x1]
    %v154 = vlaneseq
    %v155 = vshrl.u32 %v154, 7
    %v156 = vsub.s32 0, %v155
    %v157 = vrot.slane %v152, %v156
    %v159 = vadd.f32 %v150, %v157
    %v160 = vadd.f32 %v151, %v157
    %161 = vst.msk [vmem:[%s6] sm:$0xff] %vm95, %v159
    %162 = vst.msk [vmem:[%s6 + $0x8] sm:$0xff] %vm95, %v160
  $region33: #{transformer_decoder_forward.33} parent=0 // pred_fallthru
    _
  // Predicated region
  $region34: #{transformer_decoder_forward.33} parent=0 // pred_check
    _
  $region35: #{transformer_decoder_forward.33} parent=0 // pred_check_branch
    %164 = sbr.rel (0) target = $region37
  $region36: #{transformer_decoder_forward.33} parent=0 // pred_region
    _
  $region37: #{transformer_decoder_forward.33} parent=0 // pred_fallthru
    _
  // Predicated region
  $region38: #{transformer_decoder_forward.33} parent=0 // pred_check
    _
  $region39: #{transformer_decoder_forward.33} parent=0 // pred_check_branch
    %166 = sbr.rel (0) target = $region41
  $region40: #{transformer_decoder_forward.33} parent=0 // pred_region
    _
  $region41: #{transformer_decoder_forward.33} parent=0 // pred_fallthru
    _

// kernel: transformer_decoder_forward.30
$region0: #{transformer_decoder_forward.30}
  #allocation0 [shape = 'u32[]', space=smem, size = 0x4, offset = 0x4, fixed_abs, tag = 'smem constant byte address 0x4 - core index']
  #allocation1 [shape = 'u32[144,128]{1,0:T(1,128)}', space=vmem, size = 0x12000, scoped, tag = 'internal scratch']
  #allocation2 [shape = 'f32[4,8,1]{2,1,0:T(8,128)}', space=vmem, size = 0x4000, scoped, tag = 'scratch operand']
  #allocation3 [shape = 'f32[4,8,1]{2,1,0:T(8,128)}', space=vmem, size = 0x4000, scoped, tag = 'scratch operand']
  #allocation4 [shape = 'f32[4,8,8]{2,1,0:T(8,128)}', space=vmem, size = 0x4000, scoped, tag = 'scratch operand']
  %s0 = inlined_call_operand.vmem [shape: f32[2,4,8,8], index: 0, kind: input, shape index: {}]
  %s1 = inlined_call_operand.vmem [shape: f32[2,4,16,8], index: 1, kind: input, shape index: {}]
  %s2 = inlined_call_operand.vmem [shape: f32[2,4,16,8], index: 2, kind: input, shape index: {}]
  %s3 = inlined_call_operand.vmem [shape: f32[2,8,16], index: 3, kind: input, shape index: {}]
  %s4 = inlined_call_operand.vmem [shape: f32[2,8,32], index: 4, kind: output, shape index: {}]
  %s5 = sld [smem:[#allocation0]]
  $region57: #{transformer_decoder_forward.30} parent=0
    _
  %s7 = ssub.s32 1, %s5
  %s8 = scalar_select 0, %s7, %s5
  loop: start=0, step=1, limit=4
  $region2: #{transformer_decoder_forward.30} parent=0 // loop_pre_header
    _
  $region3: #{transformer_decoder_forward.30} parent=0 // loop_header
    %s10 = sphi 0, %s14
    %p11 = scmp.ge.s32.totalorder %s10, 4
    %s17 = sphi 0, %s36
    %s18 = sphi 0, %s32
    %s19 = sphi 0, %s28
    %s20 = sphi 0, %s17
    %s21 = sphi 0, %s18
    %s22 = sphi 0, %s19
    %s23 = sphi 0, %s20
    %s24 = sphi 0, %s21
    %s25 = sphi 0, %s22
    %s41 = sphi 0, %s43
    %s44 = sphi 0, %s41
    %s45 = sphi 0, %s44
    %s61 = sphi 0, %s45
    %s69 = sphi 0, %s71
    %s72 = sphi 0, %s69
    %s73 = sphi 0, %s72
    %s89 = sphi 0, %s73
    %s97 = sphi 0, %s99
    %s100 = sphi 0, %s97
    %s101 = sphi 0, %s100
    %s117 = sphi 0, %s101
    %s127 = sphi 0, %s129
    %s130 = sphi 0, %s127
    %s131 = sphi 0, %s130
    %s147 = sphi 0, %s131
    %s155 = sphi 0, %s157
    %s158 = sphi 0, %s155
    %s159 = sphi 0, %s158
    %s175 = sphi 0, %s159
  $region4: #{transformer_decoder_forward.30} parent=0 // loop_header_branch
    %13 = sbr.rel (%p11) target = $region8
  $region5: #{transformer_decoder_forward.30} parent=0 // loop_body
    %s15 = ssub.s32 %s10, 1
    %s16 = ssub.s32 %s10, 2
    %s26 = sadd.s32 1, %s19
    %p27 = scmp.ge.s32.totalorder %s26, 1
    %s28 = scalar_select %p27, 0, %s26
    %s29 = sadd.s32 1, %s18
    %s30 = scalar_select %p27, %s29, %s18
    %p31 = scmp.ge.s32.totalorder %s30, 1
    %s32 = scalar_select %p31, 0, %s30
    %s33 = sadd.s32 1, %s17
    %s34 = scalar_select %p31, %s33, %s17
    %p35 = scmp.ge.s32.totalorder %s34, 2
    %s36 = scalar_select %p35, 0, %s34
    %s37 = ssub.s32 %s17, %s36
    %s38 = ssub.s32 %s18, %s32
    %s39 = sor.u32 %s37, %s38
    %p40 = scmp.eq.s32.totalorder %s39, 0
    %s42 = sadd.s32 %s41, 1
    %s43 = scalar_select %p40, %s41, %s42
    %p46 = pneg %p40
    %p47 = scmp.eq.s32.totalorder %s10, 1
    %p48 = por %p46, %p47
    %p49 = scmp.ne.s32.totalorder %s41, %s44
    %p50 = scmp.eq.s32.totalorder %s10, 0
    %p51 = por %p49, %p50
    %p52 = scmp.ne.s32.totalorder %s41, %s44
    %p53 = scmp.eq.s32.totalorder %s15, 1
    %p54 = por %p52, %p53
    %p55 = scmp.ne.s32.totalorder %s44, %s45
    %p56 = scmp.eq.s32.totalorder %s15, 0
    %p57 = por %p55, %p56
    %p58 = scmp.ne.s32.totalorder %s44, %s45
    %p59 = scmp.eq.s32.totalorder %s16, 1
    %p60 = por %p58, %p59
    %p62 = scmp.ne.s32.totalorder %s45, %s61
    %p63 = scmp.eq.s32.totalorder %s16, 0
    %p64 = por %p62, %p63
    %s65 = ssub.s32 %s17, %s36
    %s66 = ssub.s32 %s19, %s28
    %s67 = sor.u32 %s65, %s66
    %p68 = scmp.eq.s32.totalorder %s67, 0
    %s70 = sadd.s32 %s69, 1
    %s71 = scalar_select %p68, %s69, %s70
    %p74 = pneg %p68
    %p75 = scmp.eq.s32.totalorder %s10, 1
    %p76 = por %p74, %p75
    %p77 = scmp.ne.s32.totalorder %s69, %s72
    %p78 = scmp.eq.s32.totalorder %s10, 0
    %p79 = por %p77, %p78
    %p80 = scmp.ne.s32.totalorder %s69, %s72
    %p81 = scmp.eq.s32.totalorder %s15, 1
    %p82 = por %p80, %p81
    %p83 = scmp.ne.s32.totalorder %s72, %s73
    %p84 = scmp.eq.s32.totalorder %s15, 0
    %p85 = por %p83, %p84
    %p86 = scmp.ne.s32.totalorder %s72, %s73
    %p87 = scmp.eq.s32.totalorder %s16, 1
    %p88 = por %p86, %p87
    %p90 = scmp.ne.s32.totalorder %s73, %s89
    %p91 = scmp.eq.s32.totalorder %s16, 0
    %p92 = por %p90, %p91
    %s93 = ssub.s32 %s17, %s36
    %s94 = ssub.s32 %s19, %s28
    %s95 = sor.u32 %s93, %s94
    %p96 = scmp.eq.s32.totalorder %s95, 0
    %s98 = sadd.s32 %s97, 1
    %s99 = scalar_select %p96, %s97, %s98
    %p102 = pneg %p96
    %p103 = scmp.eq.s32.totalorder %s10, 1
    %p104 = por %p102, %p103
    %p105 = scmp.ne.s32.totalorder %s97, %s100
    %p106 = scmp.eq.s32.totalorder %s10, 0
    %p107 = por %p105, %p106
    %p108 = scmp.ne.s32.totalorder %s97, %s100
    %p109 = scmp.eq.s32.totalorder %s15, 1
    %p110 = por %p108, %p109
    %p111 = scmp.ne.s32.totalorder %s100, %s101
    %p112 = scmp.eq.s32.totalorder %s15, 0
    %p113 = por %p111, %p112
    %p114 = scmp.ne.s32.totalorder %s100, %s101
    %p115 = scmp.eq.s32.totalorder %s16, 1
    %p116 = por %p114, %p115
    %p118 = scmp.ne.s32.totalorder %s101, %s117
    %p119 = scmp.eq.s32.totalorder %s16, 0
    %p120 = por %p118, %p119
    %s121 = ssub.s32 %s17, %s36
    %s122 = ssub.s32 %s18, %s32
    %s123 = sor.u32 %s121, %s122
    %s124 = ssub.s32 %s19, %s28
    %s125 = sor.u32 %s123, %s124
    %p126 = scmp.eq.s32.totalorder %s125, 0
    %s128 = sadd.s32 %s127, 1
    %s129 = scalar_select %p126, %s127, %s128
    %p132 = pneg %p126
    %p133 = scmp.eq.s32.totalorder %s10, 1
    %p134 = por %p132, %p133
    %p135 = scmp.ne.s32.totalorder %s127, %s130
    %p136 = scmp.eq.s32.totalorder %s10, 0
    %p137 = por %p135, %p136
    %p138 = scmp.ne.s32.totalorder %s127, %s130
    %p139 = scmp.eq.s32.totalorder %s15, 1
    %p140 = por %p138, %p139
    %p141 = scmp.ne.s32.totalorder %s130, %s131
    %p142 = scmp.eq.s32.totalorder %s15, 0
    %p143 = por %p141, %p142
    %p144 = scmp.ne.s32.totalorder %s130, %s131
    %p145 = scmp.eq.s32.totalorder %s16, 1
    %p146 = por %p144, %p145
    %p148 = scmp.ne.s32.totalorder %s131, %s147
    %p149 = scmp.eq.s32.totalorder %s16, 0
    %p150 = por %p148, %p149
    %s151 = ssub.s32 %s17, %s36
    %s152 = ssub.s32 %s18, %s32
    %s153 = sor.u32 %s151, %s152
    %p154 = scmp.eq.s32.totalorder %s153, 0
    %s156 = sadd.s32 %s155, 1
    %s157 = scalar_select %p154, %s155, %s156
    %p160 = pneg %p154
    %p161 = scmp.eq.s32.totalorder %s10, 1
    %p162 = por %p160, %p161
    %p163 = scmp.ne.s32.totalorder %s155, %s158
    %p164 = scmp.eq.s32.totalorder %s10, 0
    %p165 = por %p163, %p164
    %p166 = scmp.ne.s32.totalorder %s155, %s158
    %p167 = scmp.eq.s32.totalorder %s15, 1
    %p168 = por %p166, %p167
    %p169 = scmp.ne.s32.totalorder %s158, %s159
    %p170 = scmp.eq.s32.totalorder %s15, 0
    %p171 = por %p169, %p170
    %p172 = scmp.ne.s32.totalorder %s158, %s159
    %p173 = scmp.eq.s32.totalorder %s16, 1
    %p174 = por %p172, %p173
    %p176 = scmp.ne.s32.totalorder %s159, %s175
    %p177 = scmp.eq.s32.totalorder %s16, 0
    %p178 = por %p176, %p177
    %p179 = scmp.le.s32.totalorder 1, %s10
    %p180 = scmp.lt.s32.totalorder %s10, 3
    %p181 = pnand %p179, %p180
    %p182 = pneg %p181
    // Predicated region
    $region9: #{transformer_decoder_forward.30} parent=5 // pred_check
      _
    $region10: #{transformer_decoder_forward.30} parent=5 // pred_check_branch
      %184 = sbr.rel (%p181) target = $region12
    $region11: #{transformer_decoder_forward.30} parent=5 // pred_region
      %s185 = ssub.s32 %s10, 1
    $region12: #{transformer_decoder_forward.30} parent=5 // pred_fallthru
      _
    %p186 = scmp.lt.s32.totalorder %s10, 2
    // Predicated region
    $region13: #{transformer_decoder_forward.30} parent=5 // pred_check
      %p187 = pneg %p186
    $region14: #{transformer_decoder_forward.30} parent=5 // pred_check_branch
      %189 = sbr.rel (%p187) target = $region16
    $region15: #{transformer_decoder_forward.30} parent=5 // pred_region
      // Predicated region
      $region17: #{transformer_decoder_forward.30} parent=15 // pred_check
        %p190 = pneg %p51
      $region18: #{transformer_decoder_forward.30} parent=15 // pred_check_branch
        %192 = sbr.rel (%p190) target = $region20
      $region19: #{transformer_decoder_forward.30} parent=15 // pred_region
        %p193 = scmp.lt.s32.totalorder %s17, 1
        %s194 = scalar_select %p193, %s17, 1
        %p195 = scmp.lt.s32.totalorder %s18, 0
        %s196 = scalar_select %p195, %s18, 0
        %s197 = smul.addr %s194, 4
        %s198 = sadd.s32 %s196, %s197
        %s199 = smul.addr %s198, 8
        %s200 = scalar_lea.vmem %s0, %s199
      $region20: #{transformer_decoder_forward.30} parent=15 // pred_fallthru
        _
      // Predicated region
      $region21: #{transformer_decoder_forward.30} parent=15 // pred_check
        %p201 = pneg %p79
      $region22: #{transformer_decoder_forward.30} parent=15 // pred_check_branch
        %203 = sbr.rel (%p201) target = $region24
      $region23: #{transformer_decoder_forward.30} parent=15 // pred_region
        %s204 = smul.u32 2, %s19
        %p205 = scmp.lt.s32.totalorder %s17, 1
        %s206 = scalar_select %p205, %s17, 1
        %p207 = scmp.lt.s32.totalorder %s204, 1
        %s208 = scalar_select %p207, %s204, 1
        %s209 = smul.addr %s206, 8
        %s210 = sadd.s32 %s208, %s209
        %s211 = smul.addr %s210, 8
        %s212 = scalar_lea.vmem %s1, %s211
        %s213 = smul.u32 2, %s19
      $region24: #{transformer_decoder_forward.30} parent=15 // pred_fallthru
        _
      // Predicated region
      $region25: #{transformer_decoder_forward.30} parent=15 // pred_check
        %p214 = pneg %p107
      $region26: #{transformer_decoder_forward.30} parent=15 // pred_check_branch
        %216 = sbr.rel (%p214) target = $region28
      $region27: #{transformer_decoder_forward.30} parent=15 // pred_region
        %s217 = smul.u32 2, %s19
        %p218 = scmp.lt.s32.totalorder %s17, 1
        %s219 = scalar_select %p218, %s17, 1
        %p220 = scmp.lt.s32.totalorder %s217, 1
        %s221 = scalar_select %p220, %s217, 1
        %s222 = smul.addr %s219, 8
        %s223 = sadd.s32 %s221, %s222
        %s224 = smul.addr %s223, 8
        %s225 = scalar_lea.vmem %s2, %s224
        %s226 = smul.u32 2, %s19
      $region28: #{transformer_decoder_forward.30} parent=15 // pred_fallthru
        _
      // Predicated region
      $region29: #{transformer_decoder_forward.30} parent=15 // pred_check
        %p227 = pneg %p137
      $region30: #{transformer_decoder_forward.30} parent=15 // pred_check_branch
        %229 = sbr.rel (%p227) target = $region32
      $region31: #{transformer_decoder_forward.30} parent=15 // pred_region
        %p230 = scmp.lt.s32.totalorder %s17, 1
        %s231 = scalar_select %p230, %s17, 1
        %p232 = scmp.lt.s32.totalorder %s18, 0
        %s233 = scalar_select %p232, %s18, 0
        %p234 = scmp.lt.s32.totalorder %s19, 0
        %s235 = scalar_select %p234, %s19, 0
        %s236 = sadd.s32 %s235, %s233
        %s237 = sadd.s32 %s236, %s231
        %s238 = smul.addr %s237, 8
        %s239 = scalar_lea.vmem %s3, %s238
      $region32: #{transformer_decoder_forward.30} parent=15 // pred_fallthru
        _
    $region16: #{transformer_decoder_forward.30} parent=5 // pred_fallthru
      _
    %p240 = scmp.le.s32.totalorder 1, %s10
    %p241 = scmp.lt.s32.totalorder %s10, 3
    %p242 = pnand %p240, %p241
    %p243 = pneg %p242
    // Predicated region
    $region33: #{transformer_decoder_forward.30} parent=5 // pred_check
      _
    $region34: #{transformer_decoder_forward.30} parent=5 // pred_check_branch
      %245 = sbr.rel (%p242) target = $region36
    $region35: #{transformer_decoder_forward.30} parent=5 // pred_region
      %s246 = ssub.s32 %s10, 1
      %p247 = scmp.lt.s32.totalorder %s20, 1
      %s248 = scalar_select %p247, %s20, 1
      %p249 = scmp.lt.s32.totalorder %s21, 0
      %s250 = scalar_select %p249, %s21, 0
      %s251 = smul.addr %s248, 4
      %s252 = sadd.s32 %s250, %s251
      %s253 = smul.addr %s252, 8
      %s254 = scalar_lea.vmem %s0, %s253
      %p255 = pneg %p57
      %p256 = pneg %p54
      %s257 = smul.u32 2, %s22
      %p258 = scmp.lt.s32.totalorder %s20, 1
      %s259 = scalar_select %p258, %s20, 1
      %p260 = scmp.lt.s32.totalorder %s257, 1
      %s261 = scalar_select %p260, %s257, 1
      %s262 = smul.addr %s259, 8
      %s263 = sadd.s32 %s261, %s262
      %s264 = smul.addr %s263, 8
      %s265 = scalar_lea.vmem %s1, %s264
      %p266 = pneg %p85
      %p267 = pneg %p82
      %s268 = smul.u32 2, %s22
      %p269 = scmp.lt.s32.totalorder %s20, 1
      %s270 = scalar_select %p269, %s20, 1
      %p271 = scmp.lt.s32.totalorder %s268, 1
      %s272 = scalar_select %p271, %s268, 1
      %s273 = smul.addr %s270, 8
      %s274 = sadd.s32 %s272, %s273
      %s275 = smul.addr %s274, 8
      %s276 = scalar_lea.vmem %s2, %s275
      %p277 = pneg %p113
      %p278 = pneg %p110
      %p279 = scmp.lt.s32.totalorder %s20, 1
      %s280 = scalar_select %p279, %s20, 1
      %p281 = scmp.lt.s32.totalorder %s21, 0
      %s282 = scalar_select %p281, %s21, 0
      %p283 = scmp.lt.s32.totalorder %s22, 0
      %s284 = scalar_select %p283, %s22, 0
      %s285 = sadd.s32 %s284, %s282
      %s286 = sadd.s32 %s285, %s280
      %s287 = smul.addr %s286, 8
      %s288 = scalar_lea.vmem %s3, %s287
      %p289 = pneg %p143
      %p290 = pneg %p140
      %p291 = pneg %p171
      %p292 = pneg %p168
      %p293 = scmp.lt.s32.totalorder %s20, 1
      %s294 = scalar_select %p293, %s20, 1
      %p295 = scmp.lt.s32.totalorder %s21, 0
      %s296 = scalar_select %p295, %s21, 0
      %s297 = sadd.s32 %s296, %s294
      %s298 = smul.addr %s297, 8
      %s299 = scalar_lea.vmem %s4, %s298
      %p300 = scmp.lt.s32.totalorder %s20, 1
      %s301 = scalar_select %p300, %s20, 1
      %p302 = scmp.lt.s32.totalorder %s21, 0
      %s303 = scalar_select %p302, %s21, 0
      %s304 = smul.addr %s301, 4
      %s305 = sadd.s32 %s303, %s304
      %s306 = smul.addr %s305, 8
      %s307 = scalar_lea.vmem %s0, %s306
      %s308 = smul.u32 2, %s22
      %p309 = scmp.lt.s32.totalorder %s20, 1
      %s310 = scalar_select %p309, %s20, 1
      %p311 = scmp.lt.s32.totalorder %s308, 1
      %s312 = scalar_select %p311, %s308, 1
      %s313 = smul.addr %s310, 8
      %s314 = sadd.s32 %s312, %s313
      %s315 = smul.addr %s314, 8
      %s316 = scalar_lea.vmem %s1, %s315
      %s317 = smul.u32 2, %s22
      %s318 = smul.u32 2, %s22
      %p319 = scmp.lt.s32.totalorder %s20, 1
      %s320 = scalar_select %p319, %s20, 1
      %p321 = scmp.lt.s32.totalorder %s318, 1
      %s322 = scalar_select %p321, %s318, 1
      %s323 = smul.addr %s320, 8
      %s324 = sadd.s32 %s322, %s323
      %s325 = smul.addr %s324, 8
      %s326 = scalar_lea.vmem %s2, %s325
      %s327 = smul.u32 2, %s22
      %p328 = scmp.lt.s32.totalorder %s20, 1
      %s329 = scalar_select %p328, %s20, 1
      %p330 = scmp.lt.s32.totalorder %s21, 0
      %s331 = scalar_select %p330, %s21, 0
      %p332 = scmp.lt.s32.totalorder %s22, 0
      %s333 = scalar_select %p332, %s22, 0
      %s334 = sadd.s32 %s333, %s331
      %s335 = sadd.s32 %s334, %s329
      %s336 = smul.addr %s335, 8
      %s337 = scalar_lea.vmem %s3, %s336
      %p338 = scmp.lt.s32.totalorder %s20, 1
      %s339 = scalar_select %p338, %s20, 1
      %p340 = scmp.lt.s32.totalorder %s21, 0
      %s341 = scalar_select %p340, %s21, 0
      %s342 = sadd.s32 %s341, %s339
      %s343 = smul.addr %s342, 8
      %s344 = scalar_lea.vmem %s4, %s343
      %p346 = scmp.eq.s32.totalorder %s22, 0
      // Predicated region
      $region37: #{transformer_decoder_forward.30} parent=35 // pred_check
        %p347 = pneg %p346
      $region38: #{transformer_decoder_forward.30} parent=35 // pred_check_branch
        %349 = sbr.rel (%p347) target = $region40
      $region39: #{transformer_decoder_forward.30} parent=35 // pred_region
        %vm350 = vcmask 7168
        %351 = vst.msk [vmem:[#allocation2] sm:$0xff] %vm350, -inf
        %352 = vst.msk [vmem:[#allocation2 + $0x8] sm:$0xff] %vm350, -inf
        %353 = vst.msk [vmem:[#allocation2 + $0x10] sm:$0xff] %vm350, -inf
        %354 = vst.msk [vmem:[#allocation2 + $0x18] sm:$0xff] %vm350, -inf
        %355 = vst.msk [vmem:[#allocation3] sm:$0xff] %vm350, 0.0
        %356 = vst.msk [vmem:[#allocation3 + $0x8] sm:$0xff] %vm350, 0.0
        %357 = vst.msk [vmem:[#allocation3 + $0x10] sm:$0xff] %vm350, 0.0
        %358 = vst.msk [vmem:[#allocation3 + $0x18] sm:$0xff] %vm350, 0.0
        %vm359 = vcmask 64512
        %360 = vst.msk [vmem:[#allocation4] sm:$0xff] %vm359, 0.0
        %361 = vst.msk [vmem:[#allocation4 + $0x8] sm:$0xff] %vm359, 0.0
        %362 = vst.msk [vmem:[#allocation4 + $0x10] sm:$0xff] %vm359, 0.0
        %363 = vst.msk [vmem:[#allocation4 + $0x18] sm:$0xff] %vm359, 0.0
      $region40: #{transformer_decoder_forward.30} parent=35 // pred_fallthru
        _
      %v364 = vld [vmem:[%s307] sm:$0xff]
      %v365 = vld [vmem:[%s307 + $0x8] sm:$0xff]
      %v366 = vld [vmem:[%s307 + $0x10] sm:$0xff]
      %v367 = vld [vmem:[%s307 + $0x18] sm:$0xff]
      %v368 = vmul.f32 %v364, 0.35355338
      %v369 = vmul.f32 %v365, 0.35355338
      %v370 = vmul.f32 %v366, 0.35355338
      %v371 = vmul.f32 %v367, 0.35355338
      %v372 = vpack.c.bf16 %v368, %v368
      %v373 = vpack.c.bf16 %v369, %v369
      %v374 = vpack.c.bf16 %v370, %v370
      %v375 = vpack.c.bf16 %v371, %v371
      %v376 = vld [vmem:[%s316] sm:$0xff]
      %v377 = vld [vmem:[%s316 + $0x8] sm:$0xff]
      %v378 = vld [vmem:[%s316 + $0x10] sm:$0xff]
      %v379 = vld [vmem:[%s316 + $0x18] sm:$0xff]
      %v380 = vld [vmem:[%s316 + $0x20] sm:$0xff]
      %v381 = vld [vmem:[%s316 + $0x28] sm:$0xff]
      %v382 = vld [vmem:[%s316 + $0x30] sm:$0xff]
      %v383 = vld [vmem:[%s316 + $0x38] sm:$0xff]
      %v384 = vpack.c.bf16 %v377, %v376
      %v385 = vpack.c.bf16 %v379, %v378
      %v386 = vpack.c.bf16 %v381, %v380
      %v387 = vpack.c.bf16 %v383, %v382
      %v388 = vld [vmem:[%s326] sm:$0xff]
      %v389 = vld [vmem:[%s326 + $0x8] sm:$0xff]
      %v390 = vld [vmem:[%s326 + $0x10] sm:$0xff]
      %v391 = vld [vmem:[%s326 + $0x18] sm:$0xff]
      %v392 = vld [vmem:[%s326 + $0x20] sm:$0xff]
      %v393 = vld [vmem:[%s326 + $0x28] sm:$0xff]
      %v394 = vld [vmem:[%s326 + $0x30] sm:$0xff]
      %v395 = vld [vmem:[%s326 + $0x38] sm:$0xff]
      %v396 = vpack.c.bf16 %v389, %v388
      %v397 = vpack.c.bf16 %v391, %v390
      %v398 = vpack.c.bf16 %v393, %v392
      %v399 = vpack.c.bf16 %v395, %v394
      %vm400 = vcmask 64512
      %v402 = vsel %vm400, %v372, 0
      %v405 = vsel %vm400, %v384, 0
      %407 = vmatprep.subr.bf16.mxu0 0
      %408 = vmatpush1.bf16.xpose.msra.mxu0 %v405
      %409 = vmatprep.subr.bf16.mxu0 0
      %410 = vmatpush1.bf16.xpose.msra.mxu0 0
      %411 = vmatprep.subr.bf16.mxu0 0
      %412 = vmatpush1.bf16.xpose.msra.mxu0 0
      %413 = vmatprep.subr.bf16.mxu0 0
      %414 = vmatpush1.bf16.xpose.msra.mxu0 0
      %415 = vmatprep.subr.bf16.mxu0 0
      %416 = vmatpush1.bf16.xpose.msra.mxu0 0
      %417 = vmatprep.subr.bf16.mxu0 0
      %418 = vmatpush1.bf16.xpose.msra.mxu0 0
      %419 = vmatprep.subr.bf16.mxu0 0
      %420 = vmatpush1.bf16.xpose.msra.mxu0 0
      %421 = vmatprep.subr.bf16.mxu0 0
      %422 = vmatpush1.bf16.xpose.msra.mxu0 0
      %423 = vmatprep.subr.bf16.mxu0 0
      %424 = vmatpush1.bf16.xpose.msra.mxu0 0
      %425 = vmatprep.subr.bf16.mxu0 0
      %426 = vmatpush1.bf16.xpose.msra.mxu0 0
      %427 = vmatprep.subr.bf16.mxu0 0
      %428 = vmatpush1.bf16.xpose.msra.mxu0 0
      %429 = vmatprep.subr.bf16.mxu0 0
      %430 = vmatpush1.bf16.xpose.msra.mxu0 0
      %431 = vmatprep.subr.bf16.mxu0 0
      %432 = vmatpush1.bf16.xpose.msra.mxu0 0
      %433 = vmatprep.subr.bf16.mxu0 0
      %434 = vmatpush1.bf16.xpose.msra.mxu0 0
      %435 = vmatprep.subr.bf16.mxu0 0
      %436 = vmatpush1.bf16.xpose.msra.mxu0 0
      %437 = vmatprep.subr.bf16.mxu0 0
      %438 = vmatpush1.bf16.xpose.msra.mxu0 0
      %439 = vmatprep.mubr.bf16.mxu0 0
      %440 = vmatmul.mubr.bf16.gmra.mrb[0].mxu0 %v402
      %v441 = vpop.f32.mrb[0].mxu0
      %v442 = vadd.f32 0.0, %v441
      %v443 = vpop.f32.mrb[0].mxu0
      %v444 = vpop.f32.mrb[0].mxu0
      %v445 = vpop.f32.mrb[0].mxu0
      %446 = vdwg.mxu0
      %v448 = vsel %vm400, %v373, 0
      %v451 = vsel %vm400, %v385, 0
      %453 = vmatprep.subr.bf16.mxu0 0
      %454 = vmatpush1.bf16.xpose.msra.mxu0 %v451
      %455 = vmatprep.subr.bf16.mxu0 0
      %456 = vmatpush1.bf16.xpose.msra.mxu0 0
      %457 = vmatprep.subr.bf16.mxu0 0
      %458 = vmatpush1.bf16.xpose.msra.mxu0 0
      %459 = vmatprep.subr.bf16.mxu0 0
      %460 = vmatpush1.bf16.xpose.msra.mxu0 0
      %461 = vmatprep.subr.bf16.mxu0 0
      %462 = vmatpush1.bf16.xpose.msra.mxu0 0
      %463 = vmatprep.subr.bf16.mxu0 0
      %464 = vmatpush1.bf16.xpose.msra.mxu0 0
      %465 = vmatprep.subr.bf16.mxu0 0
      %466 = vmatpush1.bf16.xpose.msra.mxu0 0
      %467 = vmatprep.subr.bf16.mxu0 0
      %468 = vmatpush1.bf16.xpose.msra.mxu0 0
      %469 = vmatprep.subr.bf16.mxu0 0
      %470 = vmatpush1.bf16.xpose.msra.mxu0 0
      %471 = vmatprep.subr.bf16.mxu0 0
      %472 = vmatpush1.bf16.xpose.msra.mxu0 0
      %473 = vmatprep.subr.bf16.mxu0 0
      %474 = vmatpush1.bf16.xpose.msra.mxu0 0
      %475 = vmatprep.subr.bf16.mxu0 0
      %476 = vmatpush1.bf16.xpose.msra.mxu0 0
      %477 = vmatprep.subr.bf16.mxu0 0
      %478 = vmatpush1.bf16.xpose.msra.mxu0 0
      %479 = vmatprep.subr.bf16.mxu0 0
      %480 = vmatpush1.bf16.xpose.msra.mxu0 0
      %481 = vmatprep.subr.bf16.mxu0 0
      %482 = vmatpush1.bf16.xpose.msra.mxu0 0
      %483 = vmatprep.subr.bf16.mxu0 0
      %484 = vmatpush1.bf16.xpose.msra.mxu0 0
      %485 = vmatprep.mubr.bf16.mxu0 0
      %486 = vmatmul.mubr.bf16.gmra.mrb[0].mxu0 %v448
      %v487 = vpop.f32.mrb[0].mxu0
      %v488 = vadd.f32 0.0, %v487
      %v489 = vpop.f32.mrb[0].mxu0
      %v490 = vpop.f32.mrb[0].mxu0
      %v491 = vpop.f32.mrb[0].mxu0
      %492 = vdwg.mxu0
      %v494 = vsel %vm400, %v374, 0
      %v497 = vsel %vm400, %v386, 0
      %499 = vmatprep.subr.bf16.mxu0 0
      %500 = vmatpush1.bf16.xpose.msra.mxu0 %v497
      %501 = vmatprep.subr.bf16.mxu0 0
      %502 = vmatpush1.bf16.xpose.msra.mxu0 0
      %503 = vmatprep.subr.bf16.mxu0 0
      %504 = vmatpush1.bf16.xpose.msra.mxu0 0
      %505 = vmatprep.subr.bf16.mxu0 0
      %506 = vmatpush1.bf16.xpose.msra.mxu0 0
      %507 = vmatprep.subr.bf16.mxu0 0
      %508 = vmatpush1.bf16.xpose.msra.mxu0 0
      %509 = vmatprep.subr.bf16.mxu0 0
      %510 = vmatpush1.bf16.xpose.msra.mxu0 0
      %511 = vmatprep.subr.bf16.mxu0 0
      %512 = vmatpush1.bf16.xpose.msra.mxu0 0
      %513 = vmatprep.subr.bf16.mxu0 0
      %514 = vmatpush1.bf16.xpose.msra.mxu0 0
      %515 = vmatprep.subr.bf16.mxu0 0
      %516 = vmatpush1.bf16.xpose.msra.mxu0 0
      %517 = vmatprep.subr.bf16.mxu0 0
      %518 = vmatpush1.bf16.xpose.msra.mxu0 0
      %519 = vmatprep.subr.bf16.mxu0 0
      %520 = vmatpush1.bf16.xpose.msra.mxu0 0
      %521 = vmatprep.subr.bf16.mxu0 0
      %522 = vmatpush1.bf16.xpose.msra.mxu0 0
      %523 = vmatprep.subr.bf16.mxu0 0
      %524 = vmatpush1.bf16.xpose.msra.mxu0 0
      %525 = vmatprep.subr.bf16.mxu0 0
      %526 = vmatpush1.bf16.xpose.msra.mxu0 0
      %527 = vmatprep.subr.bf16.mxu0 0
      %528 = vmatpush1.bf16.xpose.msra.mxu0 0
      %529 = vmatprep.subr.bf16.mxu0 0
      %530 = vmatpush1.bf16.xpose.msra.mxu0 0
      %531 = vmatprep.mubr.bf16.mxu0 0
      %532 = vmatmul.mubr.bf16.gmra.mrb[0].mxu0 %v494
      %v533 = vpop.f32.mrb[0].mxu0
      %v534 = vadd.f32 0.0, %v533
      %v535 = vpop.f32.mrb[0].mxu0
      %v536 = vpop.f32.mrb[0].mxu0
      %v537 = vpop.f32.mrb[0].mxu0
      %538 = vdwg.mxu0
      %v540 = vsel %vm400, %v375, 0
      %v543 = vsel %vm400, %v387, 0
      %545 = vmatprep.subr.bf16.mxu0 0
      %546 = vmatpush1.bf16.xpose.msra.mxu0 %v543
      %547 = vmatprep.subr.bf16.mxu0 0
      %548 = vmatpush1.bf16.xpose.msra.mxu0 0
      %549 = vmatprep.subr.bf16.mxu0 0
      %550 = vmatpush1.bf16.xpose.msra.mxu0 0
      %551 = vmatprep.subr.bf16.mxu0 0
      %552 = vmatpush1.bf16.xpose.msra.mxu0 0
      %553 = vmatprep.subr.bf16.mxu0 0
      %554 = vmatpush1.bf16.xpose.msra.mxu0 0
      %555 = vmatprep.subr.bf16.mxu0 0
      %556 = vmatpush1.bf16.xpose.msra.mxu0 0
      %557 = vmatprep.subr.bf16.mxu0 0
      %558 = vmatpush1.bf16.xpose.msra.mxu0 0
      %559 = vmatprep.subr.bf16.mxu0 0
      %560 = vmatpush1.bf16.xpose.msra.mxu0 0
      %561 = vmatprep.subr.bf16.mxu0 0
      %562 = vmatpush1.bf16.xpose.msra.mxu0 0
      %563 = vmatprep.subr.bf16.mxu0 0
      %564 = vmatpush1.bf16.xpose.msra.mxu0 0
      %565 = vmatprep.subr.bf16.mxu0 0
      %566 = vmatpush1.bf16.xpose.msra.mxu0 0
      %567 = vmatprep.subr.bf16.mxu0 0
      %568 = vmatpush1.bf16.xpose.msra.mxu0 0
      %569 = vmatprep.subr.bf16.mxu0 0
      %570 = vmatpush1.bf16.xpose.msra.mxu0 0
      %571 = vmatprep.subr.bf16.mxu0 0
      %572 = vmatpush1.bf16.xpose.msra.mxu0 0
      %573 = vmatprep.subr.bf16.mxu0 0
      %574 = vmatpush1.bf16.xpose.msra.mxu0 0
      %575 = vmatprep.subr.bf16.mxu0 0
      %576 = vmatpush1.bf16.xpose.msra.mxu0 0
      %577 = vmatprep.mubr.bf16.mxu0 0
      %578 = vmatmul.mubr.bf16.gmra.mrb[0].mxu0 %v540
      %v579 = vpop.f32.mrb[0].mxu0
      %v580 = vadd.f32 0.0, %v579
      %v581 = vpop.f32.mrb[0].mxu0
      %v582 = vpop.f32.mrb[0].mxu0
      %v583 = vpop.f32.mrb[0].mxu0
      %584 = vdwg.mxu0
      %v585 = vld [vmem:[#allocation2] sm:$0xff]
      %v586 = vld [vmem:[#allocation2 + $0x8] sm:$0xff]
      %v587 = vld [vmem:[#allocation2 + $0x10] sm:$0xff]
      %v588 = vld [vmem:[#allocation2 + $0x18] sm:$0xff]
      %vm589 = vcmask 130048
      %v590 = vsel %vm589, %v442, -inf
      %591 = vmax.xlane.f32.xlu0 %v590
      %v592 = vpop.xlane.xlu0 %591
      %v593 = vsel %vm589, %v488, -inf
      %594 = vmax.xlane.f32.xlu0 %v593
      %v595 = vpop.xlane.xlu0 %594
      %v596 = vsel %vm589, %v534, -inf
      %597 = vmax.xlane.f32.xlu0 %v596
      %v598 = vpop.xlane.xlu0 %597
      %v599 = vsel %vm589, %v580, -inf
      %600 = vmax.xlane.f32.xlu0 %v599
      %v601 = vpop.xlane.xlu0 %600
      %v602 = vmax.f32 %v585, %v592
      %v603 = vmax.f32 %v586, %v595
      %v604 = vmax.f32 %v587, %v598
      %v605 = vmax.f32 %v588, %v601
      %v606 = vsub.f32 %v585, %v602
      %v607 = vsub.f32 %v586, %v603
      %v608 = vsub.f32 %v587, %v604
      %v609 = vsub.f32 %v588, %v605
      %v610 = vmul.f32 %v606, 1.442695
      %v611 = vpow.pop %v610
      %v612 = vmul.f32 %v607, 1.442695
      %v613 = vpow.pop %v612
      %v614 = vmul.f32 %v608, 1.442695
      %v615 = vpow.pop %v614
      %v616 = vmul.f32 %v609, 1.442695
      %v617 = vpow.pop %v616
      %619 = vset.pattern.permute.xlu0 0
      %620 = vperm.xlu0 %619, %v602
      %v621 = vpop.permute.xlu0 %620
      %624 = vset.pattern.permute.xlu0 0
      %625 = vperm.xlu0 %624, %v603
      %v626 = vpop.permute.xlu0 %625
      %629 = vset.pattern.permute.xlu0 0
      %630 = vperm.xlu0 %629, %v604
      %v631 = vpop.permute.xlu0 %630
      %634 = vset.pattern.permute.xlu0 0
      %635 = vperm.xlu0 %634, %v605
      %v636 = vpop.permute.xlu0 %635
      %v638 = vsub.f32 %v442, %v621
      %v639 = vsub.f32 %v488, %v626
      %v640 = vsub.f32 %v534, %v631
      %v641 = vsub.f32 %v580, %v636
      %v642 = vmul.f32 %v638, 1.442695
      %v643 = vpow.pop %v642
      %v644 = vmul.f32 %v639, 1.442695
      %v645 = vpow.pop %v644
      %v646 = vmul.f32 %v640, 1.442695
      %v647 = vpow.pop %v646
      %v648 = vmul.f32 %v641, 1.442695
      %v649 = vpow.pop %v648
      %v650 = vld [vmem:[#allocation3] sm:$0xff]
      %v651 = vld [vmem:[#allocation3 + $0x8] sm:$0xff]
      %v652 = vld [vmem:[#allocation3 + $0x10] sm:$0xff]
      %v653 = vld [vmem:[#allocation3 + $0x18] sm:$0xff]
      %v654 = vmul.f32 %v611, %v650
      %v655 = vmul.f32 %v613, %v651
      %v656 = vmul.f32 %v615, %v652
      %v657 = vmul.f32 %v617, %v653
      %v658 = vsel %vm589, %v643, 0.0
      %659 = vadd.xlane.f32.xlu0 %v658
      %v660 = vpop.xlane.xlu0 %659
      %v661 = vsel %vm589, %v645, 0.0
      %662 = vadd.xlane.f32.xlu0 %v661
      %v663 = vpop.xlane.xlu0 %662
      %v664 = vsel %vm589, %v647, 0.0
      %665 = vadd.xlane.f32.xlu0 %v664
      %v666 = vpop.xlane.xlu0 %665
      %v667 = vsel %vm589, %v649, 0.0
      %668 = vadd.xlane.f32.xlu0 %v667
      %v669 = vpop.xlane.xlu0 %668
      %v670 = vadd.f32 %v654, %v660
      %v671 = vadd.f32 %v655, %v663
      %v672 = vadd.f32 %v656, %v666
      %v673 = vadd.f32 %v657, %v669
      %vm674 = vcmask 7168
      %675 = vst.msk [vmem:[#allocation3] sm:$0xff] %vm674, %v670
      %676 = vst.msk [vmem:[#allocation3 + $0x8] sm:$0xff] %vm674, %v671
      %677 = vst.msk [vmem:[#allocation3 + $0x10] sm:$0xff] %vm674, %v672
      %678 = vst.msk [vmem:[#allocation3 + $0x18] sm:$0xff] %vm674, %v673
      %v679 = vld [vmem:[%s337] sm:$0xff]
      %v680 = vmul.f32 %v643, %v679
      %v681 = vmul.f32 %v645, %v679
      %v682 = vmul.f32 %v647, %v679
      %v683 = vmul.f32 %v649, %v679
      %v684 = vld [vmem:[#allocation4] sm:$0xff]
      %v685 = vld [vmem:[#allocation4 + $0x8] sm:$0xff]
      %v686 = vld [vmem:[#allocation4 + $0x10] sm:$0xff]
      %v687 = vld [vmem:[#allocation4 + $0x18] sm:$0xff]
      %689 = vset.pattern.permute.xlu0 0
      %690 = vperm.xlu0 %689, %v611
      %v691 = vpop.permute.xlu0 %690
      %694 = vset.pattern.permute.xlu0 0
      %695 = vperm.xlu0 %694, %v613
      %v696 = vpop.permute.xlu0 %695
      %699 = vset.pattern.permute.xlu0 0
      %700 = vperm.xlu0 %699, %v615
      %v701 = vpop.permute.xlu0 %700
      %704 = vset.pattern.permute.xlu0 0
      %705 = vperm.xlu0 %704, %v617
      %v706 = vpop.permute.xlu0 %705
      %v708 = vmul.f32 %v691, %v684
      %v709 = vmul.f32 %v696, %v685
      %v710 = vmul.f32 %v701, %v686
      %v711 = vmul.f32 %v706, %v687
      %v712 = vpack.c.bf16 %v680, %v680
      %v713 = vpack.c.bf16 %v681, %v681
      %v714 = vpack.c.bf16 %v682, %v682
      %v715 = vpack.c.bf16 %v683, %v683
      %v717 = vsel %vm589, %v712, 0
      %719 = vmatprep.subr.bf16.mxu0 0
      %720 = vmatpush1.bf16.msra.mxu0 %v396
      %721 = vmatprep.subr.bf16.mxu0 0
      %722 = vmatpush1.bf16.msra.mxu0 0
      %723 = vmatprep.subr.bf16.mxu0 0
      %724 = vmatpush1.bf16.msra.mxu0 0
      %725 = vmatprep.subr.bf16.mxu0 0
      %726 = vmatpush1.bf16.msra.mxu0 0
      %727 = vmatprep.subr.bf16.mxu0 0
      %728 = vmatpush1.bf16.msra.mxu0 0
      %729 = vmatprep.subr.bf16.mxu0 0
      %730 = vmatpush1.bf16.msra.mxu0 0
      %731 = vmatprep.subr.bf16.mxu0 0
      %732 = vmatpush1.bf16.msra.mxu0 0
      %733 = vmatprep.subr.bf16.mxu0 0
      %734 = vmatpush1.bf16.msra.mxu0 0
      %735 = vmatprep.subr.bf16.mxu0 0
      %736 = vmatpush1.bf16.msra.mxu0 0
      %737 = vmatprep.subr.bf16.mxu0 0
      %738 = vmatpush1.bf16.msra.mxu0 0
      %739 = vmatprep.subr.bf16.mxu0 0
      %740 = vmatpush1.bf16.msra.mxu0 0
      %741 = vmatprep.subr.bf16.mxu0 0
      %742 = vmatpush1.bf16.msra.mxu0 0
      %743 = vmatprep.subr.bf16.mxu0 0
      %744 = vmatpush1.bf16.msra.mxu0 0
      %745 = vmatprep.subr.bf16.mxu0 0
      %746 = vmatpush1.bf16.msra.mxu0 0
      %747 = vmatprep.subr.bf16.mxu0 0
      %748 = vmatpush1.bf16.msra.mxu0 0
      %749 = vmatprep.subr.bf16.mxu0 0
      %750 = vmatpush1.bf16.msra.mxu0 0
      %751 = vmatprep.mubr.bf16.mxu0 0
      %752 = vmatmul.mubr.bf16.gmra.mrb[0].mxu0 %v717
      %v753 = vpop.f32.mrb[0].mxu0
      %v754 = vadd.f32 0.0, %v753
      %v755 = vpop.f32.mrb[0].mxu0
      %v756 = vpop.f32.mrb[0].mxu0
      %v757 = vpop.f32.mrb[0].mxu0
      %758 = vdwg.mxu0
      %v760 = vsel %vm589, %v713, 0
      %762 = vmatprep.subr.bf16.mxu0 0
      %763 = vmatpush1.bf16.msra.mxu0 %v397
      %764 = vmatprep.subr.bf16.mxu0 0
      %765 = vmatpush1.bf16.msra.mxu0 0
      %766 = vmatprep.subr.bf16.mxu0 0
      %767 = vmatpush1.bf16.msra.mxu0 0
      %768 = vmatprep.subr.bf16.mxu0 0
      %769 = vmatpush1.bf16.msra.mxu0 0
      %770 = vmatprep.subr.bf16.mxu0 0
      %771 = vmatpush1.bf16.msra.mxu0 0
      %772 = vmatprep.subr.bf16.mxu0 0
      %773 = vmatpush1.bf16.msra.mxu0 0
      %774 = vmatprep.subr.bf16.mxu0 0
      %775 = vmatpush1.bf16.msra.mxu0 0
      %776 = vmatprep.subr.bf16.mxu0 0
      %777 = vmatpush1.bf16.msra.mxu0 0
      %778 = vmatprep.subr.bf16.mxu0 0
      %779 = vmatpush1.bf16.msra.mxu0 0
      %780 = vmatprep.subr.bf16.mxu0 0
      %781 = vmatpush1.bf16.msra.mxu0 0
      %782 = vmatprep.subr.bf16.mxu0 0
      %783 = vmatpush1.bf16.msra.mxu0 0
      %784 = vmatprep.subr.bf16.mxu0 0
      %785 = vmatpush1.bf16.msra.mxu0 0
      %786 = vmatprep.subr.bf16.mxu0 0
      %787 = vmatpush1.bf16.msra.mxu0 0
      %788 = vmatprep.subr.bf16.mxu0 0
      %789 = vmatpush1.bf16.msra.mxu0 0
      %790 = vmatprep.subr.bf16.mxu0 0
      %791 = vmatpush1.bf16.msra.mxu0 0
      %792 = vmatprep.subr.bf16.mxu0 0
      %793 = vmatpush1.bf16.msra.mxu0 0
      %794 = vmatprep.mubr.bf16.mxu0 0
      %795 = vmatmul.mubr.bf16.gmra.mrb[0].mxu0 %v760
      %v796 = vpop.f32.mrb[0].mxu0
      %v797 = vadd.f32 0.0, %v796
      %v798 = vpop.f32.mrb[0].mxu0
      %v799 = vpop.f32.mrb[0].mxu0
      %v800 = vpop.f32.mrb[0].mxu0
      %801 = vdwg.mxu0
      %v803 = vsel %vm589, %v714, 0
      %805 = vmatprep.subr.bf16.mxu0 0
      %806 = vmatpush1.bf16.msra.mxu0 %v398
      %807 = vmatprep.subr.bf16.mxu0 0
      %808 = vmatpush1.bf16.msra.mxu0 0
      %809 = vmatprep.subr.bf16.mxu0 0
      %810 = vmatpush1.bf16.msra.mxu0 0
      %811 = vmatprep.subr.bf16.mxu0 0
      %812 = vmatpush1.bf16.msra.mxu0 0
      %813 = vmatprep.subr.bf16.mxu0 0
      %814 = vmatpush1.bf16.msra.mxu0 0
      %815 = vmatprep.subr.bf16.mxu0 0
      %816 = vmatpush1.bf16.msra.mxu0 0
      %817 = vmatprep.subr.bf16.mxu0 0
      %818 = vmatpush1.bf16.msra.mxu0 0
      %819 = vmatprep.subr.bf16.mxu0 0
      %820 = vmatpush1.bf16.msra.mxu0 0
      %821 = vmatprep.subr.bf16.mxu0 0
      %822 = vmatpush1.bf16.msra.mxu0 0
      %823 = vmatprep.subr.bf16.mxu0 0
      %824 = vmatpush1.bf16.msra.mxu0 0
      %825 = vmatprep.subr.bf16.mxu0 0
      %826 = vmatpush1.bf16.msra.mxu0 0
      %827 = vmatprep.subr.bf16.mxu0 0
      %828 = vmatpush1.bf16.msra.mxu0 0
      %829 = vmatprep.subr.bf16.mxu0 0
      %830 = vmatpush1.bf16.msra.mxu0 0
      %831 = vmatprep.subr.bf16.mxu0 0
      %832 = vmatpush1.bf16.msra.mxu0 0
      %833 = vmatprep.subr.bf16.mxu0 0
      %834 = vmatpush1.bf16.msra.mxu0 0
      %835 = vmatprep.subr.bf16.mxu0 0
      %836 = vmatpush1.bf16.msra.mxu0 0
      %837 = vmatprep.mubr.bf16.mxu0 0
      %838 = vmatmul.mubr.bf16.gmra.mrb[0].mxu0 %v803
      %v839 = vpop.f32.mrb[0].mxu0
      %v840 = vadd.f32 0.0, %v839
      %v841 = vpop.f32.mrb[0].mxu0
      %v842 = vpop.f32.mrb[0].mxu0
      %v843 = vpop.f32.mrb[0].mxu0
      %844 = vdwg.mxu0
      %v846 = vsel %vm589, %v715, 0
      %848 = vmatprep.subr.bf16.mxu0 0
      %849 = vmatpush1.bf16.msra.mxu0 %v399
      %850 = vmatprep.subr.bf16.mxu0 0
      %851 = vmatpush1.bf16.msra.mxu0 0
      %852 = vmatprep.subr.bf16.mxu0 0
      %853 = vmatpush1.bf16.msra.mxu0 0
      %854 = vmatprep.subr.bf16.mxu0 0
      %855 = vmatpush1.bf16.msra.mxu0 0
      %856 = vmatprep.subr.bf16.mxu0 0
      %857 = vmatpush1.bf16.msra.mxu0 0
      %858 = vmatprep.subr.bf16.mxu0 0
      %859 = vmatpush1.bf16.msra.mxu0 0
      %860 = vmatprep.subr.bf16.mxu0 0
      %861 = vmatpush1.bf16.msra.mxu0 0
      %862 = vmatprep.subr.bf16.mxu0 0
      %863 = vmatpush1.bf16.msra.mxu0 0
      %864 = vmatprep.subr.bf16.mxu0 0
      %865 = vmatpush1.bf16.msra.mxu0 0
      %866 = vmatprep.subr.bf16.mxu0 0
      %867 = vmatpush1.bf16.msra.mxu0 0
      %868 = vmatprep.subr.bf16.mxu0 0
      %869 = vmatpush1.bf16.msra.mxu0 0
      %870 = vmatprep.subr.bf16.mxu0 0
      %871 = vmatpush1.bf16.msra.mxu0 0
      %872 = vmatprep.subr.bf16.mxu0 0
      %873 = vmatpush1.bf16.msra.mxu0 0
      %874 = vmatprep.subr.bf16.mxu0 0
      %875 = vmatpush1.bf16.msra.mxu0 0
      %876 = vmatprep.subr.bf16.mxu0 0
      %877 = vmatpush1.bf16.msra.mxu0 0
      %878 = vmatprep.subr.bf16.mxu0 0
      %879 = vmatpush1.bf16.msra.mxu0 0
      %880 = vmatprep.mubr.bf16.mxu0 0
      %881 = vmatmul.mubr.bf16.gmra.mrb[0].mxu0 %v846
      %v882 = vpop.f32.mrb[0].mxu0
      %v883 = vadd.f32 0.0, %v882
      %v884 = vpop.f32.mrb[0].mxu0
      %v885 = vpop.f32.mrb[0].mxu0
      %v886 = vpop.f32.mrb[0].mxu0
      %887 = vdwg.mxu0
      %v888 = vadd.f32 %v708, %v754
      %v889 = vadd.f32 %v709, %v797
      %v890 = vadd.f32 %v710, %v840
      %v891 = vadd.f32 %v711, %v883
      %892 = vst.msk [vmem:[#allocation4] sm:$0xff] %vm400, %v888
      %893 = vst.msk [vmem:[#allocation4 + $0x8] sm:$0xff] %vm400, %v889
      %894 = vst.msk [vmem:[#allocation4 + $0x10] sm:$0xff] %vm400, %v890
      %895 = vst.msk [vmem:[#allocation4 + $0x18] sm:$0xff] %vm400, %v891
      %896 = vst.msk [vmem:[#allocation2] sm:$0xff] %vm674, %v602
      %897 = vst.msk [vmem:[#allocation2 + $0x8] sm:$0xff] %vm674, %v603
      %898 = vst.msk [vmem:[#allocation2 + $0x10] sm:$0xff] %vm674, %v604
      %899 = vst.msk [vmem:[#allocation2 + $0x18] sm:$0xff] %vm674, %v605
      // Predicated region
      $region41: #{transformer_decoder_forward.30} parent=35 // pred_check
        %p900 = pneg %p346
      $region42: #{transformer_decoder_forward.30} parent=35 // pred_check_branch
        %902 = sbr.rel (%p900) target = $region44
      $region43: #{transformer_decoder_forward.30} parent=35 // pred_region
        %v903 = vld [vmem:[#allocation4] sm:$0xff]
        %v904 = vld [vmem:[#allocation4 + $0x8] sm:$0xff]
        %v905 = vld [vmem:[#allocation4 + $0x10] sm:$0xff]
        %v906 = vld [vmem:[#allocation4 + $0x18] sm:$0xff]
        %v907 = vld [vmem:[#allocation3] sm:$0xff]
        %v908 = vld [vmem:[#allocation3 + $0x8] sm:$0xff]
        %v909 = vld [vmem:[#allocation3 + $0x10] sm:$0xff]
        %v910 = vld [vmem:[#allocation3 + $0x18] sm:$0xff]
        %v911 = vrcp.pop %v907
        %v912 = vrcp.pop %v908
        %v913 = vrcp.pop %v909
        %v914 = vrcp.pop %v910
        %916 = vset.pattern.permute.xlu0 0
        %917 = vperm.xlu0 %916, %v911
        %v918 = vpop.permute.xlu0 %917
        %921 = vset.pattern.permute.xlu0 0
        %922 = vperm.xlu0 %921, %v912
        %v923 = vpop.permute.xlu0 %922
        %926 = vset.pattern.permute.xlu0 0
        %927 = vperm.xlu0 %926, %v913
        %v928 = vpop.permute.xlu0 %927
        %931 = vset.pattern.permute.xlu0 0
        %932 = vperm.xlu0 %931, %v914
        %v933 = vpop.permute.xlu0 %932
        %v935 = vmul.f32 %v903, %v918
        %v936 = vmul.f32 %v904, %v923
        %v937 = vmul.f32 %v905, %v928
        %v938 = vmul.f32 %v906, %v933
        %940 = vrot.lane.b32.xlu0 %v936, 8
        %v941 = vpop.permute.xlu0 %940
        %944 = vrot.lane.b32.xlu0 %v937, 16
        %v945 = vpop.permute.xlu0 %944
        %948 = vrot.lane.b32.xlu0 %v938, 24
        %v949 = vpop.permute.xlu0 %948
        %v951 = vsel %vm400, %v935, %v941
        %v952 = vsel %vm589, %v951, %v945
        %vm953 = vcmask 195584
        %v954 = vsel %vm953, %v952, %v949
        %vm955 = vcmask 261120
        %956 = vst.msk [vmem:[%s344] sm:$0xff] %vm955, %v954
      $region44: #{transformer_decoder_forward.30} parent=35 // pred_fallthru
        _
      %p957 = scmp.lt.s32.totalorder %s20, 1
      %s958 = scalar_select %p957, %s20, 1
      %p959 = scmp.lt.s32.totalorder %s21, 0
      %s960 = scalar_select %p959, %s21, 0
      %s961 = sadd.s32 %s960, %s958
      %s962 = smul.addr %s961, 8
      %s963 = scalar_lea.vmem %s4, %s962
      // Predicated region
      $region45: #{transformer_decoder_forward.30} parent=35 // pred_check
        %p964 = pneg %p168
      $region46: #{transformer_decoder_forward.30} parent=35 // pred_check_branch
        %966 = sbr.rel (%p964) target = $region48
      $region47: #{transformer_decoder_forward.30} parent=35 // pred_region
        _
      $region48: #{transformer_decoder_forward.30} parent=35 // pred_fallthru
        _
    $region36: #{transformer_decoder_forward.30} parent=5 // pred_fallthru
      _
    %p967 = scmp.le.s32.totalorder 2, %s10
    // Predicated region
    $region49: #{transformer_decoder_forward.30} parent=5 // pred_check
      %p968 = pneg %p967
    $region50: #{transformer_decoder_forward.30} parent=5 // pred_check_branch
      %970 = sbr.rel (%p968) target = $region52
    $region51: #{transformer_decoder_forward.30} parent=5 // pred_region
      %s971 = ssub.s32 %s10, 2
      // Predicated region
      $region53: #{transformer_decoder_forward.30} parent=51 // pred_check
        %p972 = pneg %p174
      $region54: #{transformer_decoder_forward.30} parent=51 // pred_check_branch
        %974 = sbr.rel (%p972) target = $region56
      $region55: #{transformer_decoder_forward.30} parent=51 // pred_region
        %p975 = scmp.lt.s32.totalorder %s23, 1
        %s976 = scalar_select %p975, %s23, 1
        %p977 = scmp.lt.s32.totalorder %s24, 0
        %s978 = scalar_select %p977, %s24, 0
        %s979 = sadd.s32 %s978, %s976
        %s980 = smul.addr %s979, 8
        %s981 = scalar_lea.vmem %s4, %s980
      $region56: #{transformer_decoder_forward.30} parent=51 // pred_fallthru
        _
    $region52: #{transformer_decoder_forward.30} parent=5 // pred_fallthru
      _
  $region6: #{transformer_decoder_forward.30} parent=0 // loop_footer
    %s14 = sadd.s32 1, %s10
  $region7: #{transformer_decoder_forward.30} parent=0 // loop_footer_branch
    %9 = sbr.rel target = $region3
  $region8: #{transformer_decoder_forward.30} parent=0 // loop_exit
    _

// kernel: transformer_decoder_forward.45
$region0: #{transformer_decoder_forward.45}
  #allocation0 [shape = 'u32[]', space=smem, size = 0x4, offset = 0x4, fixed_abs, tag = 'smem constant byte address 0x4 - core index']
  #allocation1 [shape = 'u32[144,128]{1,0:T(1,128)}', space=vmem, size = 0x12000, scoped, tag = 'internal scratch']
  %s0 = inlined_call_operand.vmem [shape: f32[16,32], index: 0, kind: input, shape index: {}]
  %s1 = inlined_call_operand.vmem [shape: f32[1,32], index: 1, kind: input, shape index: {}]
  %s2 = inlined_call_operand.vmem [shape: f32[1,32], index: 2, kind: input, shape index: {}]
  %s3 = inlined_call_operand.vmem [shape: f32[16,32], index: 3, kind: output, shape index: {}]
  %s4 = sld [smem:[#allocation0]]
  $region22: #{transformer_decoder_forward.45} parent=0
    _
  %s6 = ssub.s32 1, %s4
  %s7 = scalar_select 0, %s6, %s4
  // Predicated region
  $region2: #{transformer_decoder_forward.45} parent=0 // pred_check
    _
  $region3: #{transformer_decoder_forward.45} parent=0 // pred_check_branch
    %9 = sbr.rel (0) target = $region5
  $region4: #{transformer_decoder_forward.45} parent=0 // pred_region
    _
  $region5: #{transformer_decoder_forward.45} parent=0 // pred_fallthru
    _
  // Predicated region
  $region6: #{transformer_decoder_forward.45} parent=0 // pred_check
    _
  $region7: #{transformer_decoder_forward.45} parent=0 // pred_check_branch
    %11 = sbr.rel (0) target = $region9
  $region8: #{transformer_decoder_forward.45} parent=0 // pred_region
    _
  $region9: #{transformer_decoder_forward.45} parent=0 // pred_fallthru
    _
  // Predicated region
  $region10: #{transformer_decoder_forward.45} parent=0 // pred_check
    _
  $region11: #{transformer_decoder_forward.45} parent=0 // pred_check_branch
    %13 = sbr.rel (0) target = $region13
  $region12: #{transformer_decoder_forward.45} parent=0 // pred_region
    _
  $region13: #{transformer_decoder_forward.45} parent=0 // pred_fallthru
    _
  %v14 = vld [vmem:[%s0] sm:$0xff]
  %v15 = vld [vmem:[%s0 + $0x8] sm:$0xff]
  %vm16 = vcmask 261120
  %v17 = vsel %vm16, %v14, 0.0
  %18 = vadd.xlane.f32.xlu0 %v17
  %v19 = vpop.xlane.xlu0 %18
  %v20 = vsel %vm16, %v15, 0.0
  %21 = vadd.xlane.f32.xlu0 %v20
  %v22 = vpop.xlane.xlu0 %21
  %v23 = vrcp.pop 32.0
  %v24 = vmul.f32 %v19, %v23
  %v25 = vmul.f32 %v22, %v23
  %v26 = vsub.f32 %v14, %v24
  %v27 = vsub.f32 %v15, %v25
  %v28 = vmul.f32 %v26, %v26
  %v29 = vmul.f32 %v27, %v27
  %v30 = vsel %vm16, %v28, 0.0
  %31 = vadd.xlane.f32.xlu0 %v30
  %v32 = vpop.xlane.xlu0 %31
  %v33 = vsel %vm16, %v29, 0.0
  %34 = vadd.xlane.f32.xlu0 %v33
  %v35 = vpop.xlane.xlu0 %34
  %v36 = vmul.f32 %v32, %v23
  %v37 = vmul.f32 %v35, %v23
  %v38 = vadd.f32 %v36, 1e-05
  %v39 = vadd.f32 %v37, 1e-05
  %v40 = vrsqrt.pop %v38
  %v41 = vrsqrt.pop %v39
  %v42 = vmul.f32 %v26, %v40
  %v43 = vmul.f32 %v27, %v41
  %v44 = vld [vmem:[%s1] sm:$0x1]
  %v46 = vlaneseq
  %v47 = vshrl.u32 %v46, 7
  %v48 = vsub.s32 0, %v47
  %v49 = vrot.slane %v44, %v48
  %v51 = vmul.f32 %v42, %v49
  %v52 = vmul.f32 %v43, %v49
  %v53 = vld [vmem:[%s2] sm:$0x1]
  %v55 = vlaneseq
  %v56 = vshrl.u32 %v55, 7
  %v57 = vsub.s32 0, %v56
  %v58 = vrot.slane %v53, %v57
  %v60 = vadd.f32 %v51, %v58
  %v61 = vadd.f32 %v52, %v58
  %62 = vst.msk [vmem:[%s3] sm:$0xff] %vm16, %v60
  %63 = vst.msk [vmem:[%s3 + $0x8] sm:$0xff] %vm16, %v61
  // Predicated region
  $region14: #{transformer_decoder_forward.45} parent=0 // pred_check
    _
  $region15: #{transformer_decoder_forward.45} parent=0 // pred_check_branch
    %65 = sbr.rel (0) target = $region17
  $region16: #{transformer_decoder_forward.45} parent=0 // pred_region
    _
  $region17: #{transformer_decoder_forward.45} parent=0 // pred_fallthru
    _
  // Predicated region
  $region18: #{transformer_decoder_forward.45} parent=0 // pred_check
    _
  $region19: #{transformer_decoder_forward.45} parent=0 // pred_check_branch
    %67 = sbr.rel (0) target = $region21
  $region20: #{transformer_decoder_forward.45} parent=0 // pred_region
    _
  $region21: #{transformer_decoder_forward.45} parent=0 // pred_fallthru
    _

</llo_original>
